<compile_context>
chip_gen: v7x
topology: tpu7x:2x2x1
jax: 0.10.0
libtpu: 0.0.40
codegen_flags: <defaults>
</compile_context>

<pallas_src>
import math
from functools import partial

import jax
import jax.numpy as jnp
from jax.experimental import pallas as pl
from jax.experimental.pallas import tpu as pltpu

_EPS = 1e-5
_INV_SQRT2 = 1.0 / math.sqrt(2.0)


# --------------------------------------------------------------------------
# In-kernel helpers (values are in (H, W, B, C) layout)
# --------------------------------------------------------------------------
def _leaky_relu(x, slope=0.2):
    # identical to LeakyReLU(slope) for 0 <= slope < 1
    return jnp.maximum(x, slope * x)


def _instance_norm(x, gamma, beta):
    # One-pass stats over the spatial (leading) axes, per (b, c); biased var.
    m = jnp.mean(x, axis=(0, 1), keepdims=True)
    m2 = jnp.mean(x * x, axis=(0, 1), keepdims=True)
    var = jnp.maximum(m2 - m * m, 0.0)
    return (x - m) * jax.lax.rsqrt(var + _EPS) * gamma + beta   # gamma/beta: (1, C)


def _avg_pool2(x):
    # 2x2 / stride-2 average pool; only major-axis reshapes + static indexing.
    H, W, B, C = x.shape
    x = x.reshape(H // 2, 2, W, B, C)
    x = (x[:, 0] + x[:, 1]) * 0.5
    x = x.reshape(H // 2, W // 2, 2, B, C)
    x = (x[:, :, 0] + x[:, :, 1]) * 0.5
    return x


def _conv3x3(x_f32, w_ref, b_ref):
    # x_f32: (H, W, B, Cin) f32; w_ref: (9*Cin, Cout) bf16; b_ref: (1, Cout) f32
    # Single im2col MXU matmul: patches (H*W*B, 9*Cin) @ (9*Cin, Cout).
    H, W, B, Cin = x_f32.shape
    Cout = w_ref.shape[-1]

    x = x_f32.astype(jnp.bfloat16)                 # single cast, before pad/slice
    zr = jnp.zeros((1, W, B, Cin), x.dtype)
    xp = jnp.concatenate([zr, x, zr], axis=0)      # (H+2, W,   B, Cin)
    zc = jnp.zeros((H + 2, 1, B, Cin), x.dtype)
    xp = jnp.concatenate([zc, xp, zc], axis=1)     # (H+2, W+2, B, Cin)

    # Taps are major-axis slices (no lane/sublane shuffles); the 9-way lane
    # concat is vreg-aligned whenever Cin % 128 == 0.
    taps = [xp[kh:kh + H, kw:kw + W].reshape(H * W * B, Cin)
            for kh in range(3) for kw in range(3)]
    patches = jnp.concatenate(taps, axis=-1)       # (H*W*B, 9*Cin) bf16

    y = jnp.dot(patches, w_ref[...], preferred_element_type=jnp.float32)
    y = y + b_ref[...]                             # single bias add (no acc chain)
    return y.reshape(H, W, B, Cout)


def _conv1x1(x_f32, w_ref):
    # bias-free learned shortcut. x: (H, W, B, Cin) f32, w_ref: (Cin, Cout) bf16
    H, W, B, Cin = x_f32.shape
    Cout = w_ref.shape[-1]
    y = jnp.dot(x_f32.reshape(H * W * B, Cin).astype(jnp.bfloat16), w_ref[...],
                preferred_element_type=jnp.float32)
    return y.reshape(H, W, B, Cout)


# --------------------------------------------------------------------------
# Kernel factory (flags are static at trace time)
# --------------------------------------------------------------------------
def _make_resblk_kernel(normalize, downsample, learned_sc):
    def kernel(*refs):
        i = 0
        x_ref = refs[i]; i += 1
        w1_ref, b1_ref = refs[i], refs[i + 1]; i += 2
        w2_ref, b2_ref = refs[i], refs[i + 1]; i += 2
        sc_w_ref = None
        if learned_sc:
            sc_w_ref = refs[i]; i += 1
        if normalize:
            g1_ref, be1_ref, g2_ref, be2_ref = refs[i:i + 4]; i += 4
        out_ref = refs[i]

        x = x_ref[...].astype(jnp.float32)         # (H, W, bb, Cin)

        # ---- shortcut: pool first (commutes with the bias-free 1x1 conv) ----
        sc = x
        if downsample:
            sc = _avg_pool2(sc)
        if learned_sc:
            sc = _conv1x1(sc, sc_w_ref)

        # ---- residual ----
        h = x
        if normalize:
            h = _instance_norm(h, g1_ref[...], be1_ref[...])
        h = _leaky_relu(h)
        h = _conv3x3(h, w1_ref, b1_ref)
        if downsample:
            h = _avg_pool2(h)
        if normalize:
            h = _instance_norm(h, g2_ref[...], be2_ref[...])
        h = _leaky_relu(h)
        h = _conv3x3(h, w2_ref, b2_ref)

        out_ref[...] = ((sc + h) * _INV_SQRT2).astype(out_ref.dtype)

    return kernel


# --------------------------------------------------------------------------
# Native (H, W, B, C) entry point -- keep this layout between ResBlks so no
# NCHW<->HWBC HBM round trip happens per block.
# --------------------------------------------------------------------------
def resblk_forward_hwbc(x_hwbc, params, *, normalize=False, downsample=False,
                        out_dtype=jnp.float32):
    H, W, B, Cin = x_hwbc.shape
    dim_out = params["conv2_w"].shape[-1]
    learned_sc = "sc_w" in params
    if downsample:
        assert H % 2 == 0 and W % 2 == 0
    Ho, Wo = (H // 2, W // 2) if downsample else (H, W)

    # Batch grid: blocks of 8 samples (sublane axis) -> megacore "parallel"
    # sharding on v7x + bounded per-step VMEM; grid=(1,) for B<=8.
    bb = 8 if (B > 8 and B % 8 == 0) else B
    nb = B // bb

    args = [x_hwbc.astype(jnp.float32), params["conv1_w"], params["conv1_b"],
            params["conv2_w"], params["conv2_b"]]
    if learned_sc:
        args.append(params["sc_w"])
    if normalize:
        args += [params["norm1_g"], params["norm1_b"],
                 params["norm2_g"], params["norm2_b"]]

    def _rep_spec(arr):   # whole-array block, same for every grid step
        nd = arr.ndim
        return pl.BlockSpec(arr.shape, lambda i, _nd=nd: (0,) * _nd)

    in_specs = [pl.BlockSpec((H, W, bb, Cin), lambda i: (0, 0, i, 0))]
    in_specs += [_rep_spec(a) for a in args[1:]]
    out_specs = pl.BlockSpec((Ho, Wo, bb, dim_out), lambda i: (0, 0, i, 0))

    return pl.pallas_call(
        _make_resblk_kernel(normalize, downsample, learned_sc),
        out_shape=jax.ShapeDtypeStruct((Ho, Wo, B, dim_out), out_dtype),
        grid=(nb,),
        in_specs=in_specs,
        out_specs=out_specs,
        compiler_params=pltpu.CompilerParams(
            dimension_semantics=("parallel",),
            vmem_limit_bytes=32 * 1024 * 1024),
    )(*args)


# --------------------------------------------------------------------------
# NCHW-compat wrapper (PyTorch interface); the transposes are layout plumbing
# done once at network entry/exit -- chain resblk_forward_hwbc between blocks.
# --------------------------------------------------------------------------
def resblk_forward(x_nchw, params, *, normalize=False, downsample=False):
    x = jnp.transpose(x_nchw, (2, 3, 0, 1))           # NCHW -> (H, W, B, C)
    y = resblk_forward_hwbc(x, params, normalize=normalize, downsample=downsample)
    return jnp.transpose(y, (2, 3, 0, 1))             # (H', W', B, C') -> NCHW


# --------------------------------------------------------------------------
# Deterministic parameter init (mimics PyTorch Conv2d / InstanceNorm2d defaults)
# Conv weights are stored as (9*Cin, Cout) bf16 == PyTorch (Cout,Cin,3,3)
# permuted to (kh,kw,Cin,Cout) then flattened over (kh,kw,Cin).
# --------------------------------------------------------------------------
def init_resblk_params(key, dim_in, dim_out, normalize=False):
    params = {}

    def conv_init(k, taps, cin, cout):
        bound = 1.0 / math.sqrt(cin * taps)
        kw_, kb_ = jax.random.split(k)
        w = jax.random.uniform(kw_, (taps * cin, cout), jnp.float32, -bound, bound)
        b = jax.random.uniform(kb_, (1, cout), jnp.float32, -bound, bound)
        return w.astype(jnp.bfloat16), b

    key, k1, k2, k3 = jax.random.split(key, 4)
    params["conv1_w"], params["conv1_b"] = conv_init(k1, 9, dim_in, dim_in)
    params["conv2_w"], params["conv2_b"] = conv_init(k2, 9, dim_in, dim_out)
    if dim_in != dim_out:
        bound = 1.0 / math.sqrt(dim_in)
        params["sc_w"] = jax.random.uniform(
            k3, (dim_in, dim_out), jnp.float32, -bound, bound).astype(jnp.bfloat16)
    if normalize:
        params["norm1_g"] = jnp.ones((1, dim_in), jnp.float32)
        params["norm1_b"] = jnp.zeros((1, dim_in), jnp.float32)
        params["norm2_g"] = jnp.ones((1, dim_in), jnp.float32)
        params["norm2_b"] = jnp.zeros((1, dim_in), jnp.float32)
    return params, key


# --------------------------------------------------------------------------
# Pure-JAX reference (NCHW) for correctness checks
# --------------------------------------------------------------------------
def resblk_reference(x, params, *, normalize=False, downsample=False):
    x = x.astype(jnp.float32)
    learned_sc = "sc_w" in params

    def leaky(v):
        return jnp.maximum(v, 0.2 * v)

    def inorm(v, g, b):
        m = jnp.mean(v, axis=(2, 3), keepdims=True)
        va = jnp.mean(jnp.square(v - m), axis=(2, 3), keepdims=True)
        vh = (v - m) * jax.lax.rsqrt(va + _EPS)
        return vh * g.reshape(1, -1, 1, 1) + b.reshape(1, -1, 1, 1)

    def pool(v):
        B, C, H, W = v.shape
        return v.reshape(B, C, H // 2, 2, W // 2, 2).mean(axis=(3, 5))

    def conv3x3(v, wflat, b):
        cin = wflat.shape[0] // 9
        cout = wflat.shape[1]
        w = wflat.astype(jnp.float32).reshape(3, 3, cin, cout)
        y = jax.lax.conv_general_dilated(
            v, w, window_strides=(1, 1), padding=((1, 1), (1, 1)),
            dimension_numbers=("NCHW", "HWIO", "NCHW"))
        return y + b.reshape(1, -1, 1, 1)

    sc = x
    if learned_sc:
        sc = jnp.einsum("bchw,co->bohw", x, params["sc_w"].astype(jnp.float32))
    if downsample:
        sc = pool(sc)

    h = x
    if normalize:
        h = inorm(h, params["norm1_g"], params["norm1_b"])
    h = leaky(h)
    h = conv3x3(h, params["conv1_w"], params["conv1_b"])
    if downsample:
        h = pool(h)
    if normalize:
        h = inorm(h, params["norm2_g"], params["norm2_b"])
    h = leaky(h)
    h = conv3x3(h, params["conv2_w"], params["conv2_b"])
    return (sc + h) * _INV_SQRT2


# --------------------------------------------------------------------------
if __name__ == "__main__":
    key = jax.random.PRNGKey(0)
    H, W = 8, 8

    # Config 1: full block (normalize + downsample + learned 1x1 shortcut),
    # batch 16 so the batch grid (2 steps of 8) is exercised.
    dim_in, dim_out = 128, 256
    params1, key = init_resblk_params(key, dim_in, dim_out, normalize=True)
    key, kx = jax.random.split(key)
    x1 = jax.random.normal(kx, (16, dim_in, H, W), jnp.float32)

    fwd1 = jax.jit(partial(resblk_forward, normalize=True, downsample=True))
    y1 = jax.block_until_ready(fwd1(x1, params1))
    assert y1.shape == (16, dim_out, H // 2, W // 2) and y1.dtype == jnp.float32
    y1_ref = resblk_reference(x1, params1, normalize=True, downsample=True)
    err1 = float(jnp.max(jnp.abs(y1 - y1_ref)))
    assert err1 < 5e-2, f"config1 mismatch vs reference: max|diff|={err1}"

    # Config 2: plain block (identity shortcut, no norm, no downsample), batch 8.
    params2, key = init_resblk_params(key, dim_in, dim_in, normalize=False)
    key, kx2 = jax.random.split(key)
    x2 = jax.random.normal(kx2, (8, dim_in, H, W), jnp.float32)

    fwd2 = jax.jit(partial(resblk_forward, normalize=False, downsample=False))
    y2 = jax.block_until_ready(fwd2(x2, params2))
    assert y2.shape == (8, dim_in, H, W) and y2.dtype == jnp.float32
    y2_ref = resblk_reference(x2, params2, normalize=False, downsample=False)
    err2 = float(jnp.max(jnp.abs(y2 - y2_ref)))
    assert err2 < 5e-2, f"config2 mismatch vs reference: max|diff|={err2}"

    # Chained blocks in native HWBC layout (no NCHW<->HWBC transposes between
    # blocks): plain 128->128 block followed by norm+downsample 128->256 block.
    def chain_hwbc(xv):
        h = resblk_forward_hwbc(xv, params2, normalize=False, downsample=False)
        return resblk_forward_hwbc(h, params1, normalize=True, downsample=True)

    x2_hwbc = jnp.transpose(x2, (2, 3, 0, 1))
    y3 = jax.block_until_ready(jax.jit(chain_hwbc)(x2_hwbc))
    y3_nchw = jnp.transpose(y3, (2, 3, 0, 1))
    y3_ref = resblk_reference(
        resblk_reference(x2, params2, normalize=False, downsample=False),
        params1, normalize=True, downsample=True)
    err3 = float(jnp.max(jnp.abs(y3_nchw - y3_ref)))
    assert err3 < 1e-1, f"chained HWBC mismatch vs reference: max|diff|={err3}"

    print("KERNEL_OK")
</pallas_src>

<mosaic_0001>
module attributes {stable_mosaic.version = 11 : i64} {
  func.func @kernel(%arg0: i32, %arg1: memref<8x8x8x128xf32, #tpu.memory_space<vmem>>, %arg2: memref<1152x128xbf16, #tpu.memory_space<vmem>>, %arg3: memref<1x128xf32, #tpu.memory_space<vmem>>, %arg4: memref<1152x256xbf16, #tpu.memory_space<vmem>>, %arg5: memref<1x256xf32, #tpu.memory_space<vmem>>, %arg6: memref<128x256xbf16, #tpu.memory_space<vmem>>, %arg7: memref<1x128xf32, #tpu.memory_space<vmem>>, %arg8: memref<1x128xf32, #tpu.memory_space<vmem>>, %arg9: memref<1x128xf32, #tpu.memory_space<vmem>>, %arg10: memref<1x128xf32, #tpu.memory_space<vmem>>, %arg11: memref<4x4x8x256xf32, #tpu.memory_space<vmem>>) attributes {dimension_semantics = [#tpu.dimension_semantics<parallel>], iteration_bounds = array<i64: 2>, scalar_prefetch = 0 : i64, scratch_operands = 0 : i64, tpu.core_type = #tpu.core_type<tc>, window_params = [{transform_indices = @transform_0, window_bounds = array<i64: 8, 8, 8, 128>}, {pipeline_mode = #tpu.pipeline_mode<synchronous>, transform_indices = @transform_1, window_bounds = array<i64: 1152, 128>}, {pipeline_mode = #tpu.pipeline_mode<synchronous>, transform_indices = @transform_2, window_bounds = array<i64: 1, 128>}, {pipeline_mode = #tpu.pipeline_mode<synchronous>, transform_indices = @transform_3, window_bounds = array<i64: 1152, 256>}, {pipeline_mode = #tpu.pipeline_mode<synchronous>, transform_indices = @transform_4, window_bounds = array<i64: 1, 256>}, {pipeline_mode = #tpu.pipeline_mode<synchronous>, transform_indices = @transform_5, window_bounds = array<i64: 128, 256>}, {pipeline_mode = #tpu.pipeline_mode<synchronous>, transform_indices = @transform_6, window_bounds = array<i64: 1, 128>}, {pipeline_mode = #tpu.pipeline_mode<synchronous>, transform_indices = @transform_7, window_bounds = array<i64: 1, 128>}, {pipeline_mode = #tpu.pipeline_mode<synchronous>, transform_indices = @transform_8, window_bounds = array<i64: 1, 128>}, {pipeline_mode = #tpu.pipeline_mode<synchronous>, transform_indices = @transform_9, window_bounds = array<i64: 1, 128>}, {transform_indices = @transform_10, window_bounds = array<i64: 4, 4, 8, 256>}]} {
    %c0 = arith.constant 0 : index
    %c0_0 = arith.constant 0 : index
    %c0_1 = arith.constant 0 : index
    %c0_2 = arith.constant 0 : index
    %0 = vector.load %arg1[%c0, %c0_0, %c0_1, %c0_2] : memref<8x8x8x128xf32, #tpu.memory_space<vmem>>, vector<8x8x8x128xf32>
    %1 = vector.shape_cast %0 : vector<8x8x8x128xf32> to vector<4x2x8x8x128xf32>
    %2 = vector.extract_strided_slice %1 {offsets = [0, 0, 0, 0, 0], sizes = [4, 1, 8, 8, 128], strides = [1, 1, 1, 1, 1]} : vector<4x2x8x8x128xf32> to vector<4x1x8x8x128xf32>
    %3 = vector.shape_cast %2 : vector<4x1x8x8x128xf32> to vector<4x8x8x128xf32>
    %4 = vector.extract_strided_slice %1 {offsets = [0, 1, 0, 0, 0], sizes = [4, 1, 8, 8, 128], strides = [1, 1, 1, 1, 1]} : vector<4x2x8x8x128xf32> to vector<4x1x8x8x128xf32>
    %5 = vector.shape_cast %4 : vector<4x1x8x8x128xf32> to vector<4x8x8x128xf32>
    %6 = arith.addf %3, %5 : vector<4x8x8x128xf32>
    %cst = arith.constant 5.000000e-01 : f32
    %7 = vector.broadcast %cst : f32 to vector<4x8x8x128xf32>
    %8 = arith.mulf %6, %7 : vector<4x8x8x128xf32>
    %9 = vector.shape_cast %8 : vector<4x8x8x128xf32> to vector<4x4x2x8x128xf32>
    %10 = vector.extract_strided_slice %9 {offsets = [0, 0, 0, 0, 0], sizes = [4, 4, 1, 8, 128], strides = [1, 1, 1, 1, 1]} : vector<4x4x2x8x128xf32> to vector<4x4x1x8x128xf32>
    %11 = vector.shape_cast %10 : vector<4x4x1x8x128xf32> to vector<4x4x8x128xf32>
    %12 = vector.extract_strided_slice %9 {offsets = [0, 0, 1, 0, 0], sizes = [4, 4, 1, 8, 128], strides = [1, 1, 1, 1, 1]} : vector<4x4x2x8x128xf32> to vector<4x4x1x8x128xf32>
    %13 = vector.shape_cast %12 : vector<4x4x1x8x128xf32> to vector<4x4x8x128xf32>
    %14 = arith.addf %11, %13 : vector<4x4x8x128xf32>
    %cst_3 = arith.constant 5.000000e-01 : f32
    %15 = vector.broadcast %cst_3 : f32 to vector<4x4x8x128xf32>
    %16 = arith.mulf %14, %15 : vector<4x4x8x128xf32>
    %17 = vector.shape_cast %16 : vector<4x4x8x128xf32> to vector<128x128xf32>
    %18 = arith.truncf %17 : vector<128x128xf32> to vector<128x128xbf16>
    %c0_4 = arith.constant 0 : index
    %c0_5 = arith.constant 0 : index
    %19 = vector.load %arg6[%c0_4, %c0_5] : memref<128x256xbf16, #tpu.memory_space<vmem>>, vector<128x256xbf16>
    %cst_6 = arith.constant dense<0.000000e+00> : vector<128x256xf32>
    %20 = tpu.matmul %18, %19, %cst_6 {dimension_numbers = #tpu.dot_dimension_numbers<[1], [0], [0], [1], [0, 0, 1, 1], [], []>} : vector<128x128xbf16>, vector<128x256xbf16>, vector<128x256xf32> -> vector<128x256xf32>
    %21 = vector.shape_cast %20 : vector<128x256xf32> to vector<4x4x8x256xf32>
    %c0_7 = arith.constant 0 : index
    %c0_8 = arith.constant 0 : index
    %22 = vector.load %arg7[%c0_7, %c0_8] : memref<1x128xf32, #tpu.memory_space<vmem>>, vector<1x128xf32>
    %c0_9 = arith.constant 0 : index
    %c0_10 = arith.constant 0 : index
    %23 = vector.load %arg8[%c0_9, %c0_10] : memref<1x128xf32, #tpu.memory_space<vmem>>, vector<1x128xf32>
    %cst_11 = arith.constant dense<0.000000e+00> : vector<8x128xf32>
    %24 = vector.multi_reduction <add>, %0, %cst_11 [0, 1] : vector<8x8x8x128xf32> to vector<8x128xf32>
    %25 = vector.shape_cast %24 : vector<8x128xf32> to vector<1x1x8x128xf32>
    %cst_12 = arith.constant 6.400000e+01 : f32
    %26 = vector.broadcast %cst_12 : f32 to vector<1x1x8x128xf32>
    %27 = arith.divf %25, %26 : vector<1x1x8x128xf32>
    %28 = arith.mulf %0, %0 : vector<8x8x8x128xf32>
    %cst_13 = arith.constant dense<0.000000e+00> : vector<8x128xf32>
    %29 = vector.multi_reduction <add>, %28, %cst_13 [0, 1] : vector<8x8x8x128xf32> to vector<8x128xf32>
    %30 = vector.shape_cast %29 : vector<8x128xf32> to vector<1x1x8x128xf32>
    %cst_14 = arith.constant 6.400000e+01 : f32
    %31 = vector.broadcast %cst_14 : f32 to vector<1x1x8x128xf32>
    %32 = arith.divf %30, %31 : vector<1x1x8x128xf32>
    %33 = arith.mulf %27, %27 : vector<1x1x8x128xf32>
    %34 = arith.subf %32, %33 : vector<1x1x8x128xf32>
    %cst_15 = arith.constant 0.000000e+00 : f32
    %35 = vector.broadcast %cst_15 : f32 to vector<1x1x8x128xf32>
    %36 = arith.maximumf %34, %35 : vector<1x1x8x128xf32>
    %37 = vector.broadcast %27 : vector<1x1x8x128xf32> to vector<8x8x8x128xf32>
    %38 = arith.subf %0, %37 : vector<8x8x8x128xf32>
    %cst_16 = arith.constant 9.99999974E-6 : f32
    %39 = vector.broadcast %cst_16 : f32 to vector<1x1x8x128xf32>
    %40 = arith.addf %36, %39 : vector<1x1x8x128xf32>
    %41 = math.rsqrt %40 : vector<1x1x8x128xf32>
    %42 = vector.broadcast %41 : vector<1x1x8x128xf32> to vector<8x8x8x128xf32>
    %43 = arith.mulf %38, %42 : vector<8x8x8x128xf32>
    %44 = vector.shape_cast %22 : vector<1x128xf32> to vector<1x1x1x128xf32>
    %45 = vector.broadcast %44 : vector<1x1x1x128xf32> to vector<8x8x8x128xf32>
    %46 = arith.mulf %43, %45 : vector<8x8x8x128xf32>
    %47 = vector.shape_cast %23 : vector<1x128xf32> to vector<1x1x1x128xf32>
    %48 = vector.broadcast %47 : vector<1x1x1x128xf32> to vector<8x8x8x128xf32>
    %49 = arith.addf %46, %48 : vector<8x8x8x128xf32>
    %cst_17 = arith.constant 2.000000e-01 : f32
    %50 = vector.broadcast %cst_17 : f32 to vector<8x8x8x128xf32>
    %51 = arith.mulf %50, %49 : vector<8x8x8x128xf32>
    %52 = arith.maximumf %49, %51 : vector<8x8x8x128xf32>
    %53 = arith.truncf %52 : vector<8x8x8x128xf32> to vector<8x8x8x128xbf16>
    %cst_18 = arith.constant 0.000000e+00 : bf16
    %54 = vector.broadcast %cst_18 : bf16 to vector<1x8x8x128xbf16>
    %55 = tpu.concatenate %54, %53, %54 in 0 : vector<1x8x8x128xbf16>, vector<8x8x8x128xbf16>, vector<1x8x8x128xbf16> -> vector<10x8x8x128xbf16>
    %cst_19 = arith.constant 0.000000e+00 : bf16
    %56 = vector.broadcast %cst_19 : bf16 to vector<10x1x8x128xbf16>
    %57 = tpu.concatenate %56, %55, %56 in 1 : vector<10x1x8x128xbf16>, vector<10x8x8x128xbf16>, vector<10x1x8x128xbf16> -> vector<10x10x8x128xbf16>
    %58 = vector.extract_strided_slice %57 {offsets = [0, 0, 0, 0], sizes = [8, 8, 8, 128], strides = [1, 1, 1, 1]} : vector<10x10x8x128xbf16> to vector<8x8x8x128xbf16>
    %59 = vector.shape_cast %58 : vector<8x8x8x128xbf16> to vector<512x128xbf16>
    %60 = vector.extract_strided_slice %57 {offsets = [0, 1, 0, 0], sizes = [8, 8, 8, 128], strides = [1, 1, 1, 1]} : vector<10x10x8x128xbf16> to vector<8x8x8x128xbf16>
    %61 = vector.shape_cast %60 : vector<8x8x8x128xbf16> to vector<512x128xbf16>
    %62 = vector.extract_strided_slice %57 {offsets = [0, 2, 0, 0], sizes = [8, 8, 8, 128], strides = [1, 1, 1, 1]} : vector<10x10x8x128xbf16> to vector<8x8x8x128xbf16>
    %63 = vector.shape_cast %62 : vector<8x8x8x128xbf16> to vector<512x128xbf16>
    %64 = vector.extract_strided_slice %57 {offsets = [1, 0, 0, 0], sizes = [8, 8, 8, 128], strides = [1, 1, 1, 1]} : vector<10x10x8x128xbf16> to vector<8x8x8x128xbf16>
    %65 = vector.shape_cast %64 : vector<8x8x8x128xbf16> to vector<512x128xbf16>
    %66 = vector.extract_strided_slice %57 {offsets = [1, 1, 0, 0], sizes = [8, 8, 8, 128], strides = [1, 1, 1, 1]} : vector<10x10x8x128xbf16> to vector<8x8x8x128xbf16>
    %67 = vector.shape_cast %66 : vector<8x8x8x128xbf16> to vector<512x128xbf16>
    %68 = vector.extract_strided_slice %57 {offsets = [1, 2, 0, 0], sizes = [8, 8, 8, 128], strides = [1, 1, 1, 1]} : vector<10x10x8x128xbf16> to vector<8x8x8x128xbf16>
    %69 = vector.shape_cast %68 : vector<8x8x8x128xbf16> to vector<512x128xbf16>
    %70 = vector.extract_strided_slice %57 {offsets = [2, 0, 0, 0], sizes = [8, 8, 8, 128], strides = [1, 1, 1, 1]} : vector<10x10x8x128xbf16> to vector<8x8x8x128xbf16>
    %71 = vector.shape_cast %70 : vector<8x8x8x128xbf16> to vector<512x128xbf16>
    %72 = vector.extract_strided_slice %57 {offsets = [2, 1, 0, 0], sizes = [8, 8, 8, 128], strides = [1, 1, 1, 1]} : vector<10x10x8x128xbf16> to vector<8x8x8x128xbf16>
    %73 = vector.shape_cast %72 : vector<8x8x8x128xbf16> to vector<512x128xbf16>
    %74 = vector.extract_strided_slice %57 {offsets = [2, 2, 0, 0], sizes = [8, 8, 8, 128], strides = [1, 1, 1, 1]} : vector<10x10x8x128xbf16> to vector<8x8x8x128xbf16>
    %75 = vector.shape_cast %74 : vector<8x8x8x128xbf16> to vector<512x128xbf16>
    %76 = tpu.concatenate %59, %61, %63, %65, %67, %69, %71, %73, %75 in 1 : vector<512x128xbf16>, vector<512x128xbf16>, vector<512x128xbf16>, vector<512x128xbf16>, vector<512x128xbf16>, vector<512x128xbf16>, vector<512x128xbf16>, vector<512x128xbf16>, vector<512x128xbf16> -> vector<512x1152xbf16>
    %c0_20 = arith.constant 0 : index
    %c0_21 = arith.constant 0 : index
    %77 = vector.load %arg2[%c0_20, %c0_21] : memref<1152x128xbf16, #tpu.memory_space<vmem>>, vector<1152x128xbf16>
    %cst_22 = arith.constant dense<0.000000e+00> : vector<512x128xf32>
    %78 = tpu.matmul %76, %77, %cst_22 {dimension_numbers = #tpu.dot_dimension_numbers<[1], [0], [0], [1], [0, 0, 1, 1], [], []>} : vector<512x1152xbf16>, vector<1152x128xbf16>, vector<512x128xf32> -> vector<512x128xf32>
    %c0_23 = arith.constant 0 : index
    %c0_24 = arith.constant 0 : index
    %79 = vector.load %arg3[%c0_23, %c0_24] : memref<1x128xf32, #tpu.memory_space<vmem>>, vector<1x128xf32>
    %80 = vector.broadcast %79 : vector<1x128xf32> to vector<512x128xf32>
    %81 = arith.addf %78, %80 : vector<512x128xf32>
    %82 = vector.shape_cast %81 : vector<512x128xf32> to vector<8x8x8x128xf32>
    %83 = vector.shape_cast %82 : vector<8x8x8x128xf32> to vector<4x2x8x8x128xf32>
    %84 = vector.extract_strided_slice %83 {offsets = [0, 0, 0, 0, 0], sizes = [4, 1, 8, 8, 128], strides = [1, 1, 1, 1, 1]} : vector<4x2x8x8x128xf32> to vector<4x1x8x8x128xf32>
    %85 = vector.shape_cast %84 : vector<4x1x8x8x128xf32> to vector<4x8x8x128xf32>
    %86 = vector.extract_strided_slice %83 {offsets = [0, 1, 0, 0, 0], sizes = [4, 1, 8, 8, 128], strides = [1, 1, 1, 1, 1]} : vector<4x2x8x8x128xf32> to vector<4x1x8x8x128xf32>
    %87 = vector.shape_cast %86 : vector<4x1x8x8x128xf32> to vector<4x8x8x128xf32>
    %88 = arith.addf %85, %87 : vector<4x8x8x128xf32>
    %cst_25 = arith.constant 5.000000e-01 : f32
    %89 = vector.broadcast %cst_25 : f32 to vector<4x8x8x128xf32>
    %90 = arith.mulf %88, %89 : vector<4x8x8x128xf32>
    %91 = vector.shape_cast %90 : vector<4x8x8x128xf32> to vector<4x4x2x8x128xf32>
    %92 = vector.extract_strided_slice %91 {offsets = [0, 0, 0, 0, 0], sizes = [4, 4, 1, 8, 128], strides = [1, 1, 1, 1, 1]} : vector<4x4x2x8x128xf32> to vector<4x4x1x8x128xf32>
    %93 = vector.shape_cast %92 : vector<4x4x1x8x128xf32> to vector<4x4x8x128xf32>
    %94 = vector.extract_strided_slice %91 {offsets = [0, 0, 1, 0, 0], sizes = [4, 4, 1, 8, 128], strides = [1, 1, 1, 1, 1]} : vector<4x4x2x8x128xf32> to vector<4x4x1x8x128xf32>
    %95 = vector.shape_cast %94 : vector<4x4x1x8x128xf32> to vector<4x4x8x128xf32>
    %96 = arith.addf %93, %95 : vector<4x4x8x128xf32>
    %cst_26 = arith.constant 5.000000e-01 : f32
    %97 = vector.broadcast %cst_26 : f32 to vector<4x4x8x128xf32>
    %98 = arith.mulf %96, %97 : vector<4x4x8x128xf32>
    %c0_27 = arith.constant 0 : index
    %c0_28 = arith.constant 0 : index
    %99 = vector.load %arg9[%c0_27, %c0_28] : memref<1x128xf32, #tpu.memory_space<vmem>>, vector<1x128xf32>
    %c0_29 = arith.constant 0 : index
    %c0_30 = arith.constant 0 : index
    %100 = vector.load %arg10[%c0_29, %c0_30] : memref<1x128xf32, #tpu.memory_space<vmem>>, vector<1x128xf32>
    %cst_31 = arith.constant dense<0.000000e+00> : vector<8x128xf32>
    %101 = vector.multi_reduction <add>, %98, %cst_31 [0, 1] : vector<4x4x8x128xf32> to vector<8x128xf32>
    %102 = vector.shape_cast %101 : vector<8x128xf32> to vector<1x1x8x128xf32>
    %cst_32 = arith.constant 1.600000e+01 : f32
    %103 = vector.broadcast %cst_32 : f32 to vector<1x1x8x128xf32>
    %104 = arith.divf %102, %103 : vector<1x1x8x128xf32>
    %105 = arith.mulf %98, %98 : vector<4x4x8x128xf32>
    %cst_33 = arith.constant dense<0.000000e+00> : vector<8x128xf32>
    %106 = vector.multi_reduction <add>, %105, %cst_33 [0, 1] : vector<4x4x8x128xf32> to vector<8x128xf32>
    %107 = vector.shape_cast %106 : vector<8x128xf32> to vector<1x1x8x128xf32>
    %cst_34 = arith.constant 1.600000e+01 : f32
    %108 = vector.broadcast %cst_34 : f32 to vector<1x1x8x128xf32>
    %109 = arith.divf %107, %108 : vector<1x1x8x128xf32>
    %110 = arith.mulf %104, %104 : vector<1x1x8x128xf32>
    %111 = arith.subf %109, %110 : vector<1x1x8x128xf32>
    %cst_35 = arith.constant 0.000000e+00 : f32
    %112 = vector.broadcast %cst_35 : f32 to vector<1x1x8x128xf32>
    %113 = arith.maximumf %111, %112 : vector<1x1x8x128xf32>
    %114 = vector.broadcast %104 : vector<1x1x8x128xf32> to vector<4x4x8x128xf32>
    %115 = arith.subf %98, %114 : vector<4x4x8x128xf32>
    %cst_36 = arith.constant 9.99999974E-6 : f32
    %116 = vector.broadcast %cst_36 : f32 to vector<1x1x8x128xf32>
    %117 = arith.addf %113, %116 : vector<1x1x8x128xf32>
    %118 = math.rsqrt %117 : vector<1x1x8x128xf32>
    %119 = vector.broadcast %118 : vector<1x1x8x128xf32> to vector<4x4x8x128xf32>
    %120 = arith.mulf %115, %119 : vector<4x4x8x128xf32>
    %121 = vector.shape_cast %99 : vector<1x128xf32> to vector<1x1x1x128xf32>
    %122 = vector.broadcast %121 : vector<1x1x1x128xf32> to vector<4x4x8x128xf32>
    %123 = arith.mulf %120, %122 : vector<4x4x8x128xf32>
    %124 = vector.shape_cast %100 : vector<1x128xf32> to vector<1x1x1x128xf32>
    %125 = vector.broadcast %124 : vector<1x1x1x128xf32> to vector<4x4x8x128xf32>
    %126 = arith.addf %123, %125 : vector<4x4x8x128xf32>
    %cst_37 = arith.constant 2.000000e-01 : f32
    %127 = vector.broadcast %cst_37 : f32 to vector<4x4x8x128xf32>
    %128 = arith.mulf %127, %126 : vector<4x4x8x128xf32>
    %129 = arith.maximumf %126, %128 : vector<4x4x8x128xf32>
    %130 = arith.truncf %129 : vector<4x4x8x128xf32> to vector<4x4x8x128xbf16>
    %cst_38 = arith.constant 0.000000e+00 : bf16
    %131 = vector.broadcast %cst_38 : bf16 to vector<1x4x8x128xbf16>
    %132 = tpu.concatenate %131, %130, %131 in 0 : vector<1x4x8x128xbf16>, vector<4x4x8x128xbf16>, vector<1x4x8x128xbf16> -> vector<6x4x8x128xbf16>
    %cst_39 = arith.constant 0.000000e+00 : bf16
    %133 = vector.broadcast %cst_39 : bf16 to vector<6x1x8x128xbf16>
    %134 = tpu.concatenate %133, %132, %133 in 1 : vector<6x1x8x128xbf16>, vector<6x4x8x128xbf16>, vector<6x1x8x128xbf16> -> vector<6x6x8x128xbf16>
    %135 = vector.extract_strided_slice %134 {offsets = [0, 0, 0, 0], sizes = [4, 4, 8, 128], strides = [1, 1, 1, 1]} : vector<6x6x8x128xbf16> to vector<4x4x8x128xbf16>
    %136 = vector.shape_cast %135 : vector<4x4x8x128xbf16> to vector<128x128xbf16>
    %137 = vector.extract_strided_slice %134 {offsets = [0, 1, 0, 0], sizes = [4, 4, 8, 128], strides = [1, 1, 1, 1]} : vector<6x6x8x128xbf16> to vector<4x4x8x128xbf16>
    %138 = vector.shape_cast %137 : vector<4x4x8x128xbf16> to vector<128x128xbf16>
    %139 = vector.extract_strided_slice %134 {offsets = [0, 2, 0, 0], sizes = [4, 4, 8, 128], strides = [1, 1, 1, 1]} : vector<6x6x8x128xbf16> to vector<4x4x8x128xbf16>
    %140 = vector.shape_cast %139 : vector<4x4x8x128xbf16> to vector<128x128xbf16>
    %141 = vector.extract_strided_slice %134 {offsets = [1, 0, 0, 0], sizes = [4, 4, 8, 128], strides = [1, 1, 1, 1]} : vector<6x6x8x128xbf16> to vector<4x4x8x128xbf16>
    %142 = vector.shape_cast %141 : vector<4x4x8x128xbf16> to vector<128x128xbf16>
    %143 = vector.extract_strided_slice %134 {offsets = [1, 1, 0, 0], sizes = [4, 4, 8, 128], strides = [1, 1, 1, 1]} : vector<6x6x8x128xbf16> to vector<4x4x8x128xbf16>
    %144 = vector.shape_cast %143 : vector<4x4x8x128xbf16> to vector<128x128xbf16>
    %145 = vector.extract_strided_slice %134 {offsets = [1, 2, 0, 0], sizes = [4, 4, 8, 128], strides = [1, 1, 1, 1]} : vector<6x6x8x128xbf16> to vector<4x4x8x128xbf16>
    %146 = vector.shape_cast %145 : vector<4x4x8x128xbf16> to vector<128x128xbf16>
    %147 = vector.extract_strided_slice %134 {offsets = [2, 0, 0, 0], sizes = [4, 4, 8, 128], strides = [1, 1, 1, 1]} : vector<6x6x8x128xbf16> to vector<4x4x8x128xbf16>
    %148 = vector.shape_cast %147 : vector<4x4x8x128xbf16> to vector<128x128xbf16>
    %149 = vector.extract_strided_slice %134 {offsets = [2, 1, 0, 0], sizes = [4, 4, 8, 128], strides = [1, 1, 1, 1]} : vector<6x6x8x128xbf16> to vector<4x4x8x128xbf16>
    %150 = vector.shape_cast %149 : vector<4x4x8x128xbf16> to vector<128x128xbf16>
    %151 = vector.extract_strided_slice %134 {offsets = [2, 2, 0, 0], sizes = [4, 4, 8, 128], strides = [1, 1, 1, 1]} : vector<6x6x8x128xbf16> to vector<4x4x8x128xbf16>
    %152 = vector.shape_cast %151 : vector<4x4x8x128xbf16> to vector<128x128xbf16>
    %153 = tpu.concatenate %136, %138, %140, %142, %144, %146, %148, %150, %152 in 1 : vector<128x128xbf16>, vector<128x128xbf16>, vector<128x128xbf16>, vector<128x128xbf16>, vector<128x128xbf16>, vector<128x128xbf16>, vector<128x128xbf16>, vector<128x128xbf16>, vector<128x128xbf16> -> vector<128x1152xbf16>
    %c0_40 = arith.constant 0 : index
    %c0_41 = arith.constant 0 : index
    %154 = vector.load %arg4[%c0_40, %c0_41] : memref<1152x256xbf16, #tpu.memory_space<vmem>>, vector<1152x256xbf16>
    %cst_42 = arith.constant dense<0.000000e+00> : vector<128x256xf32>
    %155 = tpu.matmul %153, %154, %cst_42 {dimension_numbers = #tpu.dot_dimension_numbers<[1], [0], [0], [1], [0, 0, 1, 1], [], []>} : vector<128x1152xbf16>, vector<1152x256xbf16>, vector<128x256xf32> -> vector<128x256xf32>
    %c0_43 = arith.constant 0 : index
    %c0_44 = arith.constant 0 : index
    %156 = vector.load %arg5[%c0_43, %c0_44] : memref<1x256xf32, #tpu.memory_space<vmem>>, vector<1x256xf32>
    %157 = vector.broadcast %156 : vector<1x256xf32> to vector<128x256xf32>
    %158 = arith.addf %155, %157 : vector<128x256xf32>
    %159 = vector.shape_cast %158 : vector<128x256xf32> to vector<4x4x8x256xf32>
    %160 = arith.addf %21, %159 : vector<4x4x8x256xf32>
    %cst_45 = arith.constant 0.707106769 : f32
    %161 = vector.broadcast %cst_45 : f32 to vector<4x4x8x256xf32>
    %162 = arith.mulf %160, %161 : vector<4x4x8x256xf32>
    %c0_46 = arith.constant 0 : index
    %c0_47 = arith.constant 0 : index
    %c0_48 = arith.constant 0 : index
    %c0_49 = arith.constant 0 : index
    %163 = vector.load %arg11[%c0_46, %c0_47, %c0_48, %c0_49] : memref<4x4x8x256xf32, #tpu.memory_space<vmem>>, vector<4x4x8x256xf32>
    tpu.vector_store %arg11[%c0_46, %c0_47, %c0_48, %c0_49], %162 {strides = array<i32>} : memref<4x4x8x256xf32, #tpu.memory_space<vmem>>, vector<4x4x8x256xf32>,
    return
  }
  func.func @transform_0(%arg0: i32) -> (i32, i32, i32, i32) {
    %c0_i32 = arith.constant 0 : i32
    %c0_i32_0 = arith.constant 0 : i32
    %c0_i32_1 = arith.constant 0 : i32
    %c0_i32_2 = arith.constant 0 : i32
    return %c0_i32, %c0_i32_0, %arg0, %c0_i32_1 : i32, i32, i32, i32
  }
  func.func @transform_1(%arg0: i32) -> (i32, i32) {
    %c0_i32 = arith.constant 0 : i32
    %c0_i32_0 = arith.constant 0 : i32
    %c0_i32_1 = arith.constant 0 : i32
    return %c0_i32, %c0_i32_0 : i32, i32
  }
  func.func @transform_2(%arg0: i32) -> (i32, i32) {
    %c0_i32 = arith.constant 0 : i32
    %c0_i32_0 = arith.constant 0 : i32
    %c0_i32_1 = arith.constant 0 : i32
    return %c0_i32, %c0_i32_0 : i32, i32
  }
  func.func @transform_3(%arg0: i32) -> (i32, i32) {
    %c0_i32 = arith.constant 0 : i32
    %c0_i32_0 = arith.constant 0 : i32
    %c0_i32_1 = arith.constant 0 : i32
    return %c0_i32, %c0_i32_0 : i32, i32
  }
  func.func @transform_4(%arg0: i32) -> (i32, i32) {
    %c0_i32 = arith.constant 0 : i32
    %c0_i32_0 = arith.constant 0 : i32
    %c0_i32_1 = arith.constant 0 : i32
    return %c0_i32, %c0_i32_0 : i32, i32
  }
  func.func @transform_5(%arg0: i32) -> (i32, i32) {
    %c0_i32 = arith.constant 0 : i32
    %c0_i32_0 = arith.constant 0 : i32
    %c0_i32_1 = arith.constant 0 : i32
    return %c0_i32, %c0_i32_0 : i32, i32
  }
  func.func @transform_6(%arg0: i32) -> (i32, i32) {
    %c0_i32 = arith.constant 0 : i32
    %c0_i32_0 = arith.constant 0 : i32
    %c0_i32_1 = arith.constant 0 : i32
    return %c0_i32, %c0_i32_0 : i32, i32
  }
  func.func @transform_7(%arg0: i32) -> (i32, i32) {
    %c0_i32 = arith.constant 0 : i32
    %c0_i32_0 = arith.constant 0 : i32
    %c0_i32_1 = arith.constant 0 : i32
    return %c0_i32, %c0_i32_0 : i32, i32
  }
  func.func @transform_8(%arg0: i32) -> (i32, i32) {
    %c0_i32 = arith.constant 0 : i32
    %c0_i32_0 = arith.constant 0 : i32
    %c0_i32_1 = arith.constant 0 : i32
    return %c0_i32, %c0_i32_0 : i32, i32
  }
  func.func @transform_9(%arg0: i32) -> (i32, i32) {
    %c0_i32 = arith.constant 0 : i32
    %c0_i32_0 = arith.constant 0 : i32
    %c0_i32_1 = arith.constant 0 : i32
    return %c0_i32, %c0_i32_0 : i32, i32
  }
  func.func @transform_10(%arg0: i32) -> (i32, i32, i32, i32) {
    %c0_i32 = arith.constant 0 : i32
    %c0_i32_0 = arith.constant 0 : i32
    %c0_i32_1 = arith.constant 0 : i32
    %c0_i32_2 = arith.constant 0 : i32
    return %c0_i32, %c0_i32_0, %arg0, %c0_i32_1 : i32, i32, i32, i32
  }
}

</mosaic_0001>

<llo_original>
// kernel: resblk_forward.1
$region0: #{resblk_forward.1}
  #allocation0 [shape = 'u32[]', space=smem, size = 0x4, offset = 0x4, fixed_abs, tag = 'smem constant byte address 0x4 - core index']
  #allocation1 [shape = 'u32[144,128]{1,0:T(1,128)}', space=vmem, size = 0x12000, scoped, tag = 'internal scratch']
  %s0 = inlined_call_operand.vmem [shape: f32[8,8,16,128], index: 0, kind: input, shape index: {}]
  %s1 = inlined_call_operand.vmem [shape: bf16[1152,128], index: 1, kind: input, shape index: {}]
  %s2 = inlined_call_operand.vmem [shape: f32[1,128], index: 2, kind: input, shape index: {}]
  %s3 = inlined_call_operand.vmem [shape: bf16[1152,256], index: 3, kind: input, shape index: {}]
  %s4 = inlined_call_operand.vmem [shape: f32[1,256], index: 4, kind: input, shape index: {}]
  %s5 = inlined_call_operand.vmem [shape: bf16[128,256], index: 5, kind: input, shape index: {}]
  %s6 = inlined_call_operand.vmem [shape: f32[1,128], index: 6, kind: input, shape index: {}]
  %s7 = inlined_call_operand.vmem [shape: f32[1,128], index: 7, kind: input, shape index: {}]
  %s8 = inlined_call_operand.vmem [shape: f32[1,128], index: 8, kind: input, shape index: {}]
  %s9 = inlined_call_operand.vmem [shape: f32[1,128], index: 9, kind: input, shape index: {}]
  %s10 = inlined_call_operand.vmem [shape: f32[4,4,16,256], index: 10, kind: output, shape index: {}]
  %s11 = sld [smem:[#allocation0]]
  $region130: #{resblk_forward.1} parent=0
    _
  %s13 = ssub.s32 1, %s11
  %s14 = scalar_select 0, %s13, %s11
  $region1: #{resblk_forward.1} parent=0
    #allocation2 [shape = 'u8[524288]{0}', space=vmem, size = 0x80000, scoped, tag = 'input window, operand 0']
    #allocation3 [shape = 'u8[262144]{0}', space=vmem, size = 0x40000, scoped, tag = 'output window, operand 0']
    loop: start=0, step=1, limit=4
    $region2: #{resblk_forward.1} parent=1 // loop_pre_header
      _
    $region3: #{resblk_forward.1} parent=1 // loop_header
      %s16 = sphi 0, %s20
      %p17 = scmp.ge.s32.totalorder %s16, 4
      %s26 = sphi 0, %s28
      %s29 = sphi 0, %s26
      %s30 = sphi 0, %s29
      %s46 = sphi 0, %s30
      %s50 = sphi 0, %s50
      %s52 = sphi 0, %s50
      %s53 = sphi 0, %s52
      %s67 = sphi 0, %s53
      %s71 = sphi 0, %s71
      %s73 = sphi 0, %s71
      %s74 = sphi 0, %s73
      %s88 = sphi 0, %s74
      %s92 = sphi 0, %s92
      %s94 = sphi 0, %s92
      %s95 = sphi 0, %s94
      %s109 = sphi 0, %s95
      %s113 = sphi 0, %s113
      %s115 = sphi 0, %s113
      %s116 = sphi 0, %s115
      %s130 = sphi 0, %s116
      %s134 = sphi 0, %s134
      %s136 = sphi 0, %s134
      %s137 = sphi 0, %s136
      %s151 = sphi 0, %s137
      %s155 = sphi 0, %s155
      %s157 = sphi 0, %s155
      %s158 = sphi 0, %s157
      %s172 = sphi 0, %s158
      %s176 = sphi 0, %s176
      %s178 = sphi 0, %s176
      %s179 = sphi 0, %s178
      %s193 = sphi 0, %s179
      %s197 = sphi 0, %s197
      %s199 = sphi 0, %s197
      %s200 = sphi 0, %s199
      %s214 = sphi 0, %s200
      %s218 = sphi 0, %s218
      %s220 = sphi 0, %s218
      %s221 = sphi 0, %s220
      %s235 = sphi 0, %s221
      %s241 = sphi 0, %s243
      %s244 = sphi 0, %s241
      %s245 = sphi 0, %s244
      %s261 = sphi 0, %s245
    $region4: #{resblk_forward.1} parent=1 // loop_header_branch
      %19 = sbr.rel (%p17) target = $region8
    $region5: #{resblk_forward.1} parent=1 // loop_body
      %s21 = ssub.s32 %s16, 1
      %s22 = ssub.s32 %s16, 2
      %s23 = sadd.s32 %s16, 1
      %s24 = ssub.s32 %s16, %s23
      %p25 = scmp.eq.s32.totalorder %s24, 0
      %s27 = sadd.s32 %s26, 1
      %s28 = scalar_select %p25, %s26, %s27
      %p31 = pneg %p25
      %p32 = scmp.eq.s32.totalorder %s16, 1
      %p33 = por %p31, %p32
      %p34 = scmp.ne.s32.totalorder %s26, %s29
      %p35 = scmp.eq.s32.totalorder %s16, 0
      %p36 = por %p34, %p35
      %p37 = scmp.ne.s32.totalorder %s26, %s29
      %p38 = scmp.eq.s32.totalorder %s21, 1
      %p39 = por %p37, %p38
      %p40 = scmp.ne.s32.totalorder %s29, %s30
      %p41 = scmp.eq.s32.totalorder %s21, 0
      %p42 = por %p40, %p41
      %p43 = scmp.ne.s32.totalorder %s29, %s30
      %p44 = scmp.eq.s32.totalorder %s22, 1
      %p45 = por %p43, %p44
      %p47 = scmp.ne.s32.totalorder %s30, %s46
      %p48 = scmp.eq.s32.totalorder %s22, 0
      %p49 = por %p47, %p48
      %s51 = sadd.s32 %s50, 1
      %p54 = scmp.eq.s32.totalorder %s16, 1
      %p55 = scmp.ne.s32.totalorder %s50, %s52
      %p56 = scmp.eq.s32.totalorder %s16, 0
      %p57 = por %p55, %p56
      %p58 = scmp.ne.s32.totalorder %s50, %s52
      %p59 = scmp.eq.s32.totalorder %s21, 1
      %p60 = por %p58, %p59
      %p61 = scmp.ne.s32.totalorder %s52, %s53
      %p62 = scmp.eq.s32.totalorder %s21, 0
      %p63 = por %p61, %p62
      %p64 = scmp.ne.s32.totalorder %s52, %s53
      %p65 = scmp.eq.s32.totalorder %s22, 1
      %p66 = por %p64, %p65
      %p68 = scmp.ne.s32.totalorder %s53, %s67
      %p69 = scmp.eq.s32.totalorder %s22, 0
      %p70 = por %p68, %p69
      %s72 = sadd.s32 %s71, 1
      %p75 = scmp.eq.s32.totalorder %s16, 1
      %p76 = scmp.ne.s32.totalorder %s71, %s73
      %p77 = scmp.eq.s32.totalorder %s16, 0
      %p78 = por %p76, %p77
      %p79 = scmp.ne.s32.totalorder %s71, %s73
      %p80 = scmp.eq.s32.totalorder %s21, 1
      %p81 = por %p79, %p80
      %p82 = scmp.ne.s32.totalorder %s73, %s74
      %p83 = scmp.eq.s32.totalorder %s21, 0
      %p84 = por %p82, %p83
      %p85 = scmp.ne.s32.totalorder %s73, %s74
      %p86 = scmp.eq.s32.totalorder %s22, 1
      %p87 = por %p85, %p86
      %p89 = scmp.ne.s32.totalorder %s74, %s88
      %p90 = scmp.eq.s32.totalorder %s22, 0
      %p91 = por %p89, %p90
      %s93 = sadd.s32 %s92, 1
      %p96 = scmp.eq.s32.totalorder %s16, 1
      %p97 = scmp.ne.s32.totalorder %s92, %s94
      %p98 = scmp.eq.s32.totalorder %s16, 0
      %p99 = por %p97, %p98
      %p100 = scmp.ne.s32.totalorder %s92, %s94
      %p101 = scmp.eq.s32.totalorder %s21, 1
      %p102 = por %p100, %p101
      %p103 = scmp.ne.s32.totalorder %s94, %s95
      %p104 = scmp.eq.s32.totalorder %s21, 0
      %p105 = por %p103, %p104
      %p106 = scmp.ne.s32.totalorder %s94, %s95
      %p107 = scmp.eq.s32.totalorder %s22, 1
      %p108 = por %p106, %p107
      %p110 = scmp.ne.s32.totalorder %s95, %s109
      %p111 = scmp.eq.s32.totalorder %s22, 0
      %p112 = por %p110, %p111
      %s114 = sadd.s32 %s113, 1
      %p117 = scmp.eq.s32.totalorder %s16, 1
      %p118 = scmp.ne.s32.totalorder %s113, %s115
      %p119 = scmp.eq.s32.totalorder %s16, 0
      %p120 = por %p118, %p119
      %p121 = scmp.ne.s32.totalorder %s113, %s115
      %p122 = scmp.eq.s32.totalorder %s21, 1
      %p123 = por %p121, %p122
      %p124 = scmp.ne.s32.totalorder %s115, %s116
      %p125 = scmp.eq.s32.totalorder %s21, 0
      %p126 = por %p124, %p125
      %p127 = scmp.ne.s32.totalorder %s115, %s116
      %p128 = scmp.eq.s32.totalorder %s22, 1
      %p129 = por %p127, %p128
      %p131 = scmp.ne.s32.totalorder %s116, %s130
      %p132 = scmp.eq.s32.totalorder %s22, 0
      %p133 = por %p131, %p132
      %s135 = sadd.s32 %s134, 1
      %p138 = scmp.eq.s32.totalorder %s16, 1
      %p139 = scmp.ne.s32.totalorder %s134, %s136
      %p140 = scmp.eq.s32.totalorder %s16, 0
      %p141 = por %p139, %p140
      %p142 = scmp.ne.s32.totalorder %s134, %s136
      %p143 = scmp.eq.s32.totalorder %s21, 1
      %p144 = por %p142, %p143
      %p145 = scmp.ne.s32.totalorder %s136, %s137
      %p146 = scmp.eq.s32.totalorder %s21, 0
      %p147 = por %p145, %p146
      %p148 = scmp.ne.s32.totalorder %s136, %s137
      %p149 = scmp.eq.s32.totalorder %s22, 1
      %p150 = por %p148, %p149
      %p152 = scmp.ne.s32.totalorder %s137, %s151
      %p153 = scmp.eq.s32.totalorder %s22, 0
      %p154 = por %p152, %p153
      %s156 = sadd.s32 %s155, 1
      %p159 = scmp.eq.s32.totalorder %s16, 1
      %p160 = scmp.ne.s32.totalorder %s155, %s157
      %p161 = scmp.eq.s32.totalorder %s16, 0
      %p162 = por %p160, %p161
      %p163 = scmp.ne.s32.totalorder %s155, %s157
      %p164 = scmp.eq.s32.totalorder %s21, 1
      %p165 = por %p163, %p164
      %p166 = scmp.ne.s32.totalorder %s157, %s158
      %p167 = scmp.eq.s32.totalorder %s21, 0
      %p168 = por %p166, %p167
      %p169 = scmp.ne.s32.totalorder %s157, %s158
      %p170 = scmp.eq.s32.totalorder %s22, 1
      %p171 = por %p169, %p170
      %p173 = scmp.ne.s32.totalorder %s158, %s172
      %p174 = scmp.eq.s32.totalorder %s22, 0
      %p175 = por %p173, %p174
      %s177 = sadd.s32 %s176, 1
      %p180 = scmp.eq.s32.totalorder %s16, 1
      %p181 = scmp.ne.s32.totalorder %s176, %s178
      %p182 = scmp.eq.s32.totalorder %s16, 0
      %p183 = por %p181, %p182
      %p184 = scmp.ne.s32.totalorder %s176, %s178
      %p185 = scmp.eq.s32.totalorder %s21, 1
      %p186 = por %p184, %p185
      %p187 = scmp.ne.s32.totalorder %s178, %s179
      %p188 = scmp.eq.s32.totalorder %s21, 0
      %p189 = por %p187, %p188
      %p190 = scmp.ne.s32.totalorder %s178, %s179
      %p191 = scmp.eq.s32.totalorder %s22, 1
      %p192 = por %p190, %p191
      %p194 = scmp.ne.s32.totalorder %s179, %s193
      %p195 = scmp.eq.s32.totalorder %s22, 0
      %p196 = por %p194, %p195
      %s198 = sadd.s32 %s197, 1
      %p201 = scmp.eq.s32.totalorder %s16, 1
      %p202 = scmp.ne.s32.totalorder %s197, %s199
      %p203 = scmp.eq.s32.totalorder %s16, 0
      %p204 = por %p202, %p203
      %p205 = scmp.ne.s32.totalorder %s197, %s199
      %p206 = scmp.eq.s32.totalorder %s21, 1
      %p207 = por %p205, %p206
      %p208 = scmp.ne.s32.totalorder %s199, %s200
      %p209 = scmp.eq.s32.totalorder %s21, 0
      %p210 = por %p208, %p209
      %p211 = scmp.ne.s32.totalorder %s199, %s200
      %p212 = scmp.eq.s32.totalorder %s22, 1
      %p213 = por %p211, %p212
      %p215 = scmp.ne.s32.totalorder %s200, %s214
      %p216 = scmp.eq.s32.totalorder %s22, 0
      %p217 = por %p215, %p216
      %s219 = sadd.s32 %s218, 1
      %p222 = scmp.eq.s32.totalorder %s16, 1
      %p223 = scmp.ne.s32.totalorder %s218, %s220
      %p224 = scmp.eq.s32.totalorder %s16, 0
      %p225 = por %p223, %p224
      %p226 = scmp.ne.s32.totalorder %s218, %s220
      %p227 = scmp.eq.s32.totalorder %s21, 1
      %p228 = por %p226, %p227
      %p229 = scmp.ne.s32.totalorder %s220, %s221
      %p230 = scmp.eq.s32.totalorder %s21, 0
      %p231 = por %p229, %p230
      %p232 = scmp.ne.s32.totalorder %s220, %s221
      %p233 = scmp.eq.s32.totalorder %s22, 1
      %p234 = por %p232, %p233
      %p236 = scmp.ne.s32.totalorder %s221, %s235
      %p237 = scmp.eq.s32.totalorder %s22, 0
      %p238 = por %p236, %p237
      %s239 = ssub.s32 %s16, %s23
      %p240 = scmp.eq.s32.totalorder %s239, 0
      %s242 = sadd.s32 %s241, 1
      %s243 = scalar_select %p240, %s241, %s242
      %p246 = pneg %p240
      %p247 = scmp.eq.s32.totalorder %s16, 1
      %p248 = por %p246, %p247
      %p249 = scmp.ne.s32.totalorder %s241, %s244
      %p250 = scmp.eq.s32.totalorder %s16, 0
      %p251 = por %p249, %p250
      %p252 = scmp.ne.s32.totalorder %s241, %s244
      %p253 = scmp.eq.s32.totalorder %s21, 1
      %p254 = por %p252, %p253
      %p255 = scmp.ne.s32.totalorder %s244, %s245
      %p256 = scmp.eq.s32.totalorder %s21, 0
      %p257 = por %p255, %p256
      %p258 = scmp.ne.s32.totalorder %s244, %s245
      %p259 = scmp.eq.s32.totalorder %s22, 1
      %p260 = por %p258, %p259
      %p262 = scmp.ne.s32.totalorder %s245, %s261
      %p263 = scmp.eq.s32.totalorder %s22, 0
      %p264 = por %p262, %p263
      %p265 = scmp.le.s32.totalorder 1, %s16
      %p266 = scmp.lt.s32.totalorder %s16, 3
      %p267 = pnand %p265, %p266
      %p268 = pneg %p267
      // Predicated region
      $region9: #{resblk_forward.1} parent=5 // pred_check
        _
      $region10: #{resblk_forward.1} parent=5 // pred_check_branch
        %270 = sbr.rel (%p267) target = $region12
      $region11: #{resblk_forward.1} parent=5 // pred_region
        %s271 = ssub.s32 %s16, 1
        // Predicated region
        $region13: #{resblk_forward.1} parent=11 // pred_check
          %p272 = pneg %p63
        $region14: #{resblk_forward.1} parent=11 // pred_check_branch
          %274 = sbr.rel (%p272) target = $region16
        $region15: #{resblk_forward.1} parent=11 // pred_region
          _
        $region16: #{resblk_forward.1} parent=11 // pred_fallthru
          _
        // Predicated region
        $region17: #{resblk_forward.1} parent=11 // pred_check
          %p275 = pneg %p84
        $region18: #{resblk_forward.1} parent=11 // pred_check_branch
          %277 = sbr.rel (%p275) target = $region20
        $region19: #{resblk_forward.1} parent=11 // pred_region
          _
        $region20: #{resblk_forward.1} parent=11 // pred_fallthru
          _
        // Predicated region
        $region21: #{resblk_forward.1} parent=11 // pred_check
          %p278 = pneg %p105
        $region22: #{resblk_forward.1} parent=11 // pred_check_branch
          %280 = sbr.rel (%p278) target = $region24
        $region23: #{resblk_forward.1} parent=11 // pred_region
          _
        $region24: #{resblk_forward.1} parent=11 // pred_fallthru
          _
        // Predicated region
        $region25: #{resblk_forward.1} parent=11 // pred_check
          %p281 = pneg %p126
        $region26: #{resblk_forward.1} parent=11 // pred_check_branch
          %283 = sbr.rel (%p281) target = $region28
        $region27: #{resblk_forward.1} parent=11 // pred_region
          _
        $region28: #{resblk_forward.1} parent=11 // pred_fallthru
          _
        // Predicated region
        $region29: #{resblk_forward.1} parent=11 // pred_check
          %p284 = pneg %p147
        $region30: #{resblk_forward.1} parent=11 // pred_check_branch
          %286 = sbr.rel (%p284) target = $region32
        $region31: #{resblk_forward.1} parent=11 // pred_region
          _
        $region32: #{resblk_forward.1} parent=11 // pred_fallthru
          _
        // Predicated region
        $region33: #{resblk_forward.1} parent=11 // pred_check
          %p287 = pneg %p168
        $region34: #{resblk_forward.1} parent=11 // pred_check_branch
          %289 = sbr.rel (%p287) target = $region36
        $region35: #{resblk_forward.1} parent=11 // pred_region
          _
        $region36: #{resblk_forward.1} parent=11 // pred_fallthru
          _
        // Predicated region
        $region37: #{resblk_forward.1} parent=11 // pred_check
          %p290 = pneg %p189
        $region38: #{resblk_forward.1} parent=11 // pred_check_branch
          %292 = sbr.rel (%p290) target = $region40
        $region39: #{resblk_forward.1} parent=11 // pred_region
          _
        $region40: #{resblk_forward.1} parent=11 // pred_fallthru
          _
        // Predicated region
        $region41: #{resblk_forward.1} parent=11 // pred_check
          %p293 = pneg %p210
        $region42: #{resblk_forward.1} parent=11 // pred_check_branch
          %295 = sbr.rel (%p293) target = $region44
        $region43: #{resblk_forward.1} parent=11 // pred_region
          _
        $region44: #{resblk_forward.1} parent=11 // pred_fallthru
          _
        // Predicated region
        $region45: #{resblk_forward.1} parent=11 // pred_check
          %p296 = pneg %p231
        $region46: #{resblk_forward.1} parent=11 // pred_check_branch
          %298 = sbr.rel (%p296) target = $region48
        $region47: #{resblk_forward.1} parent=11 // pred_region
          _
        $region48: #{resblk_forward.1} parent=11 // pred_fallthru
          _
      $region12: #{resblk_forward.1} parent=5 // pred_fallthru
        _
      %p299 = scmp.lt.s32.totalorder %s16, 2
      // Predicated region
      $region49: #{resblk_forward.1} parent=5 // pred_check
        %p300 = pneg %p299
      $region50: #{resblk_forward.1} parent=5 // pred_check_branch
        %302 = sbr.rel (%p300) target = $region52
      $region51: #{resblk_forward.1} parent=5 // pred_region
        // Predicated region
        $region53: #{resblk_forward.1} parent=51 // pred_check
          %p303 = pneg %p36
        $region54: #{resblk_forward.1} parent=51 // pred_check_branch
          %305 = sbr.rel (%p303) target = $region56
        $region55: #{resblk_forward.1} parent=51 // pred_region
          %s306 = sand.u32 %s26, 1
          %s307 = sand.u32 %s26, 1
          %s308 = smul.addr %s307, 512
          %s309 = scalar_lea.vmem [#allocation2], %s308
          %s310 = smul.addr %s16, 8
          %s311 = scalar_lea.vmem %s0, %s310
          // Predicated region
          $region57: #{resblk_forward.1} parent=55 // pred_check
            _
          $region58: #{resblk_forward.1} parent=55 // pred_check_branch
            %313 = sbr.rel (0) target = $region60
          $region59: #{resblk_forward.1} parent=55 // pred_region
            // Predicated region
            $region61: #{resblk_forward.1} parent=59 // pred_check
              _
            $region62: #{resblk_forward.1} parent=59 // pred_check_branch
              %315 = sbr.rel (0) target = $region64
            $region63: #{resblk_forward.1} parent=59 // pred_region
              // Predicated region
              $region76: #{resblk_forward.1} parent=63 // pred_check
                _
              $region77: #{resblk_forward.1} parent=63 // pred_check_branch
                %456 = sbr.rel (0) target = $region79
              $region78: #{resblk_forward.1} parent=63 // pred_region
                loop: start=0, step=1, limit=1
                $region80: #{resblk_forward.1} parent=78 // loop_pre_header
                  _
                $region81: #{resblk_forward.1} parent=78 // loop_header
                  %s458 = sphi 0, %s462
                  %p459 = scmp.ge.s32.totalorder %s458, 1
                  %s463 = sphi %s311, %s311
                  %s464 = sphi %s309, %s309
                $region82: #{resblk_forward.1} parent=78 // loop_header_branch
                  %461 = sbr.rel (%p459) target = $region86
                $region83: #{resblk_forward.1} parent=78 // loop_body
                  %v465 = vld [vmem:[%s463] sm:$0xff]
                  %466 = vst [vmem:[%s464] sm:$0xff] %v465
                  %v467 = vld [vmem:[%s463 + $0x10] sm:$0xff]
                  %468 = vst [vmem:[%s464 + $0x8] sm:$0xff] %v467
                  %v469 = vld [vmem:[%s463 + $0x20] sm:$0xff]
                  %470 = vst [vmem:[%s464 + $0x10] sm:$0xff] %v469
                  %v471 = vld [vmem:[%s463 + $0x30] sm:$0xff]
                  %472 = vst [vmem:[%s464 + $0x18] sm:$0xff] %v471
                  %v473 = vld [vmem:[%s463 + $0x40] sm:$0xff]
                  %474 = vst [vmem:[%s464 + $0x20] sm:$0xff] %v473
                  %v475 = vld [vmem:[%s463 + $0x50] sm:$0xff]
                  %476 = vst [vmem:[%s464 + $0x28] sm:$0xff] %v475
                  %v477 = vld [vmem:[%s463 + $0x60] sm:$0xff]
                  %478 = vst [vmem:[%s464 + $0x30] sm:$0xff] %v477
                  %v479 = vld [vmem:[%s463 + $0x70] sm:$0xff]
                  %480 = vst [vmem:[%s464 + $0x38] sm:$0xff] %v479
                  %v481 = vld [vmem:[%s463 + $0x80] sm:$0xff]
                  %482 = vst [vmem:[%s464 + $0x40] sm:$0xff] %v481
                  %v483 = vld [vmem:[%s463 + $0x90] sm:$0xff]
                  %484 = vst [vmem:[%s464 + $0x48] sm:$0xff] %v483
                  %v485 = vld [vmem:[%s463 + $0xa0] sm:$0xff]
                  %486 = vst [vmem:[%s464 + $0x50] sm:$0xff] %v485
                  %v487 = vld [vmem:[%s463 + $0xb0] sm:$0xff]
                  %488 = vst [vmem:[%s464 + $0x58] sm:$0xff] %v487
                  %v489 = vld [vmem:[%s463 + $0xc0] sm:$0xff]
                  %490 = vst [vmem:[%s464 + $0x60] sm:$0xff] %v489
                  %v491 = vld [vmem:[%s463 + $0xd0] sm:$0xff]
                  %492 = vst [vmem:[%s464 + $0x68] sm:$0xff] %v491
                  %v493 = vld [vmem:[%s463 + $0xe0] sm:$0xff]
                  %494 = vst [vmem:[%s464 + $0x70] sm:$0xff] %v493
                  %v495 = vld [vmem:[%s463 + $0xf0] sm:$0xff]
                  %496 = vst [vmem:[%s464 + $0x78] sm:$0xff] %v495
                  %v497 = vld [vmem:[%s463 + $0x100] sm:$0xff]
                  %498 = vst [vmem:[%s464 + $0x80] sm:$0xff] %v497
                  %v499 = vld [vmem:[%s463 + $0x110] sm:$0xff]
                  %500 = vst [vmem:[%s464 + $0x88] sm:$0xff] %v499
                  %v501 = vld [vmem:[%s463 + $0x120] sm:$0xff]
                  %502 = vst [vmem:[%s464 + $0x90] sm:$0xff] %v501
                  %v503 = vld [vmem:[%s463 + $0x130] sm:$0xff]
                  %504 = vst [vmem:[%s464 + $0x98] sm:$0xff] %v503
                  %v505 = vld [vmem:[%s463 + $0x140] sm:$0xff]
                  %506 = vst [vmem:[%s464 + $0xa0] sm:$0xff] %v505
                  %v507 = vld [vmem:[%s463 + $0x150] sm:$0xff]
                  %508 = vst [vmem:[%s464 + $0xa8] sm:$0xff] %v507
                  %v509 = vld [vmem:[%s463 + $0x160] sm:$0xff]
                  %510 = vst [vmem:[%s464 + $0xb0] sm:$0xff] %v509
                  %v511 = vld [vmem:[%s463 + $0x170] sm:$0xff]
                  %512 = vst [vmem:[%s464 + $0xb8] sm:$0xff] %v511
                  %v513 = vld [vmem:[%s463 + $0x180] sm:$0xff]
                  %514 = vst [vmem:[%s464 + $0xc0] sm:$0xff] %v513
                  %v515 = vld [vmem:[%s463 + $0x190] sm:$0xff]
                  %516 = vst [vmem:[%s464 + $0xc8] sm:$0xff] %v515
                  %v517 = vld [vmem:[%s463 + $0x1a0] sm:$0xff]
                  %518 = vst [vmem:[%s464 + $0xd0] sm:$0xff] %v517
                  %v519 = vld [vmem:[%s463 + $0x1b0] sm:$0xff]
                  %520 = vst [vmem:[%s464 + $0xd8] sm:$0xff] %v519
                  %v521 = vld [vmem:[%s463 + $0x1c0] sm:$0xff]
                  %522 = vst [vmem:[%s464 + $0xe0] sm:$0xff] %v521
                  %v523 = vld [vmem:[%s463 + $0x1d0] sm:$0xff]
                  %524 = vst [vmem:[%s464 + $0xe8] sm:$0xff] %v523
                  %v525 = vld [vmem:[%s463 + $0x1e0] sm:$0xff]
                  %526 = vst [vmem:[%s464 + $0xf0] sm:$0xff] %v525
                  %v527 = vld [vmem:[%s463 + $0x1f0] sm:$0xff]
                  %528 = vst [vmem:[%s464 + $0xf8] sm:$0xff] %v527
                  %v529 = vld [vmem:[%s463 + $0x200] sm:$0xff]
                  %530 = vst [vmem:[%s464 + $0x100] sm:$0xff] %v529
                  %v531 = vld [vmem:[%s463 + $0x210] sm:$0xff]
                  %532 = vst [vmem:[%s464 + $0x108] sm:$0xff] %v531
                  %v533 = vld [vmem:[%s463 + $0x220] sm:$0xff]
                  %534 = vst [vmem:[%s464 + $0x110] sm:$0xff] %v533
                  %v535 = vld [vmem:[%s463 + $0x230] sm:$0xff]
                  %536 = vst [vmem:[%s464 + $0x118] sm:$0xff] %v535
                  %v537 = vld [vmem:[%s463 + $0x240] sm:$0xff]
                  %538 = vst [vmem:[%s464 + $0x120] sm:$0xff] %v537
                  %v539 = vld [vmem:[%s463 + $0x250] sm:$0xff]
                  %540 = vst [vmem:[%s464 + $0x128] sm:$0xff] %v539
                  %v541 = vld [vmem:[%s463 + $0x260] sm:$0xff]
                  %542 = vst [vmem:[%s464 + $0x130] sm:$0xff] %v541
                  %v543 = vld [vmem:[%s463 + $0x270] sm:$0xff]
                  %544 = vst [vmem:[%s464 + $0x138] sm:$0xff] %v543
                  %v545 = vld [vmem:[%s463 + $0x280] sm:$0xff]
                  %546 = vst [vmem:[%s464 + $0x140] sm:$0xff] %v545
                  %v547 = vld [vmem:[%s463 + $0x290] sm:$0xff]
                  %548 = vst [vmem:[%s464 + $0x148] sm:$0xff] %v547
                  %v549 = vld [vmem:[%s463 + $0x2a0] sm:$0xff]
                  %550 = vst [vmem:[%s464 + $0x150] sm:$0xff] %v549
                  %v551 = vld [vmem:[%s463 + $0x2b0] sm:$0xff]
                  %552 = vst [vmem:[%s464 + $0x158] sm:$0xff] %v551
                  %v553 = vld [vmem:[%s463 + $0x2c0] sm:$0xff]
                  %554 = vst [vmem:[%s464 + $0x160] sm:$0xff] %v553
                  %v555 = vld [vmem:[%s463 + $0x2d0] sm:$0xff]
                  %556 = vst [vmem:[%s464 + $0x168] sm:$0xff] %v555
                  %v557 = vld [vmem:[%s463 + $0x2e0] sm:$0xff]
                  %558 = vst [vmem:[%s464 + $0x170] sm:$0xff] %v557
                  %v559 = vld [vmem:[%s463 + $0x2f0] sm:$0xff]
                  %560 = vst [vmem:[%s464 + $0x178] sm:$0xff] %v559
                  %v561 = vld [vmem:[%s463 + $0x300] sm:$0xff]
                  %562 = vst [vmem:[%s464 + $0x180] sm:$0xff] %v561
                  %v563 = vld [vmem:[%s463 + $0x310] sm:$0xff]
                  %564 = vst [vmem:[%s464 + $0x188] sm:$0xff] %v563
                  %v565 = vld [vmem:[%s463 + $0x320] sm:$0xff]
                  %566 = vst [vmem:[%s464 + $0x190] sm:$0xff] %v565
                  %v567 = vld [vmem:[%s463 + $0x330] sm:$0xff]
                  %568 = vst [vmem:[%s464 + $0x198] sm:$0xff] %v567
                  %v569 = vld [vmem:[%s463 + $0x340] sm:$0xff]
                  %570 = vst [vmem:[%s464 + $0x1a0] sm:$0xff] %v569
                  %v571 = vld [vmem:[%s463 + $0x350] sm:$0xff]
                  %572 = vst [vmem:[%s464 + $0x1a8] sm:$0xff] %v571
                  %v573 = vld [vmem:[%s463 + $0x360] sm:$0xff]
                  %574 = vst [vmem:[%s464 + $0x1b0] sm:$0xff] %v573
                  %v575 = vld [vmem:[%s463 + $0x370] sm:$0xff]
                  %576 = vst [vmem:[%s464 + $0x1b8] sm:$0xff] %v575
                  %v577 = vld [vmem:[%s463 + $0x380] sm:$0xff]
                  %578 = vst [vmem:[%s464 + $0x1c0] sm:$0xff] %v577
                  %v579 = vld [vmem:[%s463 + $0x390] sm:$0xff]
                  %580 = vst [vmem:[%s464 + $0x1c8] sm:$0xff] %v579
                  %v581 = vld [vmem:[%s463 + $0x3a0] sm:$0xff]
                  %582 = vst [vmem:[%s464 + $0x1d0] sm:$0xff] %v581
                  %v583 = vld [vmem:[%s463 + $0x3b0] sm:$0xff]
                  %584 = vst [vmem:[%s464 + $0x1d8] sm:$0xff] %v583
                  %v585 = vld [vmem:[%s463 + $0x3c0] sm:$0xff]
                  %586 = vst [vmem:[%s464 + $0x1e0] sm:$0xff] %v585
                  %v587 = vld [vmem:[%s463 + $0x3d0] sm:$0xff]
                  %588 = vst [vmem:[%s464 + $0x1e8] sm:$0xff] %v587
                  %v589 = vld [vmem:[%s463 + $0x3e0] sm:$0xff]
                  %590 = vst [vmem:[%s464 + $0x1f0] sm:$0xff] %v589
                  %v591 = vld [vmem:[%s463 + $0x3f0] sm:$0xff]
                  %592 = vst [vmem:[%s464 + $0x1f8] sm:$0xff] %v591
                $region84: #{resblk_forward.1} parent=78 // loop_footer
                  %s462 = sadd.s32 1, %s458
                $region85: #{resblk_forward.1} parent=78 // loop_footer_branch
                  %457 = sbr.rel target = $region81
                $region86: #{resblk_forward.1} parent=78 // loop_exit
                  _
              $region79: #{resblk_forward.1} parent=63 // pred_fallthru
                _
              // Predicated region
              $region87: #{resblk_forward.1} parent=63 // pred_check
                _
              $region88: #{resblk_forward.1} parent=63 // pred_check_branch
                %594 = sbr.rel target = $region90
              $region89: #{resblk_forward.1} parent=63 // pred_region
                _
              $region90: #{resblk_forward.1} parent=63 // pred_fallthru
                _
            $region64: #{resblk_forward.1} parent=59 // pred_fallthru
              _
            // Predicated region
            $region65: #{resblk_forward.1} parent=59 // pred_check
              _
            $region66: #{resblk_forward.1} parent=59 // pred_check_branch
              %317 = sbr.rel target = $region68
            $region67: #{resblk_forward.1} parent=59 // pred_region
              loop: start=0, step=1, limit=1
              $region69: #{resblk_forward.1} parent=67 // loop_pre_header
                _
              $region70: #{resblk_forward.1} parent=67 // loop_header
                %s320 = sphi 0, %s324
                %p321 = scmp.ge.s32.totalorder %s320, 1
                %s325 = sphi %s311, %s311
                %s326 = sphi %s309, %s309
              $region71: #{resblk_forward.1} parent=67 // loop_header_branch
                %323 = sbr.rel (%p321) target = $region75
              $region72: #{resblk_forward.1} parent=67 // loop_body
                %v327 = vld [vmem:[%s325] sm:$0xff]
                %328 = vst [vmem:[%s326] sm:$0xff] %v327
                %v329 = vld [vmem:[%s325 + $0x10] sm:$0xff]
                %330 = vst [vmem:[%s326 + $0x8] sm:$0xff] %v329
                %v331 = vld [vmem:[%s325 + $0x20] sm:$0xff]
                %332 = vst [vmem:[%s326 + $0x10] sm:$0xff] %v331
                %v333 = vld [vmem:[%s325 + $0x30] sm:$0xff]
                %334 = vst [vmem:[%s326 + $0x18] sm:$0xff] %v333
                %v335 = vld [vmem:[%s325 + $0x40] sm:$0xff]
                %336 = vst [vmem:[%s326 + $0x20] sm:$0xff] %v335
                %v337 = vld [vmem:[%s325 + $0x50] sm:$0xff]
                %338 = vst [vmem:[%s326 + $0x28] sm:$0xff] %v337
                %v339 = vld [vmem:[%s325 + $0x60] sm:$0xff]
                %340 = vst [vmem:[%s326 + $0x30] sm:$0xff] %v339
                %v341 = vld [vmem:[%s325 + $0x70] sm:$0xff]
                %342 = vst [vmem:[%s326 + $0x38] sm:$0xff] %v341
                %v343 = vld [vmem:[%s325 + $0x80] sm:$0xff]
                %344 = vst [vmem:[%s326 + $0x40] sm:$0xff] %v343
                %v345 = vld [vmem:[%s325 + $0x90] sm:$0xff]
                %346 = vst [vmem:[%s326 + $0x48] sm:$0xff] %v345
                %v347 = vld [vmem:[%s325 + $0xa0] sm:$0xff]
                %348 = vst [vmem:[%s326 + $0x50] sm:$0xff] %v347
                %v349 = vld [vmem:[%s325 + $0xb0] sm:$0xff]
                %350 = vst [vmem:[%s326 + $0x58] sm:$0xff] %v349
                %v351 = vld [vmem:[%s325 + $0xc0] sm:$0xff]
                %352 = vst [vmem:[%s326 + $0x60] sm:$0xff] %v351
                %v353 = vld [vmem:[%s325 + $0xd0] sm:$0xff]
                %354 = vst [vmem:[%s326 + $0x68] sm:$0xff] %v353
                %v355 = vld [vmem:[%s325 + $0xe0] sm:$0xff]
                %356 = vst [vmem:[%s326 + $0x70] sm:$0xff] %v355
                %v357 = vld [vmem:[%s325 + $0xf0] sm:$0xff]
                %358 = vst [vmem:[%s326 + $0x78] sm:$0xff] %v357
                %v359 = vld [vmem:[%s325 + $0x100] sm:$0xff]
                %360 = vst [vmem:[%s326 + $0x80] sm:$0xff] %v359
                %v361 = vld [vmem:[%s325 + $0x110] sm:$0xff]
                %362 = vst [vmem:[%s326 + $0x88] sm:$0xff] %v361
                %v363 = vld [vmem:[%s325 + $0x120] sm:$0xff]
                %364 = vst [vmem:[%s326 + $0x90] sm:$0xff] %v363
                %v365 = vld [vmem:[%s325 + $0x130] sm:$0xff]
                %366 = vst [vmem:[%s326 + $0x98] sm:$0xff] %v365
                %v367 = vld [vmem:[%s325 + $0x140] sm:$0xff]
                %368 = vst [vmem:[%s326 + $0xa0] sm:$0xff] %v367
                %v369 = vld [vmem:[%s325 + $0x150] sm:$0xff]
                %370 = vst [vmem:[%s326 + $0xa8] sm:$0xff] %v369
                %v371 = vld [vmem:[%s325 + $0x160] sm:$0xff]
                %372 = vst [vmem:[%s326 + $0xb0] sm:$0xff] %v371
                %v373 = vld [vmem:[%s325 + $0x170] sm:$0xff]
                %374 = vst [vmem:[%s326 + $0xb8] sm:$0xff] %v373
                %v375 = vld [vmem:[%s325 + $0x180] sm:$0xff]
                %376 = vst [vmem:[%s326 + $0xc0] sm:$0xff] %v375
                %v377 = vld [vmem:[%s325 + $0x190] sm:$0xff]
                %378 = vst [vmem:[%s326 + $0xc8] sm:$0xff] %v377
                %v379 = vld [vmem:[%s325 + $0x1a0] sm:$0xff]
                %380 = vst [vmem:[%s326 + $0xd0] sm:$0xff] %v379
                %v381 = vld [vmem:[%s325 + $0x1b0] sm:$0xff]
                %382 = vst [vmem:[%s326 + $0xd8] sm:$0xff] %v381
                %v383 = vld [vmem:[%s325 + $0x1c0] sm:$0xff]
                %384 = vst [vmem:[%s326 + $0xe0] sm:$0xff] %v383
                %v385 = vld [vmem:[%s325 + $0x1d0] sm:$0xff]
                %386 = vst [vmem:[%s326 + $0xe8] sm:$0xff] %v385
                %v387 = vld [vmem:[%s325 + $0x1e0] sm:$0xff]
                %388 = vst [vmem:[%s326 + $0xf0] sm:$0xff] %v387
                %v389 = vld [vmem:[%s325 + $0x1f0] sm:$0xff]
                %390 = vst [vmem:[%s326 + $0xf8] sm:$0xff] %v389
                %v391 = vld [vmem:[%s325 + $0x200] sm:$0xff]
                %392 = vst [vmem:[%s326 + $0x100] sm:$0xff] %v391
                %v393 = vld [vmem:[%s325 + $0x210] sm:$0xff]
                %394 = vst [vmem:[%s326 + $0x108] sm:$0xff] %v393
                %v395 = vld [vmem:[%s325 + $0x220] sm:$0xff]
                %396 = vst [vmem:[%s326 + $0x110] sm:$0xff] %v395
                %v397 = vld [vmem:[%s325 + $0x230] sm:$0xff]
                %398 = vst [vmem:[%s326 + $0x118] sm:$0xff] %v397
                %v399 = vld [vmem:[%s325 + $0x240] sm:$0xff]
                %400 = vst [vmem:[%s326 + $0x120] sm:$0xff] %v399
                %v401 = vld [vmem:[%s325 + $0x250] sm:$0xff]
                %402 = vst [vmem:[%s326 + $0x128] sm:$0xff] %v401
                %v403 = vld [vmem:[%s325 + $0x260] sm:$0xff]
                %404 = vst [vmem:[%s326 + $0x130] sm:$0xff] %v403
                %v405 = vld [vmem:[%s325 + $0x270] sm:$0xff]
                %406 = vst [vmem:[%s326 + $0x138] sm:$0xff] %v405
                %v407 = vld [vmem:[%s325 + $0x280] sm:$0xff]
                %408 = vst [vmem:[%s326 + $0x140] sm:$0xff] %v407
                %v409 = vld [vmem:[%s325 + $0x290] sm:$0xff]
                %410 = vst [vmem:[%s326 + $0x148] sm:$0xff] %v409
                %v411 = vld [vmem:[%s325 + $0x2a0] sm:$0xff]
                %412 = vst [vmem:[%s326 + $0x150] sm:$0xff] %v411
                %v413 = vld [vmem:[%s325 + $0x2b0] sm:$0xff]
                %414 = vst [vmem:[%s326 + $0x158] sm:$0xff] %v413
                %v415 = vld [vmem:[%s325 + $0x2c0] sm:$0xff]
                %416 = vst [vmem:[%s326 + $0x160] sm:$0xff] %v415
                %v417 = vld [vmem:[%s325 + $0x2d0] sm:$0xff]
                %418 = vst [vmem:[%s326 + $0x168] sm:$0xff] %v417
                %v419 = vld [vmem:[%s325 + $0x2e0] sm:$0xff]
                %420 = vst [vmem:[%s326 + $0x170] sm:$0xff] %v419
                %v421 = vld [vmem:[%s325 + $0x2f0] sm:$0xff]
                %422 = vst [vmem:[%s326 + $0x178] sm:$0xff] %v421
                %v423 = vld [vmem:[%s325 + $0x300] sm:$0xff]
                %424 = vst [vmem:[%s326 + $0x180] sm:$0xff] %v423
                %v425 = vld [vmem:[%s325 + $0x310] sm:$0xff]
                %426 = vst [vmem:[%s326 + $0x188] sm:$0xff] %v425
                %v427 = vld [vmem:[%s325 + $0x320] sm:$0xff]
                %428 = vst [vmem:[%s326 + $0x190] sm:$0xff] %v427
                %v429 = vld [vmem:[%s325 + $0x330] sm:$0xff]
                %430 = vst [vmem:[%s326 + $0x198] sm:$0xff] %v429
                %v431 = vld [vmem:[%s325 + $0x340] sm:$0xff]
                %432 = vst [vmem:[%s326 + $0x1a0] sm:$0xff] %v431
                %v433 = vld [vmem:[%s325 + $0x350] sm:$0xff]
                %434 = vst [vmem:[%s326 + $0x1a8] sm:$0xff] %v433
                %v435 = vld [vmem:[%s325 + $0x360] sm:$0xff]
                %436 = vst [vmem:[%s326 + $0x1b0] sm:$0xff] %v435
                %v437 = vld [vmem:[%s325 + $0x370] sm:$0xff]
                %438 = vst [vmem:[%s326 + $0x1b8] sm:$0xff] %v437
                %v439 = vld [vmem:[%s325 + $0x380] sm:$0xff]
                %440 = vst [vmem:[%s326 + $0x1c0] sm:$0xff] %v439
                %v441 = vld [vmem:[%s325 + $0x390] sm:$0xff]
                %442 = vst [vmem:[%s326 + $0x1c8] sm:$0xff] %v441
                %v443 = vld [vmem:[%s325 + $0x3a0] sm:$0xff]
                %444 = vst [vmem:[%s326 + $0x1d0] sm:$0xff] %v443
                %v445 = vld [vmem:[%s325 + $0x3b0] sm:$0xff]
                %446 = vst [vmem:[%s326 + $0x1d8] sm:$0xff] %v445
                %v447 = vld [vmem:[%s325 + $0x3c0] sm:$0xff]
                %448 = vst [vmem:[%s326 + $0x1e0] sm:$0xff] %v447
                %v449 = vld [vmem:[%s325 + $0x3d0] sm:$0xff]
                %450 = vst [vmem:[%s326 + $0x1e8] sm:$0xff] %v449
                %v451 = vld [vmem:[%s325 + $0x3e0] sm:$0xff]
                %452 = vst [vmem:[%s326 + $0x1f0] sm:$0xff] %v451
                %v453 = vld [vmem:[%s325 + $0x3f0] sm:$0xff]
                %454 = vst [vmem:[%s326 + $0x1f8] sm:$0xff] %v453
              $region73: #{resblk_forward.1} parent=67 // loop_footer
                %s324 = sadd.s32 1, %s320
              $region74: #{resblk_forward.1} parent=67 // loop_footer_branch
                %319 = sbr.rel target = $region70
              $region75: #{resblk_forward.1} parent=67 // loop_exit
                _
            $region68: #{resblk_forward.1} parent=59 // pred_fallthru
              _
          $region60: #{resblk_forward.1} parent=55 // pred_fallthru
            _
          %595 = vnop
        $region56: #{resblk_forward.1} parent=51 // pred_fallthru
          _
      $region52: #{resblk_forward.1} parent=5 // pred_fallthru
        _
      %p596 = scmp.le.s32.totalorder 1, %s16
      %p597 = scmp.lt.s32.totalorder %s16, 3
      %p598 = pnand %p596, %p597
      %p599 = pneg %p598
      // Predicated region
      $region91: #{resblk_forward.1} parent=5 // pred_check
        _
      $region92: #{resblk_forward.1} parent=5 // pred_check_branch
        %601 = sbr.rel (%p598) target = $region94
      $region93: #{resblk_forward.1} parent=5 // pred_region
        %s602 = ssub.s32 %s16, 1
        %s603 = sand.u32 %s29, 1
        %s604 = sand.u32 %s29, 1
        %s605 = smul.addr %s604, 512
        %s606 = scalar_lea.vmem [#allocation2], %s605
        // Predicated region
        $region95: #{resblk_forward.1} parent=93 // pred_check
          %p607 = pneg %p42
        $region96: #{resblk_forward.1} parent=93 // pred_check_branch
          %609 = sbr.rel (%p607) target = $region98
        $region97: #{resblk_forward.1} parent=93 // pred_region
          _
        $region98: #{resblk_forward.1} parent=93 // pred_fallthru
          _
        %s610 = sand.u32 %s29, 1
        %s611 = sand.u32 %s29, 1
        %s612 = smul.addr %s611, 512
        %s613 = scalar_lea.vmem [#allocation2], %s612
        %p614 = pneg %p42
        %p615 = pneg %p39
        %p616 = pneg %p63
        %p617 = pneg %p60
        %p618 = pneg %p84
        %p619 = pneg %p81
        %p620 = pneg %p105
        %p621 = pneg %p102
        %p622 = pneg %p126
        %p623 = pneg %p123
        %p624 = pneg %p147
        %p625 = pneg %p144
        %p626 = pneg %p168
        %p627 = pneg %p165
        %p628 = pneg %p189
        %p629 = pneg %p186
        %p630 = pneg %p210
        %p631 = pneg %p207
        %p632 = pneg %p231
        %p633 = pneg %p228
        %p634 = pneg %p257
        %p635 = pneg %p254
        %s636 = sand.u32 %s244, 1
        %s637 = sand.u32 %s244, 1
        %s638 = smul.addr %s637, 256
        %s639 = scalar_lea.vmem [#allocation3], %s638
        %v641 = vld [vmem:[%s606] sm:$0xff]
        %v642 = vld [vmem:[%s606 + $0x8] sm:$0xff]
        %v643 = vld [vmem:[%s606 + $0x10] sm:$0xff]
        %v644 = vld [vmem:[%s606 + $0x18] sm:$0xff]
        %v645 = vld [vmem:[%s606 + $0x20] sm:$0xff]
        %v646 = vld [vmem:[%s606 + $0x28] sm:$0xff]
        %v647 = vld [vmem:[%s606 + $0x30] sm:$0xff]
        %v648 = vld [vmem:[%s606 + $0x38] sm:$0xff]
        %v649 = vld [vmem:[%s606 + $0x40] sm:$0xff]
        %v650 = vld [vmem:[%s606 + $0x48] sm:$0xff]
        %v651 = vld [vmem:[%s606 + $0x50] sm:$0xff]
        %v652 = vld [vmem:[%s606 + $0x58] sm:$0xff]
        %v653 = vld [vmem:[%s606 + $0x60] sm:$0xff]
        %v654 = vld [vmem:[%s606 + $0x68] sm:$0xff]
        %v655 = vld [vmem:[%s606 + $0x70] sm:$0xff]
        %v656 = vld [vmem:[%s606 + $0x78] sm:$0xff]
        %v657 = vld [vmem:[%s606 + $0x80] sm:$0xff]
        %v658 = vld [vmem:[%s606 + $0x88] sm:$0xff]
        %v659 = vld [vmem:[%s606 + $0x90] sm:$0xff]
        %v660 = vld [vmem:[%s606 + $0x98] sm:$0xff]
        %v661 = vld [vmem:[%s606 + $0xa0] sm:$0xff]
        %v662 = vld [vmem:[%s606 + $0xa8] sm:$0xff]
        %v663 = vld [vmem:[%s606 + $0xb0] sm:$0xff]
        %v664 = vld [vmem:[%s606 + $0xb8] sm:$0xff]
        %v665 = vld [vmem:[%s606 + $0xc0] sm:$0xff]
        %v666 = vld [vmem:[%s606 + $0xc8] sm:$0xff]
        %v667 = vld [vmem:[%s606 + $0xd0] sm:$0xff]
        %v668 = vld [vmem:[%s606 + $0xd8] sm:$0xff]
        %v669 = vld [vmem:[%s606 + $0xe0] sm:$0xff]
        %v670 = vld [vmem:[%s606 + $0xe8] sm:$0xff]
        %v671 = vld [vmem:[%s606 + $0xf0] sm:$0xff]
        %v672 = vld [vmem:[%s606 + $0xf8] sm:$0xff]
        %v673 = vld [vmem:[%s606 + $0x100] sm:$0xff]
        %v674 = vld [vmem:[%s606 + $0x108] sm:$0xff]
        %v675 = vld [vmem:[%s606 + $0x110] sm:$0xff]
        %v676 = vld [vmem:[%s606 + $0x118] sm:$0xff]
        %v677 = vld [vmem:[%s606 + $0x120] sm:$0xff]
        %v678 = vld [vmem:[%s606 + $0x128] sm:$0xff]
        %v679 = vld [vmem:[%s606 + $0x130] sm:$0xff]
        %v680 = vld [vmem:[%s606 + $0x138] sm:$0xff]
        %v681 = vld [vmem:[%s606 + $0x140] sm:$0xff]
        %v682 = vld [vmem:[%s606 + $0x148] sm:$0xff]
        %v683 = vld [vmem:[%s606 + $0x150] sm:$0xff]
        %v684 = vld [vmem:[%s606 + $0x158] sm:$0xff]
        %v685 = vld [vmem:[%s606 + $0x160] sm:$0xff]
        %v686 = vld [vmem:[%s606 + $0x168] sm:$0xff]
        %v687 = vld [vmem:[%s606 + $0x170] sm:$0xff]
        %v688 = vld [vmem:[%s606 + $0x178] sm:$0xff]
        %v689 = vld [vmem:[%s606 + $0x180] sm:$0xff]
        %v690 = vld [vmem:[%s606 + $0x188] sm:$0xff]
        %v691 = vld [vmem:[%s606 + $0x190] sm:$0xff]
        %v692 = vld [vmem:[%s606 + $0x198] sm:$0xff]
        %v693 = vld [vmem:[%s606 + $0x1a0] sm:$0xff]
        %v694 = vld [vmem:[%s606 + $0x1a8] sm:$0xff]
        %v695 = vld [vmem:[%s606 + $0x1b0] sm:$0xff]
        %v696 = vld [vmem:[%s606 + $0x1b8] sm:$0xff]
        %v697 = vld [vmem:[%s606 + $0x1c0] sm:$0xff]
        %v698 = vld [vmem:[%s606 + $0x1c8] sm:$0xff]
        %v699 = vld [vmem:[%s606 + $0x1d0] sm:$0xff]
        %v700 = vld [vmem:[%s606 + $0x1d8] sm:$0xff]
        %v701 = vld [vmem:[%s606 + $0x1e0] sm:$0xff]
        %v702 = vld [vmem:[%s606 + $0x1e8] sm:$0xff]
        %v703 = vld [vmem:[%s606 + $0x1f0] sm:$0xff]
        %v704 = vld [vmem:[%s606 + $0x1f8] sm:$0xff]
        %v705 = vadd.f32 %v641, %v649
        %v706 = vadd.f32 %v642, %v650
        %v707 = vadd.f32 %v643, %v651
        %v708 = vadd.f32 %v644, %v652
        %v709 = vadd.f32 %v645, %v653
        %v710 = vadd.f32 %v646, %v654
        %v711 = vadd.f32 %v647, %v655
        %v712 = vadd.f32 %v648, %v656
        %v713 = vadd.f32 %v657, %v665
        %v714 = vadd.f32 %v658, %v666
        %v715 = vadd.f32 %v659, %v667
        %v716 = vadd.f32 %v660, %v668
        %v717 = vadd.f32 %v661, %v669
        %v718 = vadd.f32 %v662, %v670
        %v719 = vadd.f32 %v663, %v671
        %v720 = vadd.f32 %v664, %v672
        %v721 = vadd.f32 %v673, %v681
        %v722 = vadd.f32 %v674, %v682
        %v723 = vadd.f32 %v675, %v683
        %v724 = vadd.f32 %v676, %v684
        %v725 = vadd.f32 %v677, %v685
        %v726 = vadd.f32 %v678, %v686
        %v727 = vadd.f32 %v679, %v687
        %v728 = vadd.f32 %v680, %v688
        %v729 = vadd.f32 %v689, %v697
        %v730 = vadd.f32 %v690, %v698
        %v731 = vadd.f32 %v691, %v699
        %v732 = vadd.f32 %v692, %v700
        %v733 = vadd.f32 %v693, %v701
        %v734 = vadd.f32 %v694, %v702
        %v735 = vadd.f32 %v695, %v703
        %v736 = vadd.f32 %v696, %v704
        %v737 = vmul.f32 %v705, 0.5
        %v738 = vmul.f32 %v706, 0.5
        %v739 = vmul.f32 %v707, 0.5
        %v740 = vmul.f32 %v708, 0.5
        %v741 = vmul.f32 %v709, 0.5
        %v742 = vmul.f32 %v710, 0.5
        %v743 = vmul.f32 %v711, 0.5
        %v744 = vmul.f32 %v712, 0.5
        %v745 = vmul.f32 %v713, 0.5
        %v746 = vmul.f32 %v714, 0.5
        %v747 = vmul.f32 %v715, 0.5
        %v748 = vmul.f32 %v716, 0.5
        %v749 = vmul.f32 %v717, 0.5
        %v750 = vmul.f32 %v718, 0.5
        %v751 = vmul.f32 %v719, 0.5
        %v752 = vmul.f32 %v720, 0.5
        %v753 = vmul.f32 %v721, 0.5
        %v754 = vmul.f32 %v722, 0.5
        %v755 = vmul.f32 %v723, 0.5
        %v756 = vmul.f32 %v724, 0.5
        %v757 = vmul.f32 %v725, 0.5
        %v758 = vmul.f32 %v726, 0.5
        %v759 = vmul.f32 %v727, 0.5
        %v760 = vmul.f32 %v728, 0.5
        %v761 = vmul.f32 %v729, 0.5
        %v762 = vmul.f32 %v730, 0.5
        %v763 = vmul.f32 %v731, 0.5
        %v764 = vmul.f32 %v732, 0.5
        %v765 = vmul.f32 %v733, 0.5
        %v766 = vmul.f32 %v734, 0.5
        %v767 = vmul.f32 %v735, 0.5
        %v768 = vmul.f32 %v736, 0.5
        %v769 = vadd.f32 %v737, %v738
        %v770 = vadd.f32 %v739, %v740
        %v771 = vadd.f32 %v741, %v742
        %v772 = vadd.f32 %v743, %v744
        %v773 = vadd.f32 %v745, %v746
        %v774 = vadd.f32 %v747, %v748
        %v775 = vadd.f32 %v749, %v750
        %v776 = vadd.f32 %v751, %v752
        %v777 = vadd.f32 %v753, %v754
        %v778 = vadd.f32 %v755, %v756
        %v779 = vadd.f32 %v757, %v758
        %v780 = vadd.f32 %v759, %v760
        %v781 = vadd.f32 %v761, %v762
        %v782 = vadd.f32 %v763, %v764
        %v783 = vadd.f32 %v765, %v766
        %v784 = vadd.f32 %v767, %v768
        %v785 = vmul.f32 %v769, 0.5
        %v786 = vmul.f32 %v770, 0.5
        %v787 = vmul.f32 %v771, 0.5
        %v788 = vmul.f32 %v772, 0.5
        %v789 = vmul.f32 %v773, 0.5
        %v790 = vmul.f32 %v774, 0.5
        %v791 = vmul.f32 %v775, 0.5
        %v792 = vmul.f32 %v776, 0.5
        %v793 = vmul.f32 %v777, 0.5
        %v794 = vmul.f32 %v778, 0.5
        %v795 = vmul.f32 %v779, 0.5
        %v796 = vmul.f32 %v780, 0.5
        %v797 = vmul.f32 %v781, 0.5
        %v798 = vmul.f32 %v782, 0.5
        %v799 = vmul.f32 %v783, 0.5
        %v800 = vmul.f32 %v784, 0.5
        %v801 = vpack.c.bf16 %v786, %v785
        %v802 = vpack.c.bf16 %v788, %v787
        %v803 = vpack.c.bf16 %v790, %v789
        %v804 = vpack.c.bf16 %v792, %v791
        %v805 = vpack.c.bf16 %v794, %v793
        %v806 = vpack.c.bf16 %v796, %v795
        %v807 = vpack.c.bf16 %v798, %v797
        %v808 = vpack.c.bf16 %v800, %v799
        %v809 = vld [vmem:[%s5] sm:$0xff]
        %v810 = vld [vmem:[%s5 + $0x8] sm:$0xff]
        %v811 = vld [vmem:[%s5 + $0x10] sm:$0xff]
        %v812 = vld [vmem:[%s5 + $0x18] sm:$0xff]
        %v813 = vld [vmem:[%s5 + $0x20] sm:$0xff]
        %v814 = vld [vmem:[%s5 + $0x28] sm:$0xff]
        %v815 = vld [vmem:[%s5 + $0x30] sm:$0xff]
        %v816 = vld [vmem:[%s5 + $0x38] sm:$0xff]
        %v817 = vld [vmem:[%s5 + $0x40] sm:$0xff]
        %v818 = vld [vmem:[%s5 + $0x48] sm:$0xff]
        %v819 = vld [vmem:[%s5 + $0x50] sm:$0xff]
        %v820 = vld [vmem:[%s5 + $0x58] sm:$0xff]
        %v821 = vld [vmem:[%s5 + $0x60] sm:$0xff]
        %v822 = vld [vmem:[%s5 + $0x68] sm:$0xff]
        %v823 = vld [vmem:[%s5 + $0x70] sm:$0xff]
        %v824 = vld [vmem:[%s5 + $0x78] sm:$0xff]
        %v841 = vunpack.c.l.b16 %v809
        %v842 = vunpack.c.h.b16 %v809
        %v843 = vunpack.c.l.b16 %v810
        %v844 = vunpack.c.h.b16 %v810
        %v845 = vunpack.c.l.b16 %v811
        %v846 = vunpack.c.h.b16 %v811
        %v847 = vunpack.c.l.b16 %v812
        %v848 = vunpack.c.h.b16 %v812
        %v849 = vunpack.c.l.b16 %v813
        %v850 = vunpack.c.h.b16 %v813
        %v851 = vunpack.c.l.b16 %v814
        %v852 = vunpack.c.h.b16 %v814
        %v853 = vunpack.c.l.b16 %v815
        %v854 = vunpack.c.h.b16 %v815
        %v855 = vunpack.c.l.b16 %v816
        %v856 = vunpack.c.h.b16 %v816
        %v857 = vunpack.c.l.b16 %v817
        %v858 = vunpack.c.h.b16 %v817
        %v859 = vunpack.c.l.b16 %v818
        %v860 = vunpack.c.h.b16 %v818
        %v861 = vunpack.c.l.b16 %v819
        %v862 = vunpack.c.h.b16 %v819
        %v863 = vunpack.c.l.b16 %v820
        %v864 = vunpack.c.h.b16 %v820
        %v865 = vunpack.c.l.b16 %v821
        %v866 = vunpack.c.h.b16 %v821
        %v867 = vunpack.c.l.b16 %v822
        %v868 = vunpack.c.h.b16 %v822
        %v869 = vunpack.c.l.b16 %v823
        %v870 = vunpack.c.h.b16 %v823
        %v871 = vunpack.c.l.b16 %v824
        %v872 = vunpack.c.h.b16 %v824
        %v873 = vpack.c.b16 %v843, %v841
        %v874 = vpack.c.b16 %v844, %v842
        %v875 = vpack.c.b16 %v847, %v845
        %v876 = vpack.c.b16 %v848, %v846
        %v877 = vpack.c.b16 %v851, %v849
        %v878 = vpack.c.b16 %v852, %v850
        %v879 = vpack.c.b16 %v855, %v853
        %v880 = vpack.c.b16 %v856, %v854
        %v881 = vpack.c.b16 %v859, %v857
        %v882 = vpack.c.b16 %v860, %v858
        %v883 = vpack.c.b16 %v863, %v861
        %v884 = vpack.c.b16 %v864, %v862
        %v885 = vpack.c.b16 %v867, %v865
        %v886 = vpack.c.b16 %v868, %v866
        %v887 = vpack.c.b16 %v871, %v869
        %v888 = vpack.c.b16 %v872, %v870
        %905 = vmatprep.subr.bf16.mxu0 %v874
        %906 = vmatpush1.bf16.msra.mxu0 %v873
        %907 = vmatprep.subr.bf16.mxu0 %v876
        %908 = vmatpush1.bf16.msra.mxu0 %v875
        %909 = vmatprep.subr.bf16.mxu0 %v878
        %910 = vmatpush1.bf16.msra.mxu0 %v877
        %911 = vmatprep.subr.bf16.mxu0 %v880
        %912 = vmatpush1.bf16.msra.mxu0 %v879
        %913 = vmatprep.subr.bf16.mxu0 %v882
        %914 = vmatpush1.bf16.msra.mxu0 %v881
        %915 = vmatprep.subr.bf16.mxu0 %v884
        %916 = vmatpush1.bf16.msra.mxu0 %v883
        %917 = vmatprep.subr.bf16.mxu0 %v886
        %918 = vmatpush1.bf16.msra.mxu0 %v885
        %919 = vmatprep.subr.bf16.mxu0 %v888
        %920 = vmatpush1.bf16.msra.mxu0 %v887
        %921 = vmatprep.subr.bf16.mxu0 0
        %922 = vmatpush1.bf16.msra.mxu0 0
        %923 = vmatprep.subr.bf16.mxu0 0
        %924 = vmatpush1.bf16.msra.mxu0 0
        %925 = vmatprep.subr.bf16.mxu0 0
        %926 = vmatpush1.bf16.msra.mxu0 0
        %927 = vmatprep.subr.bf16.mxu0 0
        %928 = vmatpush1.bf16.msra.mxu0 0
        %929 = vmatprep.subr.bf16.mxu0 0
        %930 = vmatpush1.bf16.msra.mxu0 0
        %931 = vmatprep.subr.bf16.mxu0 0
        %932 = vmatpush1.bf16.msra.mxu0 0
        %933 = vmatprep.subr.bf16.mxu0 0
        %934 = vmatpush1.bf16.msra.mxu0 0
        %935 = vmatprep.subr.bf16.mxu0 0
        %936 = vmatpush1.bf16.msra.mxu0 0
        %937 = vmatprep.mubr.bf16.mxu0 0
        %938 = vmatmul.mubr.bf16.gmra.mrb[0].mxu0 %v801
        %v939 = vpop.f32.mrb[0].mxu0
        %v940 = vadd.f32 0.0, %v939
        %v941 = vpop.f32.mrb[0].mxu0
        %v942 = vadd.f32 0.0, %v941
        %v943 = vpop.f32.mrb[0].mxu0
        %v944 = vadd.f32 0.0, %v943
        %v945 = vpop.f32.mrb[0].mxu0
        %v946 = vadd.f32 0.0, %v945
        %947 = vmatprep.mubr.bf16.mxu0 0
        %948 = vmatmul.mubr.bf16.gmra.mrb[0].mxu0 %v802
        %v949 = vpop.f32.mrb[0].mxu0
        %v950 = vadd.f32 0.0, %v949
        %v951 = vpop.f32.mrb[0].mxu0
        %v952 = vadd.f32 0.0, %v951
        %v953 = vpop.f32.mrb[0].mxu0
        %v954 = vadd.f32 0.0, %v953
        %v955 = vpop.f32.mrb[0].mxu0
        %v956 = vadd.f32 0.0, %v955
        %957 = vmatprep.mubr.bf16.mxu0 0
        %958 = vmatmul.mubr.bf16.gmra.mrb[0].mxu0 %v803
        %v959 = vpop.f32.mrb[0].mxu0
        %v960 = vadd.f32 0.0, %v959
        %v961 = vpop.f32.mrb[0].mxu0
        %v962 = vadd.f32 0.0, %v961
        %v963 = vpop.f32.mrb[0].mxu0
        %v964 = vadd.f32 0.0, %v963
        %v965 = vpop.f32.mrb[0].mxu0
        %v966 = vadd.f32 0.0, %v965
        %967 = vmatprep.mubr.bf16.mxu0 0
        %968 = vmatmul.mubr.bf16.gmra.mrb[0].mxu0 %v804
        %v969 = vpop.f32.mrb[0].mxu0
        %v970 = vadd.f32 0.0, %v969
        %v971 = vpop.f32.mrb[0].mxu0
        %v972 = vadd.f32 0.0, %v971
        %v973 = vpop.f32.mrb[0].mxu0
        %v974 = vadd.f32 0.0, %v973
        %v975 = vpop.f32.mrb[0].mxu0
        %v976 = vadd.f32 0.0, %v975
        %977 = vmatprep.mubr.bf16.mxu0 0
        %978 = vmatmul.mubr.bf16.gmra.mrb[0].mxu0 %v805
        %v979 = vpop.f32.mrb[0].mxu0
        %v980 = vadd.f32 0.0, %v979
        %v981 = vpop.f32.mrb[0].mxu0
        %v982 = vadd.f32 0.0, %v981
        %v983 = vpop.f32.mrb[0].mxu0
        %v984 = vadd.f32 0.0, %v983
        %v985 = vpop.f32.mrb[0].mxu0
        %v986 = vadd.f32 0.0, %v985
        %987 = vmatprep.mubr.bf16.mxu0 0
        %988 = vmatmul.mubr.bf16.gmra.mrb[0].mxu0 %v806
        %v989 = vpop.f32.mrb[0].mxu0
        %v990 = vadd.f32 0.0, %v989
        %v991 = vpop.f32.mrb[0].mxu0
        %v992 = vadd.f32 0.0, %v991
        %v993 = vpop.f32.mrb[0].mxu0
        %v994 = vadd.f32 0.0, %v993
        %v995 = vpop.f32.mrb[0].mxu0
        %v996 = vadd.f32 0.0, %v995
        %997 = vmatprep.mubr.bf16.mxu0 0
        %998 = vmatmul.mubr.bf16.gmra.mrb[0].mxu0 %v807
        %v999 = vpop.f32.mrb[0].mxu0
        %v1000 = vadd.f32 0.0, %v999
        %v1001 = vpop.f32.mrb[0].mxu0
        %v1002 = vadd.f32 0.0, %v1001
        %v1003 = vpop.f32.mrb[0].mxu0
        %v1004 = vadd.f32 0.0, %v1003
        %v1005 = vpop.f32.mrb[0].mxu0
        %v1006 = vadd.f32 0.0, %v1005
        %1007 = vmatprep.mubr.bf16.mxu0 0
        %1008 = vmatmul.mubr.bf16.gmra.mrb[0].mxu0 %v808
        %v1009 = vpop.f32.mrb[0].mxu0
        %v1010 = vadd.f32 0.0, %v1009
        %v1011 = vpop.f32.mrb[0].mxu0
        %v1012 = vadd.f32 0.0, %v1011
        %v1013 = vpop.f32.mrb[0].mxu0
        %v1014 = vadd.f32 0.0, %v1013
        %v1015 = vpop.f32.mrb[0].mxu0
        %v1016 = vadd.f32 0.0, %v1015
        %1017 = vdwg.mxu0
        %v1018 = vld [vmem:[%s6] sm:$0x1]
        %v1019 = vld [vmem:[%s7] sm:$0x1]
        %v1020 = vadd.f32 %v641, %v642
        %v1021 = vadd.f32 %v1020, %v643
        %v1022 = vadd.f32 %v1021, %v644
        %v1023 = vadd.f32 %v1022, %v645
        %v1024 = vadd.f32 %v1023, %v646
        %v1025 = vadd.f32 %v1024, %v647
        %v1026 = vadd.f32 %v1025, %v648
        %v1027 = vadd.f32 %v1026, %v649
        %v1028 = vadd.f32 %v1027, %v650
        %v1029 = vadd.f32 %v1028, %v651
        %v1030 = vadd.f32 %v1029, %v652
        %v1031 = vadd.f32 %v1030, %v653
        %v1032 = vadd.f32 %v1031, %v654
        %v1033 = vadd.f32 %v1032, %v655
        %v1034 = vadd.f32 %v1033, %v656
        %v1035 = vadd.f32 %v1034, %v657
        %v1036 = vadd.f32 %v1035, %v658
        %v1037 = vadd.f32 %v1036, %v659
        %v1038 = vadd.f32 %v1037, %v660
        %v1039 = vadd.f32 %v1038, %v661
        %v1040 = vadd.f32 %v1039, %v662
        %v1041 = vadd.f32 %v1040, %v663
        %v1042 = vadd.f32 %v1041, %v664
        %v1043 = vadd.f32 %v1042, %v665
        %v1044 = vadd.f32 %v1043, %v666
        %v1045 = vadd.f32 %v1044, %v667
        %v1046 = vadd.f32 %v1045, %v668
        %v1047 = vadd.f32 %v1046, %v669
        %v1048 = vadd.f32 %v1047, %v670
        %v1049 = vadd.f32 %v1048, %v671
        %v1050 = vadd.f32 %v1049, %v672
        %v1051 = vadd.f32 %v1050, %v673
        %v1052 = vadd.f32 %v1051, %v674
        %v1053 = vadd.f32 %v1052, %v675
        %v1054 = vadd.f32 %v1053, %v676
        %v1055 = vadd.f32 %v1054, %v677
        %v1056 = vadd.f32 %v1055, %v678
        %v1057 = vadd.f32 %v1056, %v679
        %v1058 = vadd.f32 %v1057, %v680
        %v1059 = vadd.f32 %v1058, %v681
        %v1060 = vadd.f32 %v1059, %v682
        %v1061 = vadd.f32 %v1060, %v683
        %v1062 = vadd.f32 %v1061, %v684
        %v1063 = vadd.f32 %v1062, %v685
        %v1064 = vadd.f32 %v1063, %v686
        %v1065 = vadd.f32 %v1064, %v687
        %v1066 = vadd.f32 %v1065, %v688
        %v1067 = vadd.f32 %v1066, %v689
        %v1068 = vadd.f32 %v1067, %v690
        %v1069 = vadd.f32 %v1068, %v691
        %v1070 = vadd.f32 %v1069, %v692
        %v1071 = vadd.f32 %v1070, %v693
        %v1072 = vadd.f32 %v1071, %v694
        %v1073 = vadd.f32 %v1072, %v695
        %v1074 = vadd.f32 %v1073, %v696
        %v1075 = vadd.f32 %v1074, %v697
        %v1076 = vadd.f32 %v1075, %v698
        %v1077 = vadd.f32 %v1076, %v699
        %v1078 = vadd.f32 %v1077, %v700
        %v1079 = vadd.f32 %v1078, %v701
        %v1080 = vadd.f32 %v1079, %v702
        %v1081 = vadd.f32 %v1080, %v703
        %v1082 = vadd.f32 %v1081, %v704
        %v1083 = vrcp.pop 64.0
        %v1084 = vmul.f32 %v1082, %v1083
        %v1085 = vmul.f32 %v641, %v641
        %v1086 = vmul.f32 %v642, %v642
        %v1087 = vmul.f32 %v643, %v643
        %v1088 = vmul.f32 %v644, %v644
        %v1089 = vmul.f32 %v645, %v645
        %v1090 = vmul.f32 %v646, %v646
        %v1091 = vmul.f32 %v647, %v647
        %v1092 = vmul.f32 %v648, %v648
        %v1093 = vmul.f32 %v649, %v649
        %v1094 = vmul.f32 %v650, %v650
        %v1095 = vmul.f32 %v651, %v651
        %v1096 = vmul.f32 %v652, %v652
        %v1097 = vmul.f32 %v653, %v653
        %v1098 = vmul.f32 %v654, %v654
        %v1099 = vmul.f32 %v655, %v655
        %v1100 = vmul.f32 %v656, %v656
        %v1101 = vmul.f32 %v657, %v657
        %v1102 = vmul.f32 %v658, %v658
        %v1103 = vmul.f32 %v659, %v659
        %v1104 = vmul.f32 %v660, %v660
        %v1105 = vmul.f32 %v661, %v661
        %v1106 = vmul.f32 %v662, %v662
        %v1107 = vmul.f32 %v663, %v663
        %v1108 = vmul.f32 %v664, %v664
        %v1109 = vmul.f32 %v665, %v665
        %v1110 = vmul.f32 %v666, %v666
        %v1111 = vmul.f32 %v667, %v667
        %v1112 = vmul.f32 %v668, %v668
        %v1113 = vmul.f32 %v669, %v669
        %v1114 = vmul.f32 %v670, %v670
        %v1115 = vmul.f32 %v671, %v671
        %v1116 = vmul.f32 %v672, %v672
        %v1117 = vmul.f32 %v673, %v673
        %v1118 = vmul.f32 %v674, %v674
        %v1119 = vmul.f32 %v675, %v675
        %v1120 = vmul.f32 %v676, %v676
        %v1121 = vmul.f32 %v677, %v677
        %v1122 = vmul.f32 %v678, %v678
        %v1123 = vmul.f32 %v679, %v679
        %v1124 = vmul.f32 %v680, %v680
        %v1125 = vmul.f32 %v681, %v681
        %v1126 = vmul.f32 %v682, %v682
        %v1127 = vmul.f32 %v683, %v683
        %v1128 = vmul.f32 %v684, %v684
        %v1129 = vmul.f32 %v685, %v685
        %v1130 = vmul.f32 %v686, %v686
        %v1131 = vmul.f32 %v687, %v687
        %v1132 = vmul.f32 %v688, %v688
        %v1133 = vmul.f32 %v689, %v689
        %v1134 = vmul.f32 %v690, %v690
        %v1135 = vmul.f32 %v691, %v691
        %v1136 = vmul.f32 %v692, %v692
        %v1137 = vmul.f32 %v693, %v693
        %v1138 = vmul.f32 %v694, %v694
        %v1139 = vmul.f32 %v695, %v695
        %v1140 = vmul.f32 %v696, %v696
        %v1141 = vmul.f32 %v697, %v697
        %v1142 = vmul.f32 %v698, %v698
        %v1143 = vmul.f32 %v699, %v699
        %v1144 = vmul.f32 %v700, %v700
        %v1145 = vmul.f32 %v701, %v701
        %v1146 = vmul.f32 %v702, %v702
        %v1147 = vmul.f32 %v703, %v703
        %v1148 = vmul.f32 %v704, %v704
        %v1149 = vadd.f32 %v1085, %v1086
        %v1150 = vadd.f32 %v1149, %v1087
        %v1151 = vadd.f32 %v1150, %v1088
        %v1152 = vadd.f32 %v1151, %v1089
        %v1153 = vadd.f32 %v1152, %v1090
        %v1154 = vadd.f32 %v1153, %v1091
        %v1155 = vadd.f32 %v1154, %v1092
        %v1156 = vadd.f32 %v1155, %v1093
        %v1157 = vadd.f32 %v1156, %v1094
        %v1158 = vadd.f32 %v1157, %v1095
        %v1159 = vadd.f32 %v1158, %v1096
        %v1160 = vadd.f32 %v1159, %v1097
        %v1161 = vadd.f32 %v1160, %v1098
        %v1162 = vadd.f32 %v1161, %v1099
        %v1163 = vadd.f32 %v1162, %v1100
        %v1164 = vadd.f32 %v1163, %v1101
        %v1165 = vadd.f32 %v1164, %v1102
        %v1166 = vadd.f32 %v1165, %v1103
        %v1167 = vadd.f32 %v1166, %v1104
        %v1168 = vadd.f32 %v1167, %v1105
        %v1169 = vadd.f32 %v1168, %v1106
        %v1170 = vadd.f32 %v1169, %v1107
        %v1171 = vadd.f32 %v1170, %v1108
        %v1172 = vadd.f32 %v1171, %v1109
        %v1173 = vadd.f32 %v1172, %v1110
        %v1174 = vadd.f32 %v1173, %v1111
        %v1175 = vadd.f32 %v1174, %v1112
        %v1176 = vadd.f32 %v1175, %v1113
        %v1177 = vadd.f32 %v1176, %v1114
        %v1178 = vadd.f32 %v1177, %v1115
        %v1179 = vadd.f32 %v1178, %v1116
        %v1180 = vadd.f32 %v1179, %v1117
        %v1181 = vadd.f32 %v1180, %v1118
        %v1182 = vadd.f32 %v1181, %v1119
        %v1183 = vadd.f32 %v1182, %v1120
        %v1184 = vadd.f32 %v1183, %v1121
        %v1185 = vadd.f32 %v1184, %v1122
        %v1186 = vadd.f32 %v1185, %v1123
        %v1187 = vadd.f32 %v1186, %v1124
        %v1188 = vadd.f32 %v1187, %v1125
        %v1189 = vadd.f32 %v1188, %v1126
        %v1190 = vadd.f32 %v1189, %v1127
        %v1191 = vadd.f32 %v1190, %v1128
        %v1192 = vadd.f32 %v1191, %v1129
        %v1193 = vadd.f32 %v1192, %v1130
        %v1194 = vadd.f32 %v1193, %v1131
        %v1195 = vadd.f32 %v1194, %v1132
        %v1196 = vadd.f32 %v1195, %v1133
        %v1197 = vadd.f32 %v1196, %v1134
        %v1198 = vadd.f32 %v1197, %v1135
        %v1199 = vadd.f32 %v1198, %v1136
        %v1200 = vadd.f32 %v1199, %v1137
        %v1201 = vadd.f32 %v1200, %v1138
        %v1202 = vadd.f32 %v1201, %v1139
        %v1203 = vadd.f32 %v1202, %v1140
        %v1204 = vadd.f32 %v1203, %v1141
        %v1205 = vadd.f32 %v1204, %v1142
        %v1206 = vadd.f32 %v1205, %v1143
        %v1207 = vadd.f32 %v1206, %v1144
        %v1208 = vadd.f32 %v1207, %v1145
        %v1209 = vadd.f32 %v1208, %v1146
        %v1210 = vadd.f32 %v1209, %v1147
        %v1211 = vadd.f32 %v1210, %v1148
        %v1212 = vmul.f32 %v1211, %v1083
        %v1213 = vmul.f32 %v1084, %v1084
        %v1214 = vsub.f32 %v1212, %v1213
        %v1215 = vmax.f32 %v1214, 0.0
        %v1216 = vsub.f32 %v641, %v1084
        %v1217 = vsub.f32 %v642, %v1084
        %v1218 = vsub.f32 %v643, %v1084
        %v1219 = vsub.f32 %v644, %v1084
        %v1220 = vsub.f32 %v645, %v1084
        %v1221 = vsub.f32 %v646, %v1084
        %v1222 = vsub.f32 %v647, %v1084
        %v1223 = vsub.f32 %v648, %v1084
        %v1224 = vsub.f32 %v649, %v1084
        %v1225 = vsub.f32 %v650, %v1084
        %v1226 = vsub.f32 %v651, %v1084
        %v1227 = vsub.f32 %v652, %v1084
        %v1228 = vsub.f32 %v653, %v1084
        %v1229 = vsub.f32 %v654, %v1084
        %v1230 = vsub.f32 %v655, %v1084
        %v1231 = vsub.f32 %v656, %v1084
        %v1232 = vsub.f32 %v657, %v1084
        %v1233 = vsub.f32 %v658, %v1084
        %v1234 = vsub.f32 %v659, %v1084
        %v1235 = vsub.f32 %v660, %v1084
        %v1236 = vsub.f32 %v661, %v1084
        %v1237 = vsub.f32 %v662, %v1084
        %v1238 = vsub.f32 %v663, %v1084
        %v1239 = vsub.f32 %v664, %v1084
        %v1240 = vsub.f32 %v665, %v1084
        %v1241 = vsub.f32 %v666, %v1084
        %v1242 = vsub.f32 %v667, %v1084
        %v1243 = vsub.f32 %v668, %v1084
        %v1244 = vsub.f32 %v669, %v1084
        %v1245 = vsub.f32 %v670, %v1084
        %v1246 = vsub.f32 %v671, %v1084
        %v1247 = vsub.f32 %v672, %v1084
        %v1248 = vsub.f32 %v673, %v1084
        %v1249 = vsub.f32 %v674, %v1084
        %v1250 = vsub.f32 %v675, %v1084
        %v1251 = vsub.f32 %v676, %v1084
        %v1252 = vsub.f32 %v677, %v1084
        %v1253 = vsub.f32 %v678, %v1084
        %v1254 = vsub.f32 %v679, %v1084
        %v1255 = vsub.f32 %v680, %v1084
        %v1256 = vsub.f32 %v681, %v1084
        %v1257 = vsub.f32 %v682, %v1084
        %v1258 = vsub.f32 %v683, %v1084
        %v1259 = vsub.f32 %v684, %v1084
        %v1260 = vsub.f32 %v685, %v1084
        %v1261 = vsub.f32 %v686, %v1084
        %v1262 = vsub.f32 %v687, %v1084
        %v1263 = vsub.f32 %v688, %v1084
        %v1264 = vsub.f32 %v689, %v1084
        %v1265 = vsub.f32 %v690, %v1084
        %v1266 = vsub.f32 %v691, %v1084
        %v1267 = vsub.f32 %v692, %v1084
        %v1268 = vsub.f32 %v693, %v1084
        %v1269 = vsub.f32 %v694, %v1084
        %v1270 = vsub.f32 %v695, %v1084
        %v1271 = vsub.f32 %v696, %v1084
        %v1272 = vsub.f32 %v697, %v1084
        %v1273 = vsub.f32 %v698, %v1084
        %v1274 = vsub.f32 %v699, %v1084
        %v1275 = vsub.f32 %v700, %v1084
        %v1276 = vsub.f32 %v701, %v1084
        %v1277 = vsub.f32 %v702, %v1084
        %v1278 = vsub.f32 %v703, %v1084
        %v1279 = vsub.f32 %v704, %v1084
        %v1280 = vadd.f32 %v1215, 1e-05
        %v1281 = vrsqrt.pop %v1280
        %v1282 = vmul.f32 %v1216, %v1281
        %v1283 = vmul.f32 %v1217, %v1281
        %v1284 = vmul.f32 %v1218, %v1281
        %v1285 = vmul.f32 %v1219, %v1281
        %v1286 = vmul.f32 %v1220, %v1281
        %v1287 = vmul.f32 %v1221, %v1281
        %v1288 = vmul.f32 %v1222, %v1281
        %v1289 = vmul.f32 %v1223, %v1281
        %v1290 = vmul.f32 %v1224, %v1281
        %v1291 = vmul.f32 %v1225, %v1281
        %v1292 = vmul.f32 %v1226, %v1281
        %v1293 = vmul.f32 %v1227, %v1281
        %v1294 = vmul.f32 %v1228, %v1281
        %v1295 = vmul.f32 %v1229, %v1281
        %v1296 = vmul.f32 %v1230, %v1281
        %v1297 = vmul.f32 %v1231, %v1281
        %v1298 = vmul.f32 %v1232, %v1281
        %v1299 = vmul.f32 %v1233, %v1281
        %v1300 = vmul.f32 %v1234, %v1281
        %v1301 = vmul.f32 %v1235, %v1281
        %v1302 = vmul.f32 %v1236, %v1281
        %v1303 = vmul.f32 %v1237, %v1281
        %v1304 = vmul.f32 %v1238, %v1281
        %v1305 = vmul.f32 %v1239, %v1281
        %v1306 = vmul.f32 %v1240, %v1281
        %v1307 = vmul.f32 %v1241, %v1281
        %v1308 = vmul.f32 %v1242, %v1281
        %v1309 = vmul.f32 %v1243, %v1281
        %v1310 = vmul.f32 %v1244, %v1281
        %v1311 = vmul.f32 %v1245, %v1281
        %v1312 = vmul.f32 %v1246, %v1281
        %v1313 = vmul.f32 %v1247, %v1281
        %v1314 = vmul.f32 %v1248, %v1281
        %v1315 = vmul.f32 %v1249, %v1281
        %v1316 = vmul.f32 %v1250, %v1281
        %v1317 = vmul.f32 %v1251, %v1281
        %v1318 = vmul.f32 %v1252, %v1281
        %v1319 = vmul.f32 %v1253, %v1281
        %v1320 = vmul.f32 %v1254, %v1281
        %v1321 = vmul.f32 %v1255, %v1281
        %v1322 = vmul.f32 %v1256, %v1281
        %v1323 = vmul.f32 %v1257, %v1281
        %v1324 = vmul.f32 %v1258, %v1281
        %v1325 = vmul.f32 %v1259, %v1281
        %v1326 = vmul.f32 %v1260, %v1281
        %v1327 = vmul.f32 %v1261, %v1281
        %v1328 = vmul.f32 %v1262, %v1281
        %v1329 = vmul.f32 %v1263, %v1281
        %v1330 = vmul.f32 %v1264, %v1281
        %v1331 = vmul.f32 %v1265, %v1281
        %v1332 = vmul.f32 %v1266, %v1281
        %v1333 = vmul.f32 %v1267, %v1281
        %v1334 = vmul.f32 %v1268, %v1281
        %v1335 = vmul.f32 %v1269, %v1281
        %v1336 = vmul.f32 %v1270, %v1281
        %v1337 = vmul.f32 %v1271, %v1281
        %v1338 = vmul.f32 %v1272, %v1281
        %v1339 = vmul.f32 %v1273, %v1281
        %v1340 = vmul.f32 %v1274, %v1281
        %v1341 = vmul.f32 %v1275, %v1281
        %v1342 = vmul.f32 %v1276, %v1281
        %v1343 = vmul.f32 %v1277, %v1281
        %v1344 = vmul.f32 %v1278, %v1281
        %v1345 = vmul.f32 %v1279, %v1281
        %v1347 = vlaneseq
        %v1348 = vshrl.u32 %v1347, 7
        %v1349 = vsub.s32 0, %v1348
        %v1350 = vrot.slane %v1018, %v1349
        %v1352 = vmul.f32 %v1282, %v1350
        %v1353 = vmul.f32 %v1283, %v1350
        %v1354 = vmul.f32 %v1284, %v1350
        %v1355 = vmul.f32 %v1285, %v1350
        %v1356 = vmul.f32 %v1286, %v1350
        %v1357 = vmul.f32 %v1287, %v1350
        %v1358 = vmul.f32 %v1288, %v1350
        %v1359 = vmul.f32 %v1289, %v1350
        %v1360 = vmul.f32 %v1290, %v1350
        %v1361 = vmul.f32 %v1291, %v1350
        %v1362 = vmul.f32 %v1292, %v1350
        %v1363 = vmul.f32 %v1293, %v1350
        %v1364 = vmul.f32 %v1294, %v1350
        %v1365 = vmul.f32 %v1295, %v1350
        %v1366 = vmul.f32 %v1296, %v1350
        %v1367 = vmul.f32 %v1297, %v1350
        %v1368 = vmul.f32 %v1298, %v1350
        %v1369 = vmul.f32 %v1299, %v1350
        %v1370 = vmul.f32 %v1300, %v1350
        %v1371 = vmul.f32 %v1301, %v1350
        %v1372 = vmul.f32 %v1302, %v1350
        %v1373 = vmul.f32 %v1303, %v1350
        %v1374 = vmul.f32 %v1304, %v1350
        %v1375 = vmul.f32 %v1305, %v1350
        %v1376 = vmul.f32 %v1306, %v1350
        %v1377 = vmul.f32 %v1307, %v1350
        %v1378 = vmul.f32 %v1308, %v1350
        %v1379 = vmul.f32 %v1309, %v1350
        %v1380 = vmul.f32 %v1310, %v1350
        %v1381 = vmul.f32 %v1311, %v1350
        %v1382 = vmul.f32 %v1312, %v1350
        %v1383 = vmul.f32 %v1313, %v1350
        %v1384 = vmul.f32 %v1314, %v1350
        %v1385 = vmul.f32 %v1315, %v1350
        %v1386 = vmul.f32 %v1316, %v1350
        %v1387 = vmul.f32 %v1317, %v1350
        %v1388 = vmul.f32 %v1318, %v1350
        %v1389 = vmul.f32 %v1319, %v1350
        %v1390 = vmul.f32 %v1320, %v1350
        %v1391 = vmul.f32 %v1321, %v1350
        %v1392 = vmul.f32 %v1322, %v1350
        %v1393 = vmul.f32 %v1323, %v1350
        %v1394 = vmul.f32 %v1324, %v1350
        %v1395 = vmul.f32 %v1325, %v1350
        %v1396 = vmul.f32 %v1326, %v1350
        %v1397 = vmul.f32 %v1327, %v1350
        %v1398 = vmul.f32 %v1328, %v1350
        %v1399 = vmul.f32 %v1329, %v1350
        %v1400 = vmul.f32 %v1330, %v1350
        %v1401 = vmul.f32 %v1331, %v1350
        %v1402 = vmul.f32 %v1332, %v1350
        %v1403 = vmul.f32 %v1333, %v1350
        %v1404 = vmul.f32 %v1334, %v1350
        %v1405 = vmul.f32 %v1335, %v1350
        %v1406 = vmul.f32 %v1336, %v1350
        %v1407 = vmul.f32 %v1337, %v1350
        %v1408 = vmul.f32 %v1338, %v1350
        %v1409 = vmul.f32 %v1339, %v1350
        %v1410 = vmul.f32 %v1340, %v1350
        %v1411 = vmul.f32 %v1341, %v1350
        %v1412 = vmul.f32 %v1342, %v1350
        %v1413 = vmul.f32 %v1343, %v1350
        %v1414 = vmul.f32 %v1344, %v1350
        %v1415 = vmul.f32 %v1345, %v1350
        %v1417 = vlaneseq
        %v1418 = vshrl.u32 %v1417, 7
        %v1419 = vsub.s32 0, %v1418
        %v1420 = vrot.slane %v1019, %v1419
        %v1422 = vadd.f32 %v1352, %v1420
        %v1423 = vadd.f32 %v1353, %v1420
        %v1424 = vadd.f32 %v1354, %v1420
        %v1425 = vadd.f32 %v1355, %v1420
        %v1426 = vadd.f32 %v1356, %v1420
        %v1427 = vadd.f32 %v1357, %v1420
        %v1428 = vadd.f32 %v1358, %v1420
        %v1429 = vadd.f32 %v1359, %v1420
        %v1430 = vadd.f32 %v1360, %v1420
        %v1431 = vadd.f32 %v1361, %v1420
        %v1432 = vadd.f32 %v1362, %v1420
        %v1433 = vadd.f32 %v1363, %v1420
        %v1434 = vadd.f32 %v1364, %v1420
        %v1435 = vadd.f32 %v1365, %v1420
        %v1436 = vadd.f32 %v1366, %v1420
        %v1437 = vadd.f32 %v1367, %v1420
        %v1438 = vadd.f32 %v1368, %v1420
        %v1439 = vadd.f32 %v1369, %v1420
        %v1440 = vadd.f32 %v1370, %v1420
        %v1441 = vadd.f32 %v1371, %v1420
        %v1442 = vadd.f32 %v1372, %v1420
        %v1443 = vadd.f32 %v1373, %v1420
        %v1444 = vadd.f32 %v1374, %v1420
        %v1445 = vadd.f32 %v1375, %v1420
        %v1446 = vadd.f32 %v1376, %v1420
        %v1447 = vadd.f32 %v1377, %v1420
        %v1448 = vadd.f32 %v1378, %v1420
        %v1449 = vadd.f32 %v1379, %v1420
        %v1450 = vadd.f32 %v1380, %v1420
        %v1451 = vadd.f32 %v1381, %v1420
        %v1452 = vadd.f32 %v1382, %v1420
        %v1453 = vadd.f32 %v1383, %v1420
        %v1454 = vadd.f32 %v1384, %v1420
        %v1455 = vadd.f32 %v1385, %v1420
        %v1456 = vadd.f32 %v1386, %v1420
        %v1457 = vadd.f32 %v1387, %v1420
        %v1458 = vadd.f32 %v1388, %v1420
        %v1459 = vadd.f32 %v1389, %v1420
        %v1460 = vadd.f32 %v1390, %v1420
        %v1461 = vadd.f32 %v1391, %v1420
        %v1462 = vadd.f32 %v1392, %v1420
        %v1463 = vadd.f32 %v1393, %v1420
        %v1464 = vadd.f32 %v1394, %v1420
        %v1465 = vadd.f32 %v1395, %v1420
        %v1466 = vadd.f32 %v1396, %v1420
        %v1467 = vadd.f32 %v1397, %v1420
        %v1468 = vadd.f32 %v1398, %v1420
        %v1469 = vadd.f32 %v1399, %v1420
        %v1470 = vadd.f32 %v1400, %v1420
        %v1471 = vadd.f32 %v1401, %v1420
        %v1472 = vadd.f32 %v1402, %v1420
        %v1473 = vadd.f32 %v1403, %v1420
        %v1474 = vadd.f32 %v1404, %v1420
        %v1475 = vadd.f32 %v1405, %v1420
        %v1476 = vadd.f32 %v1406, %v1420
        %v1477 = vadd.f32 %v1407, %v1420
        %v1478 = vadd.f32 %v1408, %v1420
        %v1479 = vadd.f32 %v1409, %v1420
        %v1480 = vadd.f32 %v1410, %v1420
        %v1481 = vadd.f32 %v1411, %v1420
        %v1482 = vadd.f32 %v1412, %v1420
        %v1483 = vadd.f32 %v1413, %v1420
        %v1484 = vadd.f32 %v1414, %v1420
        %v1485 = vadd.f32 %v1415, %v1420
        %v1486 = vmul.f32 %v1422, 0.2
        %v1487 = vmul.f32 %v1423, 0.2
        %v1488 = vmul.f32 %v1424, 0.2
        %v1489 = vmul.f32 %v1425, 0.2
        %v1490 = vmul.f32 %v1426, 0.2
        %v1491 = vmul.f32 %v1427, 0.2
        %v1492 = vmul.f32 %v1428, 0.2
        %v1493 = vmul.f32 %v1429, 0.2
        %v1494 = vmul.f32 %v1430, 0.2
        %v1495 = vmul.f32 %v1431, 0.2
        %v1496 = vmul.f32 %v1432, 0.2
        %v1497 = vmul.f32 %v1433, 0.2
        %v1498 = vmul.f32 %v1434, 0.2
        %v1499 = vmul.f32 %v1435, 0.2
        %v1500 = vmul.f32 %v1436, 0.2
        %v1501 = vmul.f32 %v1437, 0.2
        %v1502 = vmul.f32 %v1438, 0.2
        %v1503 = vmul.f32 %v1439, 0.2
        %v1504 = vmul.f32 %v1440, 0.2
        %v1505 = vmul.f32 %v1441, 0.2
        %v1506 = vmul.f32 %v1442, 0.2
        %v1507 = vmul.f32 %v1443, 0.2
        %v1508 = vmul.f32 %v1444, 0.2
        %v1509 = vmul.f32 %v1445, 0.2
        %v1510 = vmul.f32 %v1446, 0.2
        %v1511 = vmul.f32 %v1447, 0.2
        %v1512 = vmul.f32 %v1448, 0.2
        %v1513 = vmul.f32 %v1449, 0.2
        %v1514 = vmul.f32 %v1450, 0.2
        %v1515 = vmul.f32 %v1451, 0.2
        %v1516 = vmul.f32 %v1452, 0.2
        %v1517 = vmul.f32 %v1453, 0.2
        %v1518 = vmul.f32 %v1454, 0.2
        %v1519 = vmul.f32 %v1455, 0.2
        %v1520 = vmul.f32 %v1456, 0.2
        %v1521 = vmul.f32 %v1457, 0.2
        %v1522 = vmul.f32 %v1458, 0.2
        %v1523 = vmul.f32 %v1459, 0.2
        %v1524 = vmul.f32 %v1460, 0.2
        %v1525 = vmul.f32 %v1461, 0.2
        %v1526 = vmul.f32 %v1462, 0.2
        %v1527 = vmul.f32 %v1463, 0.2
        %v1528 = vmul.f32 %v1464, 0.2
        %v1529 = vmul.f32 %v1465, 0.2
        %v1530 = vmul.f32 %v1466, 0.2
        %v1531 = vmul.f32 %v1467, 0.2
        %v1532 = vmul.f32 %v1468, 0.2
        %v1533 = vmul.f32 %v1469, 0.2
        %v1534 = vmul.f32 %v1470, 0.2
        %v1535 = vmul.f32 %v1471, 0.2
        %v1536 = vmul.f32 %v1472, 0.2
        %v1537 = vmul.f32 %v1473, 0.2
        %v1538 = vmul.f32 %v1474, 0.2
        %v1539 = vmul.f32 %v1475, 0.2
        %v1540 = vmul.f32 %v1476, 0.2
        %v1541 = vmul.f32 %v1477, 0.2
        %v1542 = vmul.f32 %v1478, 0.2
        %v1543 = vmul.f32 %v1479, 0.2
        %v1544 = vmul.f32 %v1480, 0.2
        %v1545 = vmul.f32 %v1481, 0.2
        %v1546 = vmul.f32 %v1482, 0.2
        %v1547 = vmul.f32 %v1483, 0.2
        %v1548 = vmul.f32 %v1484, 0.2
        %v1549 = vmul.f32 %v1485, 0.2
        %v1550 = vmax.f32 %v1422, %v1486
        %v1551 = vmax.f32 %v1423, %v1487
        %v1552 = vmax.f32 %v1424, %v1488
        %v1553 = vmax.f32 %v1425, %v1489
        %v1554 = vmax.f32 %v1426, %v1490
        %v1555 = vmax.f32 %v1427, %v1491
        %v1556 = vmax.f32 %v1428, %v1492
        %v1557 = vmax.f32 %v1429, %v1493
        %v1558 = vmax.f32 %v1430, %v1494
        %v1559 = vmax.f32 %v1431, %v1495
        %v1560 = vmax.f32 %v1432, %v1496
        %v1561 = vmax.f32 %v1433, %v1497
        %v1562 = vmax.f32 %v1434, %v1498
        %v1563 = vmax.f32 %v1435, %v1499
        %v1564 = vmax.f32 %v1436, %v1500
        %v1565 = vmax.f32 %v1437, %v1501
        %v1566 = vmax.f32 %v1438, %v1502
        %v1567 = vmax.f32 %v1439, %v1503
        %v1568 = vmax.f32 %v1440, %v1504
        %v1569 = vmax.f32 %v1441, %v1505
        %v1570 = vmax.f32 %v1442, %v1506
        %v1571 = vmax.f32 %v1443, %v1507
        %v1572 = vmax.f32 %v1444, %v1508
        %v1573 = vmax.f32 %v1445, %v1509
        %v1574 = vmax.f32 %v1446, %v1510
        %v1575 = vmax.f32 %v1447, %v1511
        %v1576 = vmax.f32 %v1448, %v1512
        %v1577 = vmax.f32 %v1449, %v1513
        %v1578 = vmax.f32 %v1450, %v1514
        %v1579 = vmax.f32 %v1451, %v1515
        %v1580 = vmax.f32 %v1452, %v1516
        %v1581 = vmax.f32 %v1453, %v1517
        %v1582 = vmax.f32 %v1454, %v1518
        %v1583 = vmax.f32 %v1455, %v1519
        %v1584 = vmax.f32 %v1456, %v1520
        %v1585 = vmax.f32 %v1457, %v1521
        %v1586 = vmax.f32 %v1458, %v1522
        %v1587 = vmax.f32 %v1459, %v1523
        %v1588 = vmax.f32 %v1460, %v1524
        %v1589 = vmax.f32 %v1461, %v1525
        %v1590 = vmax.f32 %v1462, %v1526
        %v1591 = vmax.f32 %v1463, %v1527
        %v1592 = vmax.f32 %v1464, %v1528
        %v1593 = vmax.f32 %v1465, %v1529
        %v1594 = vmax.f32 %v1466, %v1530
        %v1595 = vmax.f32 %v1467, %v1531
        %v1596 = vmax.f32 %v1468, %v1532
        %v1597 = vmax.f32 %v1469, %v1533
        %v1598 = vmax.f32 %v1470, %v1534
        %v1599 = vmax.f32 %v1471, %v1535
        %v1600 = vmax.f32 %v1472, %v1536
        %v1601 = vmax.f32 %v1473, %v1537
        %v1602 = vmax.f32 %v1474, %v1538
        %v1603 = vmax.f32 %v1475, %v1539
        %v1604 = vmax.f32 %v1476, %v1540
        %v1605 = vmax.f32 %v1477, %v1541
        %v1606 = vmax.f32 %v1478, %v1542
        %v1607 = vmax.f32 %v1479, %v1543
        %v1608 = vmax.f32 %v1480, %v1544
        %v1609 = vmax.f32 %v1481, %v1545
        %v1610 = vmax.f32 %v1482, %v1546
        %v1611 = vmax.f32 %v1483, %v1547
        %v1612 = vmax.f32 %v1484, %v1548
        %v1613 = vmax.f32 %v1485, %v1549
        %v1614 = vpack.c.bf16 %v1550, %v1550
        %v1615 = vpack.c.bf16 %v1551, %v1551
        %v1616 = vpack.c.bf16 %v1552, %v1552
        %v1617 = vpack.c.bf16 %v1553, %v1553
        %v1618 = vpack.c.bf16 %v1554, %v1554
        %v1619 = vpack.c.bf16 %v1555, %v1555
        %v1620 = vpack.c.bf16 %v1556, %v1556
        %v1621 = vpack.c.bf16 %v1557, %v1557
        %v1622 = vpack.c.bf16 %v1558, %v1558
        %v1623 = vpack.c.bf16 %v1559, %v1559
        %v1624 = vpack.c.bf16 %v1560, %v1560
        %v1625 = vpack.c.bf16 %v1561, %v1561
        %v1626 = vpack.c.bf16 %v1562, %v1562
        %v1627 = vpack.c.bf16 %v1563, %v1563
        %v1628 = vpack.c.bf16 %v1564, %v1564
        %v1629 = vpack.c.bf16 %v1565, %v1565
        %v1630 = vpack.c.bf16 %v1566, %v1566
        %v1631 = vpack.c.bf16 %v1567, %v1567
        %v1632 = vpack.c.bf16 %v1568, %v1568
        %v1633 = vpack.c.bf16 %v1569, %v1569
        %v1634 = vpack.c.bf16 %v1570, %v1570
        %v1635 = vpack.c.bf16 %v1571, %v1571
        %v1636 = vpack.c.bf16 %v1572, %v1572
        %v1637 = vpack.c.bf16 %v1573, %v1573
        %v1638 = vpack.c.bf16 %v1574, %v1574
        %v1639 = vpack.c.bf16 %v1575, %v1575
        %v1640 = vpack.c.bf16 %v1576, %v1576
        %v1641 = vpack.c.bf16 %v1577, %v1577
        %v1642 = vpack.c.bf16 %v1578, %v1578
        %v1643 = vpack.c.bf16 %v1579, %v1579
        %v1644 = vpack.c.bf16 %v1580, %v1580
        %v1645 = vpack.c.bf16 %v1581, %v1581
        %v1646 = vpack.c.bf16 %v1582, %v1582
        %v1647 = vpack.c.bf16 %v1583, %v1583
        %v1648 = vpack.c.bf16 %v1584, %v1584
        %v1649 = vpack.c.bf16 %v1585, %v1585
        %v1650 = vpack.c.bf16 %v1586, %v1586
        %v1651 = vpack.c.bf16 %v1587, %v1587
        %v1652 = vpack.c.bf16 %v1588, %v1588
        %v1653 = vpack.c.bf16 %v1589, %v1589
        %v1654 = vpack.c.bf16 %v1590, %v1590
        %v1655 = vpack.c.bf16 %v1591, %v1591
        %v1656 = vpack.c.bf16 %v1592, %v1592
        %v1657 = vpack.c.bf16 %v1593, %v1593
        %v1658 = vpack.c.bf16 %v1594, %v1594
        %v1659 = vpack.c.bf16 %v1595, %v1595
        %v1660 = vpack.c.bf16 %v1596, %v1596
        %v1661 = vpack.c.bf16 %v1597, %v1597
        %v1662 = vpack.c.bf16 %v1598, %v1598
        %v1663 = vpack.c.bf16 %v1599, %v1599
        %v1664 = vpack.c.bf16 %v1600, %v1600
        %v1665 = vpack.c.bf16 %v1601, %v1601
        %v1666 = vpack.c.bf16 %v1602, %v1602
        %v1667 = vpack.c.bf16 %v1603, %v1603
        %v1668 = vpack.c.bf16 %v1604, %v1604
        %v1669 = vpack.c.bf16 %v1605, %v1605
        %v1670 = vpack.c.bf16 %v1606, %v1606
        %v1671 = vpack.c.bf16 %v1607, %v1607
        %v1672 = vpack.c.bf16 %v1608, %v1608
        %v1673 = vpack.c.bf16 %v1609, %v1609
        %v1674 = vpack.c.bf16 %v1610, %v1610
        %v1675 = vpack.c.bf16 %v1611, %v1611
        %v1676 = vpack.c.bf16 %v1612, %v1612
        %v1677 = vpack.c.bf16 %v1613, %v1613
        %v1728 = vunpack.c.l.b16 0
        %v1729 = vunpack.c.l.b16 %v1614
        %v1730 = vunpack.c.l.b16 %v1615
        %v1731 = vunpack.c.l.b16 %v1616
        %v1732 = vunpack.c.l.b16 %v1617
        %v1733 = vunpack.c.l.b16 %v1618
        %v1734 = vunpack.c.l.b16 %v1619
        %v1735 = vunpack.c.l.b16 %v1620
        %v1736 = vunpack.c.l.b16 %v1622
        %v1737 = vunpack.c.l.b16 %v1623
        %v1738 = vunpack.c.l.b16 %v1624
        %v1739 = vunpack.c.l.b16 %v1625
        %v1740 = vunpack.c.l.b16 %v1626
        %v1741 = vunpack.c.l.b16 %v1627
        %v1742 = vunpack.c.l.b16 %v1628
        %v1743 = vunpack.c.l.b16 %v1630
        %v1744 = vunpack.c.l.b16 %v1631
        %v1745 = vunpack.c.l.b16 %v1632
        %v1746 = vunpack.c.l.b16 %v1633
        %v1747 = vunpack.c.l.b16 %v1634
        %v1748 = vunpack.c.l.b16 %v1635
        %v1749 = vunpack.c.l.b16 %v1636
        %v1750 = vunpack.c.l.b16 %v1638
        %v1751 = vunpack.c.l.b16 %v1639
        %v1752 = vunpack.c.l.b16 %v1640
        %v1753 = vunpack.c.l.b16 %v1641
        %v1754 = vunpack.c.l.b16 %v1642
        %v1755 = vunpack.c.l.b16 %v1643
        %v1756 = vunpack.c.l.b16 %v1644
        %v1757 = vunpack.c.l.b16 %v1646
        %v1758 = vunpack.c.l.b16 %v1647
        %v1759 = vunpack.c.l.b16 %v1648
        %v1760 = vunpack.c.l.b16 %v1649
        %v1761 = vunpack.c.l.b16 %v1650
        %v1762 = vunpack.c.l.b16 %v1651
        %v1763 = vunpack.c.l.b16 %v1652
        %v1764 = vunpack.c.l.b16 %v1654
        %v1765 = vunpack.c.l.b16 %v1655
        %v1766 = vunpack.c.l.b16 %v1656
        %v1767 = vunpack.c.l.b16 %v1657
        %v1768 = vunpack.c.l.b16 %v1658
        %v1769 = vunpack.c.l.b16 %v1659
        %v1770 = vunpack.c.l.b16 %v1660
        %v1771 = vunpack.c.l.b16 %v1662
        %v1772 = vunpack.c.l.b16 %v1663
        %v1773 = vunpack.c.l.b16 %v1664
        %v1774 = vunpack.c.l.b16 %v1665
        %v1775 = vunpack.c.l.b16 %v1666
        %v1776 = vunpack.c.l.b16 %v1667
        %v1777 = vunpack.c.l.b16 %v1668
        %v1778 = vpack.c.b16 %v1728, %v1728
        %v1779 = vpack.c.b16 %v1729, %v1728
        %v1780 = vpack.c.b16 %v1731, %v1730
        %v1781 = vpack.c.b16 %v1733, %v1732
        %v1782 = vpack.c.b16 %v1735, %v1734
        %v1783 = vpack.c.b16 %v1736, %v1728
        %v1784 = vpack.c.b16 %v1738, %v1737
        %v1785 = vpack.c.b16 %v1740, %v1739
        %v1786 = vpack.c.b16 %v1742, %v1741
        %v1787 = vpack.c.b16 %v1743, %v1728
        %v1788 = vpack.c.b16 %v1745, %v1744
        %v1789 = vpack.c.b16 %v1747, %v1746
        %v1790 = vpack.c.b16 %v1749, %v1748
        %v1791 = vpack.c.b16 %v1750, %v1728
        %v1792 = vpack.c.b16 %v1752, %v1751
        %v1793 = vpack.c.b16 %v1754, %v1753
        %v1794 = vpack.c.b16 %v1756, %v1755
        %v1795 = vpack.c.b16 %v1757, %v1728
        %v1796 = vpack.c.b16 %v1759, %v1758
        %v1797 = vpack.c.b16 %v1761, %v1760
        %v1798 = vpack.c.b16 %v1763, %v1762
        %v1799 = vpack.c.b16 %v1764, %v1728
        %v1800 = vpack.c.b16 %v1766, %v1765
        %v1801 = vpack.c.b16 %v1768, %v1767
        %v1802 = vpack.c.b16 %v1770, %v1769
        %v1803 = vpack.c.b16 %v1771, %v1728
        %v1804 = vpack.c.b16 %v1773, %v1772
        %v1805 = vpack.c.b16 %v1775, %v1774
        %v1806 = vpack.c.b16 %v1777, %v1776
        %v1843 = vunpack.c.l.b16 %v1621
        %v1844 = vunpack.c.l.b16 %v1629
        %v1845 = vunpack.c.l.b16 %v1637
        %v1846 = vunpack.c.l.b16 %v1645
        %v1847 = vunpack.c.l.b16 %v1653
        %v1848 = vunpack.c.l.b16 %v1661
        %v1849 = vunpack.c.l.b16 %v1669
        %v1850 = vpack.c.b16 %v1730, %v1729
        %v1851 = vpack.c.b16 %v1732, %v1731
        %v1852 = vpack.c.b16 %v1734, %v1733
        %v1853 = vpack.c.b16 %v1843, %v1735
        %v1854 = vpack.c.b16 %v1737, %v1736
        %v1855 = vpack.c.b16 %v1739, %v1738
        %v1856 = vpack.c.b16 %v1741, %v1740
        %v1857 = vpack.c.b16 %v1844, %v1742
        %v1858 = vpack.c.b16 %v1744, %v1743
        %v1859 = vpack.c.b16 %v1746, %v1745
        %v1860 = vpack.c.b16 %v1748, %v1747
        %v1861 = vpack.c.b16 %v1845, %v1749
        %v1862 = vpack.c.b16 %v1751, %v1750
        %v1863 = vpack.c.b16 %v1753, %v1752
        %v1864 = vpack.c.b16 %v1755, %v1754
        %v1865 = vpack.c.b16 %v1846, %v1756
        %v1866 = vpack.c.b16 %v1758, %v1757
        %v1867 = vpack.c.b16 %v1760, %v1759
        %v1868 = vpack.c.b16 %v1762, %v1761
        %v1869 = vpack.c.b16 %v1847, %v1763
        %v1870 = vpack.c.b16 %v1765, %v1764
        %v1871 = vpack.c.b16 %v1767, %v1766
        %v1872 = vpack.c.b16 %v1769, %v1768
        %v1873 = vpack.c.b16 %v1848, %v1770
        %v1874 = vpack.c.b16 %v1772, %v1771
        %v1875 = vpack.c.b16 %v1774, %v1773
        %v1876 = vpack.c.b16 %v1776, %v1775
        %v1877 = vpack.c.b16 %v1849, %v1777
        %v1906 = vpack.c.b16 %v1728, %v1843
        %v1907 = vpack.c.b16 %v1728, %v1844
        %v1908 = vpack.c.b16 %v1728, %v1845
        %v1909 = vpack.c.b16 %v1728, %v1846
        %v1910 = vpack.c.b16 %v1728, %v1847
        %v1911 = vpack.c.b16 %v1728, %v1848
        %v1912 = vpack.c.b16 %v1728, %v1849
        %v1927 = vunpack.c.l.b16 %v1670
        %v1928 = vunpack.c.l.b16 %v1671
        %v1929 = vunpack.c.l.b16 %v1672
        %v1930 = vunpack.c.l.b16 %v1673
        %v1931 = vunpack.c.l.b16 %v1674
        %v1932 = vunpack.c.l.b16 %v1675
        %v1933 = vunpack.c.l.b16 %v1676
        %v1934 = vpack.c.b16 %v1927, %v1728
        %v1935 = vpack.c.b16 %v1929, %v1928
        %v1936 = vpack.c.b16 %v1931, %v1930
        %v1937 = vpack.c.b16 %v1933, %v1932
        %v1943 = vunpack.c.l.b16 %v1677
        %v1944 = vpack.c.b16 %v1928, %v1927
        %v1945 = vpack.c.b16 %v1930, %v1929
        %v1946 = vpack.c.b16 %v1932, %v1931
        %v1947 = vpack.c.b16 %v1943, %v1933
        %v1952 = vpack.c.b16 %v1728, %v1943
        %v1954 = vld [vmem:[%s1] sm:$0xf]
        %v1955 = vld [vmem:[%s1 + $0x4] sm:$0xf]
        %v1956 = vld [vmem:[%s1 + $0x8] sm:$0xf]
        %v1957 = vld [vmem:[%s1 + $0xc] sm:$0xf]
        %v1958 = vld [vmem:[%s1 + $0x10] sm:$0xf]
        %v1959 = vld [vmem:[%s1 + $0x14] sm:$0xf]
        %v1960 = vld [vmem:[%s1 + $0x18] sm:$0xf]
        %v1961 = vld [vmem:[%s1 + $0x1c] sm:$0xf]
        %v1962 = vld [vmem:[%s1 + $0x20] sm:$0xf]
        %v1963 = vld [vmem:[%s1 + $0x24] sm:$0xf]
        %v1964 = vld [vmem:[%s1 + $0x28] sm:$0xf]
        %v1965 = vld [vmem:[%s1 + $0x2c] sm:$0xf]
        %v1966 = vld [vmem:[%s1 + $0x30] sm:$0xf]
        %v1967 = vld [vmem:[%s1 + $0x34] sm:$0xf]
        %v1968 = vld [vmem:[%s1 + $0x38] sm:$0xf]
        %v1969 = vld [vmem:[%s1 + $0x3c] sm:$0xf]
        %v1970 = vld [vmem:[%s1 + $0x40] sm:$0xf]
        %v1971 = vld [vmem:[%s1 + $0x44] sm:$0xf]
        %v1972 = vld [vmem:[%s1 + $0x48] sm:$0xf]
        %v1973 = vld [vmem:[%s1 + $0x4c] sm:$0xf]
        %v1974 = vld [vmem:[%s1 + $0x50] sm:$0xf]
        %v1975 = vld [vmem:[%s1 + $0x54] sm:$0xf]
        %v1976 = vld [vmem:[%s1 + $0x58] sm:$0xf]
        %v1977 = vld [vmem:[%s1 + $0x5c] sm:$0xf]
        %v1978 = vld [vmem:[%s1 + $0x60] sm:$0xf]
        %v1979 = vld [vmem:[%s1 + $0x64] sm:$0xf]
        %v1980 = vld [vmem:[%s1 + $0x68] sm:$0xf]
        %v1981 = vld [vmem:[%s1 + $0x6c] sm:$0xf]
        %v1982 = vld [vmem:[%s1 + $0x70] sm:$0xf]
        %v1983 = vld [vmem:[%s1 + $0x74] sm:$0xf]
        %v1984 = vld [vmem:[%s1 + $0x78] sm:$0xf]
        %v1985 = vld [vmem:[%s1 + $0x7c] sm:$0xf]
        %v1986 = vld [vmem:[%s1 + $0x80] sm:$0xf]
        %v1987 = vld [vmem:[%s1 + $0x84] sm:$0xf]
        %v1988 = vld [vmem:[%s1 + $0x88] sm:$0xf]
        %v1989 = vld [vmem:[%s1 + $0x8c] sm:$0xf]
        %v1990 = vld [vmem:[%s1 + $0x90] sm:$0xf]
        %v1991 = vld [vmem:[%s1 + $0x94] sm:$0xf]
        %v1992 = vld [vmem:[%s1 + $0x98] sm:$0xf]
        %v1993 = vld [vmem:[%s1 + $0x9c] sm:$0xf]
        %v1994 = vld [vmem:[%s1 + $0xa0] sm:$0xf]
        %v1995 = vld [vmem:[%s1 + $0xa4] sm:$0xf]
        %v1996 = vld [vmem:[%s1 + $0xa8] sm:$0xf]
        %v1997 = vld [vmem:[%s1 + $0xac] sm:$0xf]
        %v1998 = vld [vmem:[%s1 + $0xb0] sm:$0xf]
        %v1999 = vld [vmem:[%s1 + $0xb4] sm:$0xf]
        %v2000 = vld [vmem:[%s1 + $0xb8] sm:$0xf]
        %v2001 = vld [vmem:[%s1 + $0xbc] sm:$0xf]
        %v2002 = vld [vmem:[%s1 + $0xc0] sm:$0xf]
        %v2003 = vld [vmem:[%s1 + $0xc4] sm:$0xf]
        %v2004 = vld [vmem:[%s1 + $0xc8] sm:$0xf]
        %v2005 = vld [vmem:[%s1 + $0xcc] sm:$0xf]
        %v2006 = vld [vmem:[%s1 + $0xd0] sm:$0xf]
        %v2007 = vld [vmem:[%s1 + $0xd4] sm:$0xf]
        %v2008 = vld [vmem:[%s1 + $0xd8] sm:$0xf]
        %v2009 = vld [vmem:[%s1 + $0xdc] sm:$0xf]
        %v2010 = vld [vmem:[%s1 + $0xe0] sm:$0xf]
        %v2011 = vld [vmem:[%s1 + $0xe4] sm:$0xf]
        %v2012 = vld [vmem:[%s1 + $0xe8] sm:$0xf]
        %v2013 = vld [vmem:[%s1 + $0xec] sm:$0xf]
        %v2014 = vld [vmem:[%s1 + $0xf0] sm:$0xf]
        %v2015 = vld [vmem:[%s1 + $0xf4] sm:$0xf]
        %v2016 = vld [vmem:[%s1 + $0xf8] sm:$0xf]
        %v2017 = vld [vmem:[%s1 + $0xfc] sm:$0xf]
        %v2018 = vld [vmem:[%s1 + $0x100] sm:$0xf]
        %v2019 = vld [vmem:[%s1 + $0x104] sm:$0xf]
        %v2020 = vld [vmem:[%s1 + $0x108] sm:$0xf]
        %v2021 = vld [vmem:[%s1 + $0x10c] sm:$0xf]
        %v2022 = vld [vmem:[%s1 + $0x110] sm:$0xf]
        %v2023 = vld [vmem:[%s1 + $0x114] sm:$0xf]
        %v2024 = vld [vmem:[%s1 + $0x118] sm:$0xf]
        %v2025 = vld [vmem:[%s1 + $0x11c] sm:$0xf]
        %v2026 = vld [vmem:[%s1 + $0x120] sm:$0xf]
        %v2027 = vld [vmem:[%s1 + $0x124] sm:$0xf]
        %v2028 = vld [vmem:[%s1 + $0x128] sm:$0xf]
        %v2029 = vld [vmem:[%s1 + $0x12c] sm:$0xf]
        %v2030 = vld [vmem:[%s1 + $0x130] sm:$0xf]
        %v2031 = vld [vmem:[%s1 + $0x134] sm:$0xf]
        %v2032 = vld [vmem:[%s1 + $0x138] sm:$0xf]
        %v2033 = vld [vmem:[%s1 + $0x13c] sm:$0xf]
        %v2034 = vld [vmem:[%s1 + $0x140] sm:$0xf]
        %v2035 = vld [vmem:[%s1 + $0x144] sm:$0xf]
        %v2036 = vld [vmem:[%s1 + $0x148] sm:$0xf]
        %v2037 = vld [vmem:[%s1 + $0x14c] sm:$0xf]
        %v2038 = vld [vmem:[%s1 + $0x150] sm:$0xf]
        %v2039 = vld [vmem:[%s1 + $0x154] sm:$0xf]
        %v2040 = vld [vmem:[%s1 + $0x158] sm:$0xf]
        %v2041 = vld [vmem:[%s1 + $0x15c] sm:$0xf]
        %v2042 = vld [vmem:[%s1 + $0x160] sm:$0xf]
        %v2043 = vld [vmem:[%s1 + $0x164] sm:$0xf]
        %v2044 = vld [vmem:[%s1 + $0x168] sm:$0xf]
        %v2045 = vld [vmem:[%s1 + $0x16c] sm:$0xf]
        %v2046 = vld [vmem:[%s1 + $0x170] sm:$0xf]
        %v2047 = vld [vmem:[%s1 + $0x174] sm:$0xf]
        %v2048 = vld [vmem:[%s1 + $0x178] sm:$0xf]
        %v2049 = vld [vmem:[%s1 + $0x17c] sm:$0xf]
        %v2050 = vld [vmem:[%s1 + $0x180] sm:$0xf]
        %v2051 = vld [vmem:[%s1 + $0x184] sm:$0xf]
        %v2052 = vld [vmem:[%s1 + $0x188] sm:$0xf]
        %v2053 = vld [vmem:[%s1 + $0x18c] sm:$0xf]
        %v2054 = vld [vmem:[%s1 + $0x190] sm:$0xf]
        %v2055 = vld [vmem:[%s1 + $0x194] sm:$0xf]
        %v2056 = vld [vmem:[%s1 + $0x198] sm:$0xf]
        %v2057 = vld [vmem:[%s1 + $0x19c] sm:$0xf]
        %v2058 = vld [vmem:[%s1 + $0x1a0] sm:$0xf]
        %v2059 = vld [vmem:[%s1 + $0x1a4] sm:$0xf]
        %v2060 = vld [vmem:[%s1 + $0x1a8] sm:$0xf]
        %v2061 = vld [vmem:[%s1 + $0x1ac] sm:$0xf]
        %v2062 = vld [vmem:[%s1 + $0x1b0] sm:$0xf]
        %v2063 = vld [vmem:[%s1 + $0x1b4] sm:$0xf]
        %v2064 = vld [vmem:[%s1 + $0x1b8] sm:$0xf]
        %v2065 = vld [vmem:[%s1 + $0x1bc] sm:$0xf]
        %v2066 = vld [vmem:[%s1 + $0x1c0] sm:$0xf]
        %v2067 = vld [vmem:[%s1 + $0x1c4] sm:$0xf]
        %v2068 = vld [vmem:[%s1 + $0x1c8] sm:$0xf]
        %v2069 = vld [vmem:[%s1 + $0x1cc] sm:$0xf]
        %v2070 = vld [vmem:[%s1 + $0x1d0] sm:$0xf]
        %v2071 = vld [vmem:[%s1 + $0x1d4] sm:$0xf]
        %v2072 = vld [vmem:[%s1 + $0x1d8] sm:$0xf]
        %v2073 = vld [vmem:[%s1 + $0x1dc] sm:$0xf]
        %v2074 = vld [vmem:[%s1 + $0x1e0] sm:$0xf]
        %v2075 = vld [vmem:[%s1 + $0x1e4] sm:$0xf]
        %v2076 = vld [vmem:[%s1 + $0x1e8] sm:$0xf]
        %v2077 = vld [vmem:[%s1 + $0x1ec] sm:$0xf]
        %v2078 = vld [vmem:[%s1 + $0x1f0] sm:$0xf]
        %v2079 = vld [vmem:[%s1 + $0x1f4] sm:$0xf]
        %v2080 = vld [vmem:[%s1 + $0x1f8] sm:$0xf]
        %v2081 = vld [vmem:[%s1 + $0x1fc] sm:$0xf]
        %v2082 = vld [vmem:[%s1 + $0x200] sm:$0xf]
        %v2083 = vld [vmem:[%s1 + $0x204] sm:$0xf]
        %v2084 = vld [vmem:[%s1 + $0x208] sm:$0xf]
        %v2085 = vld [vmem:[%s1 + $0x20c] sm:$0xf]
        %v2086 = vld [vmem:[%s1 + $0x210] sm:$0xf]
        %v2087 = vld [vmem:[%s1 + $0x214] sm:$0xf]
        %v2088 = vld [vmem:[%s1 + $0x218] sm:$0xf]
        %v2089 = vld [vmem:[%s1 + $0x21c] sm:$0xf]
        %v2090 = vld [vmem:[%s1 + $0x220] sm:$0xf]
        %v2091 = vld [vmem:[%s1 + $0x224] sm:$0xf]
        %v2092 = vld [vmem:[%s1 + $0x228] sm:$0xf]
        %v2093 = vld [vmem:[%s1 + $0x22c] sm:$0xf]
        %v2094 = vld [vmem:[%s1 + $0x230] sm:$0xf]
        %v2095 = vld [vmem:[%s1 + $0x234] sm:$0xf]
        %v2096 = vld [vmem:[%s1 + $0x238] sm:$0xf]
        %v2097 = vld [vmem:[%s1 + $0x23c] sm:$0xf]
        %v2098 = vld [vmem:[%s2] sm:$0x1]
        %v2100 = vlaneseq
        %v2101 = vshrl.u32 %v2100, 7
        %v2102 = vsub.s32 0, %v2101
        %v2103 = vrot.slane %v2098, %v2102
        %v2249 = vunpack.c.l.b16 %v1954
        %v2250 = vunpack.c.l.b16 %v1955
        %v2251 = vunpack.c.l.b16 %v1956
        %v2252 = vunpack.c.l.b16 %v1957
        %v2253 = vunpack.c.l.b16 %v1958
        %v2254 = vunpack.c.l.b16 %v1959
        %v2255 = vunpack.c.l.b16 %v1960
        %v2256 = vunpack.c.l.b16 %v1961
        %v2257 = vunpack.c.l.b16 %v1962
        %v2258 = vunpack.c.l.b16 %v1963
        %v2259 = vunpack.c.l.b16 %v1964
        %v2260 = vunpack.c.l.b16 %v1965
        %v2261 = vunpack.c.l.b16 %v1966
        %v2262 = vunpack.c.l.b16 %v1967
        %v2263 = vunpack.c.l.b16 %v1968
        %v2264 = vunpack.c.l.b16 %v1969
        %v2265 = vunpack.c.l.b16 %v1970
        %v2266 = vunpack.c.l.b16 %v1971
        %v2267 = vunpack.c.l.b16 %v1972
        %v2268 = vunpack.c.l.b16 %v1973
        %v2269 = vunpack.c.l.b16 %v1974
        %v2270 = vunpack.c.l.b16 %v1975
        %v2271 = vunpack.c.l.b16 %v1976
        %v2272 = vunpack.c.l.b16 %v1977
        %v2273 = vunpack.c.l.b16 %v1978
        %v2274 = vunpack.c.l.b16 %v1979
        %v2275 = vunpack.c.l.b16 %v1980
        %v2276 = vunpack.c.l.b16 %v1981
        %v2277 = vunpack.c.l.b16 %v1982
        %v2278 = vunpack.c.l.b16 %v1983
        %v2279 = vunpack.c.l.b16 %v1984
        %v2280 = vunpack.c.l.b16 %v1985
        %v2281 = vunpack.c.l.b16 %v1986
        %v2282 = vunpack.c.l.b16 %v1987
        %v2283 = vunpack.c.l.b16 %v1988
        %v2284 = vunpack.c.l.b16 %v1989
        %v2285 = vunpack.c.l.b16 %v1990
        %v2286 = vunpack.c.l.b16 %v1991
        %v2287 = vunpack.c.l.b16 %v1992
        %v2288 = vunpack.c.l.b16 %v1993
        %v2289 = vunpack.c.l.b16 %v1994
        %v2290 = vunpack.c.l.b16 %v1995
        %v2291 = vunpack.c.l.b16 %v1996
        %v2292 = vunpack.c.l.b16 %v1997
        %v2293 = vunpack.c.l.b16 %v1998
        %v2294 = vunpack.c.l.b16 %v1999
        %v2295 = vunpack.c.l.b16 %v2000
        %v2296 = vunpack.c.l.b16 %v2001
        %v2297 = vunpack.c.l.b16 %v2002
        %v2298 = vunpack.c.l.b16 %v2003
        %v2299 = vunpack.c.l.b16 %v2004
        %v2300 = vunpack.c.l.b16 %v2005
        %v2301 = vunpack.c.l.b16 %v2006
        %v2302 = vunpack.c.l.b16 %v2007
        %v2303 = vunpack.c.l.b16 %v2008
        %v2304 = vunpack.c.l.b16 %v2009
        %v2305 = vunpack.c.l.b16 %v2010
        %v2306 = vunpack.c.l.b16 %v2011
        %v2307 = vunpack.c.l.b16 %v2012
        %v2308 = vunpack.c.l.b16 %v2013
        %v2309 = vunpack.c.l.b16 %v2014
        %v2310 = vunpack.c.l.b16 %v2015
        %v2311 = vunpack.c.l.b16 %v2016
        %v2312 = vunpack.c.l.b16 %v2017
        %v2313 = vunpack.c.l.b16 %v2018
        %v2314 = vunpack.c.l.b16 %v2019
        %v2315 = vunpack.c.l.b16 %v2020
        %v2316 = vunpack.c.l.b16 %v2021
        %v2317 = vunpack.c.l.b16 %v2022
        %v2318 = vunpack.c.l.b16 %v2023
        %v2319 = vunpack.c.l.b16 %v2024
        %v2320 = vunpack.c.l.b16 %v2025
        %v2321 = vunpack.c.l.b16 %v2026
        %v2322 = vunpack.c.l.b16 %v2027
        %v2323 = vunpack.c.l.b16 %v2028
        %v2324 = vunpack.c.l.b16 %v2029
        %v2325 = vunpack.c.l.b16 %v2030
        %v2326 = vunpack.c.l.b16 %v2031
        %v2327 = vunpack.c.l.b16 %v2032
        %v2328 = vunpack.c.l.b16 %v2033
        %v2329 = vunpack.c.l.b16 %v2034
        %v2330 = vunpack.c.l.b16 %v2035
        %v2331 = vunpack.c.l.b16 %v2036
        %v2332 = vunpack.c.l.b16 %v2037
        %v2333 = vunpack.c.l.b16 %v2038
        %v2334 = vunpack.c.l.b16 %v2039
        %v2335 = vunpack.c.l.b16 %v2040
        %v2336 = vunpack.c.l.b16 %v2041
        %v2337 = vunpack.c.l.b16 %v2042
        %v2338 = vunpack.c.l.b16 %v2043
        %v2339 = vunpack.c.l.b16 %v2044
        %v2340 = vunpack.c.l.b16 %v2045
        %v2341 = vunpack.c.l.b16 %v2046
        %v2342 = vunpack.c.l.b16 %v2047
        %v2343 = vunpack.c.l.b16 %v2048
        %v2344 = vunpack.c.l.b16 %v2049
        %v2345 = vunpack.c.l.b16 %v2050
        %v2346 = vunpack.c.l.b16 %v2051
        %v2347 = vunpack.c.l.b16 %v2052
        %v2348 = vunpack.c.l.b16 %v2053
        %v2349 = vunpack.c.l.b16 %v2054
        %v2350 = vunpack.c.l.b16 %v2055
        %v2351 = vunpack.c.l.b16 %v2056
        %v2352 = vunpack.c.l.b16 %v2057
        %v2353 = vunpack.c.l.b16 %v2058
        %v2354 = vunpack.c.l.b16 %v2059
        %v2355 = vunpack.c.l.b16 %v2060
        %v2356 = vunpack.c.l.b16 %v2061
        %v2357 = vunpack.c.l.b16 %v2062
        %v2358 = vunpack.c.l.b16 %v2063
        %v2359 = vunpack.c.l.b16 %v2064
        %v2360 = vunpack.c.l.b16 %v2065
        %v2361 = vunpack.c.l.b16 %v2066
        %v2362 = vunpack.c.l.b16 %v2067
        %v2363 = vunpack.c.l.b16 %v2068
        %v2364 = vunpack.c.l.b16 %v2069
        %v2365 = vunpack.c.l.b16 %v2070
        %v2366 = vunpack.c.l.b16 %v2071
        %v2367 = vunpack.c.l.b16 %v2072
        %v2368 = vunpack.c.l.b16 %v2073
        %v2369 = vunpack.c.l.b16 %v2074
        %v2370 = vunpack.c.l.b16 %v2075
        %v2371 = vunpack.c.l.b16 %v2076
        %v2372 = vunpack.c.l.b16 %v2077
        %v2373 = vunpack.c.l.b16 %v2078
        %v2374 = vunpack.c.l.b16 %v2079
        %v2375 = vunpack.c.l.b16 %v2080
        %v2376 = vunpack.c.l.b16 %v2081
        %v2377 = vunpack.c.l.b16 %v2082
        %v2378 = vunpack.c.l.b16 %v2083
        %v2379 = vunpack.c.l.b16 %v2084
        %v2380 = vunpack.c.l.b16 %v2085
        %v2381 = vunpack.c.l.b16 %v2086
        %v2382 = vunpack.c.l.b16 %v2087
        %v2383 = vunpack.c.l.b16 %v2088
        %v2384 = vunpack.c.l.b16 %v2089
        %v2385 = vunpack.c.l.b16 %v2090
        %v2386 = vunpack.c.l.b16 %v2091
        %v2387 = vunpack.c.l.b16 %v2092
        %v2388 = vunpack.c.l.b16 %v2093
        %v2389 = vunpack.c.l.b16 %v2094
        %v2390 = vunpack.c.l.b16 %v2095
        %v2391 = vunpack.c.l.b16 %v2096
        %v2392 = vunpack.c.l.b16 %v2097
        %v2393 = vpack.c.b16 %v2250, %v2249
        %v2394 = vpack.c.b16 %v2252, %v2251
        %v2395 = vpack.c.b16 %v2254, %v2253
        %v2396 = vpack.c.b16 %v2256, %v2255
        %v2397 = vpack.c.b16 %v2258, %v2257
        %v2398 = vpack.c.b16 %v2260, %v2259
        %v2399 = vpack.c.b16 %v2262, %v2261
        %v2400 = vpack.c.b16 %v2264, %v2263
        %v2401 = vpack.c.b16 %v2266, %v2265
        %v2402 = vpack.c.b16 %v2268, %v2267
        %v2403 = vpack.c.b16 %v2270, %v2269
        %v2404 = vpack.c.b16 %v2272, %v2271
        %v2405 = vpack.c.b16 %v2274, %v2273
        %v2406 = vpack.c.b16 %v2276, %v2275
        %v2407 = vpack.c.b16 %v2278, %v2277
        %v2408 = vpack.c.b16 %v2280, %v2279
        %v2409 = vpack.c.b16 %v2282, %v2281
        %v2410 = vpack.c.b16 %v2284, %v2283
        %v2411 = vpack.c.b16 %v2286, %v2285
        %v2412 = vpack.c.b16 %v2288, %v2287
        %v2413 = vpack.c.b16 %v2290, %v2289
        %v2414 = vpack.c.b16 %v2292, %v2291
        %v2415 = vpack.c.b16 %v2294, %v2293
        %v2416 = vpack.c.b16 %v2296, %v2295
        %v2417 = vpack.c.b16 %v2298, %v2297
        %v2418 = vpack.c.b16 %v2300, %v2299
        %v2419 = vpack.c.b16 %v2302, %v2301
        %v2420 = vpack.c.b16 %v2304, %v2303
        %v2421 = vpack.c.b16 %v2306, %v2305
        %v2422 = vpack.c.b16 %v2308, %v2307
        %v2423 = vpack.c.b16 %v2310, %v2309
        %v2424 = vpack.c.b16 %v2312, %v2311
        %v2425 = vpack.c.b16 %v2314, %v2313
        %v2426 = vpack.c.b16 %v2316, %v2315
        %v2427 = vpack.c.b16 %v2318, %v2317
        %v2428 = vpack.c.b16 %v2320, %v2319
        %v2429 = vpack.c.b16 %v2322, %v2321
        %v2430 = vpack.c.b16 %v2324, %v2323
        %v2431 = vpack.c.b16 %v2326, %v2325
        %v2432 = vpack.c.b16 %v2328, %v2327
        %v2433 = vpack.c.b16 %v2330, %v2329
        %v2434 = vpack.c.b16 %v2332, %v2331
        %v2435 = vpack.c.b16 %v2334, %v2333
        %v2436 = vpack.c.b16 %v2336, %v2335
        %v2437 = vpack.c.b16 %v2338, %v2337
        %v2438 = vpack.c.b16 %v2340, %v2339
        %v2439 = vpack.c.b16 %v2342, %v2341
        %v2440 = vpack.c.b16 %v2344, %v2343
        %v2441 = vpack.c.b16 %v2346, %v2345
        %v2442 = vpack.c.b16 %v2348, %v2347
        %v2443 = vpack.c.b16 %v2350, %v2349
        %v2444 = vpack.c.b16 %v2352, %v2351
        %v2445 = vpack.c.b16 %v2354, %v2353
        %v2446 = vpack.c.b16 %v2356, %v2355
        %v2447 = vpack.c.b16 %v2358, %v2357
        %v2448 = vpack.c.b16 %v2360, %v2359
        %v2449 = vpack.c.b16 %v2362, %v2361
        %v2450 = vpack.c.b16 %v2364, %v2363
        %v2451 = vpack.c.b16 %v2366, %v2365
        %v2452 = vpack.c.b16 %v2368, %v2367
        %v2453 = vpack.c.b16 %v2370, %v2369
        %v2454 = vpack.c.b16 %v2372, %v2371
        %v2455 = vpack.c.b16 %v2374, %v2373
        %v2456 = vpack.c.b16 %v2376, %v2375
        %v2457 = vpack.c.b16 %v2378, %v2377
        %v2458 = vpack.c.b16 %v2380, %v2379
        %v2459 = vpack.c.b16 %v2382, %v2381
        %v2460 = vpack.c.b16 %v2384, %v2383
        %v2461 = vpack.c.b16 %v2386, %v2385
        %v2462 = vpack.c.b16 %v2388, %v2387
        %v2463 = vpack.c.b16 %v2390, %v2389
        %v2464 = vpack.c.b16 %v2392, %v2391
        %2537 = vmatprep.subr.bf16.mxu0 0
        %2538 = vmatpush1.bf16.msra.mxu0 %v2393
        %2539 = vmatprep.subr.bf16.mxu0 0
        %2540 = vmatpush1.bf16.msra.mxu0 %v2394
        %2541 = vmatprep.subr.bf16.mxu0 0
        %2542 = vmatpush1.bf16.msra.mxu0 %v2395
        %2543 = vmatprep.subr.bf16.mxu0 0
        %2544 = vmatpush1.bf16.msra.mxu0 %v2396
        %2545 = vmatprep.subr.bf16.mxu0 0
        %2546 = vmatpush1.bf16.msra.mxu0 %v2397
        %2547 = vmatprep.subr.bf16.mxu0 0
        %2548 = vmatpush1.bf16.msra.mxu0 %v2398
        %2549 = vmatprep.subr.bf16.mxu0 0
        %2550 = vmatpush1.bf16.msra.mxu0 %v2399
        %2551 = vmatprep.subr.bf16.mxu0 0
        %2552 = vmatpush1.bf16.msra.mxu0 %v2400
        %2553 = vmatprep.subr.bf16.mxu0 0
        %2554 = vmatpush1.bf16.msra.mxu0 %v2401
        %2555 = vmatprep.subr.bf16.mxu0 0
        %2556 = vmatpush1.bf16.msra.mxu0 %v2402
        %2557 = vmatprep.subr.bf16.mxu0 0
        %2558 = vmatpush1.bf16.msra.mxu0 %v2403
        %2559 = vmatprep.subr.bf16.mxu0 0
        %2560 = vmatpush1.bf16.msra.mxu0 %v2404
        %2561 = vmatprep.subr.bf16.mxu0 0
        %2562 = vmatpush1.bf16.msra.mxu0 %v2405
        %2563 = vmatprep.subr.bf16.mxu0 0
        %2564 = vmatpush1.bf16.msra.mxu0 %v2406
        %2565 = vmatprep.subr.bf16.mxu0 0
        %2566 = vmatpush1.bf16.msra.mxu0 %v2407
        %2567 = vmatprep.subr.bf16.mxu0 0
        %2568 = vmatpush1.bf16.msra.mxu0 %v2408
        %2569 = vmatprep.mubr.bf16.mxu0 %v1778
        %2570 = vmatmul.mubr.bf16.gmra.mrb[0].mxu0 %v1778
        %v2571 = vpop.f32.mrb[0].mxu0
        %v2572 = vadd.f32 %v2103, %v2571
        %v2573 = vpop.f32.mrb[0].mxu0
        %v2574 = vpop.f32.mrb[0].mxu0
        %v2575 = vadd.f32 %v2103, %v2574
        %v2576 = vpop.f32.mrb[0].mxu0
        %2577 = vmatprep.mubr.bf16.mxu0 %v1778
        %2578 = vmatmul.mubr.bf16.gmra.mrb[0].mxu0 %v1778
        %v2579 = vpop.f32.mrb[0].mxu0
        %v2580 = vadd.f32 %v2103, %v2579
        %v2581 = vpop.f32.mrb[0].mxu0
        %v2582 = vpop.f32.mrb[0].mxu0
        %v2583 = vadd.f32 %v2103, %v2582
        %v2584 = vpop.f32.mrb[0].mxu0
        %2585 = vmatprep.mubr.bf16.mxu0 %v1778
        %2586 = vmatmul.mubr.bf16.gmra.mrb[0].mxu0 %v1778
        %v2587 = vpop.f32.mrb[0].mxu0
        %v2588 = vadd.f32 %v2103, %v2587
        %v2589 = vpop.f32.mrb[0].mxu0
        %v2590 = vpop.f32.mrb[0].mxu0
        %v2591 = vadd.f32 %v2103, %v2590
        %v2592 = vpop.f32.mrb[0].mxu0
        %2593 = vmatprep.mubr.bf16.mxu0 %v1778
        %2594 = vmatmul.mubr.bf16.gmra.mrb[0].mxu0 %v1778
        %v2595 = vpop.f32.mrb[0].mxu0
        %v2596 = vadd.f32 %v2103, %v2595
        %v2597 = vpop.f32.mrb[0].mxu0
        %v2598 = vpop.f32.mrb[0].mxu0
        %v2599 = vadd.f32 %v2103, %v2598
        %v2600 = vpop.f32.mrb[0].mxu0
        %2601 = vmatprep.mubr.bf16.mxu0 %v1850
        %2602 = vmatmul.mubr.bf16.gmra.mrb[0].mxu0 %v1779
        %v2603 = vpop.f32.mrb[0].mxu0
        %v2604 = vadd.f32 %v2103, %v2603
        %v2605 = vpop.f32.mrb[0].mxu0
        %v2606 = vpop.f32.mrb[0].mxu0
        %v2607 = vadd.f32 %v2103, %v2606
        %v2608 = vpop.f32.mrb[0].mxu0
        %2609 = vmatprep.mubr.bf16.mxu0 %v1851
        %2610 = vmatmul.mubr.bf16.gmra.mrb[0].mxu0 %v1780
        %v2611 = vpop.f32.mrb[0].mxu0
        %v2612 = vadd.f32 %v2103, %v2611
        %v2613 = vpop.f32.mrb[0].mxu0
        %v2614 = vpop.f32.mrb[0].mxu0
        %v2615 = vadd.f32 %v2103, %v2614
        %v2616 = vpop.f32.mrb[0].mxu0
        %2617 = vmatprep.mubr.bf16.mxu0 %v1852
        %2618 = vmatmul.mubr.bf16.gmra.mrb[0].mxu0 %v1781
        %v2619 = vpop.f32.mrb[0].mxu0
        %v2620 = vadd.f32 %v2103, %v2619
        %v2621 = vpop.f32.mrb[0].mxu0
        %v2622 = vpop.f32.mrb[0].mxu0
        %v2623 = vadd.f32 %v2103, %v2622
        %v2624 = vpop.f32.mrb[0].mxu0
        %2625 = vmatprep.mubr.bf16.mxu0 %v1853
        %2626 = vmatmul.mubr.bf16.gmra.mrb[0].mxu0 %v1782
        %v2627 = vpop.f32.mrb[0].mxu0
        %v2628 = vadd.f32 %v2103, %v2627
        %v2629 = vpop.f32.mrb[0].mxu0
        %v2630 = vpop.f32.mrb[0].mxu0
        %v2631 = vadd.f32 %v2103, %v2630
        %v2632 = vpop.f32.mrb[0].mxu0
        %2633 = vmatprep.mubr.bf16.mxu0 %v1854
        %2634 = vmatmul.mubr.bf16.gmra.mrb[0].mxu0 %v1783
        %v2635 = vpop.f32.mrb[0].mxu0
        %v2636 = vadd.f32 %v2103, %v2635
        %v2637 = vpop.f32.mrb[0].mxu0
        %v2638 = vpop.f32.mrb[0].mxu0
        %v2639 = vadd.f32 %v2103, %v2638
        %v2640 = vpop.f32.mrb[0].mxu0
        %2641 = vmatprep.mubr.bf16.mxu0 %v1855
        %2642 = vmatmul.mubr.bf16.gmra.mrb[0].mxu0 %v1784
        %v2643 = vpop.f32.mrb[0].mxu0
        %v2644 = vadd.f32 %v2103, %v2643
        %v2645 = vpop.f32.mrb[0].mxu0
        %v2646 = vpop.f32.mrb[0].mxu0
        %v2647 = vadd.f32 %v2103, %v2646
        %v2648 = vpop.f32.mrb[0].mxu0
        %2649 = vmatprep.mubr.bf16.mxu0 %v1856
        %2650 = vmatmul.mubr.bf16.gmra.mrb[0].mxu0 %v1785
        %v2651 = vpop.f32.mrb[0].mxu0
        %v2652 = vadd.f32 %v2103, %v2651
        %v2653 = vpop.f32.mrb[0].mxu0
        %v2654 = vpop.f32.mrb[0].mxu0
        %v2655 = vadd.f32 %v2103, %v2654
        %v2656 = vpop.f32.mrb[0].mxu0
        %2657 = vmatprep.mubr.bf16.mxu0 %v1857
        %2658 = vmatmul.mubr.bf16.gmra.mrb[0].mxu0 %v1786
        %v2659 = vpop.f32.mrb[0].mxu0
        %v2660 = vadd.f32 %v2103, %v2659
        %v2661 = vpop.f32.mrb[0].mxu0
        %v2662 = vpop.f32.mrb[0].mxu0
        %v2663 = vadd.f32 %v2103, %v2662
        %v2664 = vpop.f32.mrb[0].mxu0
        %2665 = vmatprep.mubr.bf16.mxu0 %v1858
        %2666 = vmatmul.mubr.bf16.gmra.mrb[0].mxu0 %v1787
        %v2667 = vpop.f32.mrb[0].mxu0
        %v2668 = vadd.f32 %v2103, %v2667
        %v2669 = vpop.f32.mrb[0].mxu0
        %v2670 = vpop.f32.mrb[0].mxu0
        %v2671 = vadd.f32 %v2103, %v2670
        %v2672 = vpop.f32.mrb[0].mxu0
        %2673 = vmatprep.mubr.bf16.mxu0 %v1859
        %2674 = vmatmul.mubr.bf16.gmra.mrb[0].mxu0 %v1788
        %v2675 = vpop.f32.mrb[0].mxu0
        %v2676 = vadd.f32 %v2103, %v2675
        %v2677 = vpop.f32.mrb[0].mxu0
        %v2678 = vpop.f32.mrb[0].mxu0
        %v2679 = vadd.f32 %v2103, %v2678
        %v2680 = vpop.f32.mrb[0].mxu0
        %2681 = vmatprep.mubr.bf16.mxu0 %v1860
        %2682 = vmatmul.mubr.bf16.gmra.mrb[0].mxu0 %v1789
        %v2683 = vpop.f32.mrb[0].mxu0
        %v2684 = vadd.f32 %v2103, %v2683
        %v2685 = vpop.f32.mrb[0].mxu0
        %v2686 = vpop.f32.mrb[0].mxu0
        %v2687 = vadd.f32 %v2103, %v2686
        %v2688 = vpop.f32.mrb[0].mxu0
        %2689 = vmatprep.mubr.bf16.mxu0 %v1861
        %2690 = vmatmul.mubr.bf16.gmra.mrb[0].mxu0 %v1790
        %v2691 = vpop.f32.mrb[0].mxu0
        %v2692 = vadd.f32 %v2103, %v2691
        %v2693 = vpop.f32.mrb[0].mxu0
        %v2694 = vpop.f32.mrb[0].mxu0
        %v2695 = vadd.f32 %v2103, %v2694
        %v2696 = vpop.f32.mrb[0].mxu0
        %2697 = vmatprep.mubr.bf16.mxu0 %v1862
        %2698 = vmatmul.mubr.bf16.gmra.mrb[0].mxu0 %v1791
        %v2699 = vpop.f32.mrb[0].mxu0
        %v2700 = vadd.f32 %v2103, %v2699
        %v2701 = vpop.f32.mrb[0].mxu0
        %v2702 = vpop.f32.mrb[0].mxu0
        %v2703 = vadd.f32 %v2103, %v2702
        %v2704 = vpop.f32.mrb[0].mxu0
        %2705 = vmatprep.mubr.bf16.mxu0 %v1863
        %2706 = vmatmul.mubr.bf16.gmra.mrb[0].mxu0 %v1792
        %v2707 = vpop.f32.mrb[0].mxu0
        %v2708 = vadd.f32 %v2103, %v2707
        %v2709 = vpop.f32.mrb[0].mxu0
        %v2710 = vpop.f32.mrb[0].mxu0
        %v2711 = vadd.f32 %v2103, %v2710
        %v2712 = vpop.f32.mrb[0].mxu0
        %2713 = vmatprep.mubr.bf16.mxu0 %v1864
        %2714 = vmatmul.mubr.bf16.gmra.mrb[0].mxu0 %v1793
        %v2715 = vpop.f32.mrb[0].mxu0
        %v2716 = vadd.f32 %v2103, %v2715
        %v2717 = vpop.f32.mrb[0].mxu0
        %v2718 = vpop.f32.mrb[0].mxu0
        %v2719 = vadd.f32 %v2103, %v2718
        %v2720 = vpop.f32.mrb[0].mxu0
        %2721 = vmatprep.mubr.bf16.mxu0 %v1865
        %2722 = vmatmul.mubr.bf16.gmra.mrb[0].mxu0 %v1794
        %v2723 = vpop.f32.mrb[0].mxu0
        %v2724 = vadd.f32 %v2103, %v2723
        %v2725 = vpop.f32.mrb[0].mxu0
        %v2726 = vpop.f32.mrb[0].mxu0
        %v2727 = vadd.f32 %v2103, %v2726
        %v2728 = vpop.f32.mrb[0].mxu0
        %2729 = vmatprep.mubr.bf16.mxu0 %v1866
        %2730 = vmatmul.mubr.bf16.gmra.mrb[0].mxu0 %v1795
        %v2731 = vpop.f32.mrb[0].mxu0
        %v2732 = vadd.f32 %v2103, %v2731
        %v2733 = vpop.f32.mrb[0].mxu0
        %v2734 = vpop.f32.mrb[0].mxu0
        %v2735 = vadd.f32 %v2103, %v2734
        %v2736 = vpop.f32.mrb[0].mxu0
        %2737 = vmatprep.mubr.bf16.mxu0 %v1867
        %2738 = vmatmul.mubr.bf16.gmra.mrb[0].mxu0 %v1796
        %v2739 = vpop.f32.mrb[0].mxu0
        %v2740 = vadd.f32 %v2103, %v2739
        %v2741 = vpop.f32.mrb[0].mxu0
        %v2742 = vpop.f32.mrb[0].mxu0
        %v2743 = vadd.f32 %v2103, %v2742
        %v2744 = vpop.f32.mrb[0].mxu0
        %2745 = vmatprep.mubr.bf16.mxu0 %v1868
        %2746 = vmatmul.mubr.bf16.gmra.mrb[0].mxu0 %v1797
        %v2747 = vpop.f32.mrb[0].mxu0
        %v2748 = vadd.f32 %v2103, %v2747
        %v2749 = vpop.f32.mrb[0].mxu0
        %v2750 = vpop.f32.mrb[0].mxu0
        %v2751 = vadd.f32 %v2103, %v2750
        %v2752 = vpop.f32.mrb[0].mxu0
        %2753 = vmatprep.mubr.bf16.mxu0 %v1869
        %2754 = vmatmul.mubr.bf16.gmra.mrb[0].mxu0 %v1798
        %v2755 = vpop.f32.mrb[0].mxu0
        %v2756 = vadd.f32 %v2103, %v2755
        %v2757 = vpop.f32.mrb[0].mxu0
        %v2758 = vpop.f32.mrb[0].mxu0
        %v2759 = vadd.f32 %v2103, %v2758
        %v2760 = vpop.f32.mrb[0].mxu0
        %2761 = vmatprep.mubr.bf16.mxu0 %v1870
        %2762 = vmatmul.mubr.bf16.gmra.mrb[0].mxu0 %v1799
        %v2763 = vpop.f32.mrb[0].mxu0
        %v2764 = vadd.f32 %v2103, %v2763
        %v2765 = vpop.f32.mrb[0].mxu0
        %v2766 = vpop.f32.mrb[0].mxu0
        %v2767 = vadd.f32 %v2103, %v2766
        %v2768 = vpop.f32.mrb[0].mxu0
        %2769 = vmatprep.mubr.bf16.mxu0 %v1871
        %2770 = vmatmul.mubr.bf16.gmra.mrb[0].mxu0 %v1800
        %v2771 = vpop.f32.mrb[0].mxu0
        %v2772 = vadd.f32 %v2103, %v2771
        %v2773 = vpop.f32.mrb[0].mxu0
        %v2774 = vpop.f32.mrb[0].mxu0
        %v2775 = vadd.f32 %v2103, %v2774
        %v2776 = vpop.f32.mrb[0].mxu0
        %2777 = vmatprep.mubr.bf16.mxu0 %v1872
        %2778 = vmatmul.mubr.bf16.gmra.mrb[0].mxu0 %v1801
        %v2779 = vpop.f32.mrb[0].mxu0
        %v2780 = vadd.f32 %v2103, %v2779
        %v2781 = vpop.f32.mrb[0].mxu0
        %v2782 = vpop.f32.mrb[0].mxu0
        %v2783 = vadd.f32 %v2103, %v2782
        %v2784 = vpop.f32.mrb[0].mxu0
        %2785 = vmatprep.mubr.bf16.mxu0 %v1873
        %2786 = vmatmul.mubr.bf16.gmra.mrb[0].mxu0 %v1802
        %v2787 = vpop.f32.mrb[0].mxu0
        %v2788 = vadd.f32 %v2103, %v2787
        %v2789 = vpop.f32.mrb[0].mxu0
        %v2790 = vpop.f32.mrb[0].mxu0
        %v2791 = vadd.f32 %v2103, %v2790
        %v2792 = vpop.f32.mrb[0].mxu0
        %2793 = vmatprep.mubr.bf16.mxu0 %v1874
        %2794 = vmatmul.mubr.bf16.gmra.mrb[0].mxu0 %v1803
        %v2795 = vpop.f32.mrb[0].mxu0
        %v2796 = vadd.f32 %v2103, %v2795
        %v2797 = vpop.f32.mrb[0].mxu0
        %v2798 = vpop.f32.mrb[0].mxu0
        %v2799 = vadd.f32 %v2103, %v2798
        %v2800 = vpop.f32.mrb[0].mxu0
        %2801 = vmatprep.mubr.bf16.mxu0 %v1875
        %2802 = vmatmul.mubr.bf16.gmra.mrb[0].mxu0 %v1804
        %v2803 = vpop.f32.mrb[0].mxu0
        %v2804 = vadd.f32 %v2103, %v2803
        %v2805 = vpop.f32.mrb[0].mxu0
        %v2806 = vpop.f32.mrb[0].mxu0
        %v2807 = vadd.f32 %v2103, %v2806
        %v2808 = vpop.f32.mrb[0].mxu0
        %2809 = vmatprep.mubr.bf16.mxu0 %v1876
        %2810 = vmatmul.mubr.bf16.gmra.mrb[0].mxu0 %v1805
        %v2811 = vpop.f32.mrb[0].mxu0
        %v2812 = vadd.f32 %v2103, %v2811
        %v2813 = vpop.f32.mrb[0].mxu0
        %v2814 = vpop.f32.mrb[0].mxu0
        %v2815 = vadd.f32 %v2103, %v2814
        %v2816 = vpop.f32.mrb[0].mxu0
        %2817 = vmatprep.mubr.bf16.mxu0 %v1877
        %2818 = vmatmul.mubr.bf16.gmra.mrb[0].mxu0 %v1806
        %v2819 = vpop.f32.mrb[0].mxu0
        %v2820 = vadd.f32 %v2103, %v2819
        %v2821 = vpop.f32.mrb[0].mxu0
        %v2822 = vpop.f32.mrb[0].mxu0
        %v2823 = vadd.f32 %v2103, %v2822
        %v2824 = vpop.f32.mrb[0].mxu0
        %2825 = vdwg.mxu0
        %2826 = vmatprep.subr.bf16.mxu0 0
        %2827 = vmatpush1.bf16.msra.mxu0 %v2409
        %2828 = vmatprep.subr.bf16.mxu0 0
        %2829 = vmatpush1.bf16.msra.mxu0 %v2410
        %2830 = vmatprep.subr.bf16.mxu0 0
        %2831 = vmatpush1.bf16.msra.mxu0 %v2411
        %2832 = vmatprep.subr.bf16.mxu0 0
        %2833 = vmatpush1.bf16.msra.mxu0 %v2412
        %2834 = vmatprep.subr.bf16.mxu0 0
        %2835 = vmatpush1.bf16.msra.mxu0 %v2413
        %2836 = vmatprep.subr.bf16.mxu0 0
        %2837 = vmatpush1.bf16.msra.mxu0 %v2414
        %2838 = vmatprep.subr.bf16.mxu0 0
        %2839 = vmatpush1.bf16.msra.mxu0 %v2415
        %2840 = vmatprep.subr.bf16.mxu0 0
        %2841 = vmatpush1.bf16.msra.mxu0 %v2416
        %2842 = vmatprep.subr.bf16.mxu0 0
        %2843 = vmatpush1.bf16.msra.mxu0 %v2417
        %2844 = vmatprep.subr.bf16.mxu0 0
        %2845 = vmatpush1.bf16.msra.mxu0 %v2418
        %2846 = vmatprep.subr.bf16.mxu0 0
        %2847 = vmatpush1.bf16.msra.mxu0 %v2419
        %2848 = vmatprep.subr.bf16.mxu0 0
        %2849 = vmatpush1.bf16.msra.mxu0 %v2420
        %2850 = vmatprep.subr.bf16.mxu0 0
        %2851 = vmatpush1.bf16.msra.mxu0 %v2421
        %2852 = vmatprep.subr.bf16.mxu0 0
        %2853 = vmatpush1.bf16.msra.mxu0 %v2422
        %2854 = vmatprep.subr.bf16.mxu0 0
        %2855 = vmatpush1.bf16.msra.mxu0 %v2423
        %2856 = vmatprep.subr.bf16.mxu0 0
        %2857 = vmatpush1.bf16.msra.mxu0 %v2424
        %2858 = vmatprep.mubr.bf16.mxu0 %v1779
        %2859 = vmatmul.mubr.bf16.gmra.mrb[0].mxu0 %v1778
        %v2860 = vpop.f32.mrb[0].mxu0
        %v2861 = vadd.f32 %v2572, %v2860
        %v2862 = vpop.f32.mrb[0].mxu0
        %v2863 = vpop.f32.mrb[0].mxu0
        %v2864 = vadd.f32 %v2575, %v2863
        %v2865 = vpop.f32.mrb[0].mxu0
        %2866 = vmatprep.mubr.bf16.mxu0 %v1780
        %2867 = vmatmul.mubr.bf16.gmra.mrb[0].mxu0 %v1778
        %v2868 = vpop.f32.mrb[0].mxu0
        %v2869 = vadd.f32 %v2580, %v2868
        %v2870 = vpop.f32.mrb[0].mxu0
        %v2871 = vpop.f32.mrb[0].mxu0
        %v2872 = vadd.f32 %v2583, %v2871
        %v2873 = vpop.f32.mrb[0].mxu0
        %2874 = vmatprep.mubr.bf16.mxu0 %v1781
        %2875 = vmatmul.mubr.bf16.gmra.mrb[0].mxu0 %v1778
        %v2876 = vpop.f32.mrb[0].mxu0
        %v2877 = vadd.f32 %v2588, %v2876
        %v2878 = vpop.f32.mrb[0].mxu0
        %v2879 = vpop.f32.mrb[0].mxu0
        %v2880 = vadd.f32 %v2591, %v2879
        %v2881 = vpop.f32.mrb[0].mxu0
        %2882 = vmatprep.mubr.bf16.mxu0 %v1782
        %2883 = vmatmul.mubr.bf16.gmra.mrb[0].mxu0 %v1778
        %v2884 = vpop.f32.mrb[0].mxu0
        %v2885 = vadd.f32 %v2596, %v2884
        %v2886 = vpop.f32.mrb[0].mxu0
        %v2887 = vpop.f32.mrb[0].mxu0
        %v2888 = vadd.f32 %v2599, %v2887
        %v2889 = vpop.f32.mrb[0].mxu0
        %2890 = vmatprep.mubr.bf16.mxu0 %v1783
        %2891 = vmatmul.mubr.bf16.gmra.mrb[0].mxu0 %v1780
        %v2892 = vpop.f32.mrb[0].mxu0
        %v2893 = vadd.f32 %v2604, %v2892
        %v2894 = vpop.f32.mrb[0].mxu0
        %v2895 = vpop.f32.mrb[0].mxu0
        %v2896 = vadd.f32 %v2607, %v2895
        %v2897 = vpop.f32.mrb[0].mxu0
        %2898 = vmatprep.mubr.bf16.mxu0 %v1784
        %2899 = vmatmul.mubr.bf16.gmra.mrb[0].mxu0 %v1781
        %v2900 = vpop.f32.mrb[0].mxu0
        %v2901 = vadd.f32 %v2612, %v2900
        %v2902 = vpop.f32.mrb[0].mxu0
        %v2903 = vpop.f32.mrb[0].mxu0
        %v2904 = vadd.f32 %v2615, %v2903
        %v2905 = vpop.f32.mrb[0].mxu0
        %2906 = vmatprep.mubr.bf16.mxu0 %v1785
        %2907 = vmatmul.mubr.bf16.gmra.mrb[0].mxu0 %v1782
        %v2908 = vpop.f32.mrb[0].mxu0
        %v2909 = vadd.f32 %v2620, %v2908
        %v2910 = vpop.f32.mrb[0].mxu0
        %v2911 = vpop.f32.mrb[0].mxu0
        %v2912 = vadd.f32 %v2623, %v2911
        %v2913 = vpop.f32.mrb[0].mxu0
        %2914 = vmatprep.mubr.bf16.mxu0 %v1786
        %2915 = vmatmul.mubr.bf16.gmra.mrb[0].mxu0 %v1906
        %v2916 = vpop.f32.mrb[0].mxu0
        %v2917 = vadd.f32 %v2628, %v2916
        %v2918 = vpop.f32.mrb[0].mxu0
        %v2919 = vpop.f32.mrb[0].mxu0
        %v2920 = vadd.f32 %v2631, %v2919
        %v2921 = vpop.f32.mrb[0].mxu0
        %2922 = vmatprep.mubr.bf16.mxu0 %v1787
        %2923 = vmatmul.mubr.bf16.gmra.mrb[0].mxu0 %v1784
        %v2924 = vpop.f32.mrb[0].mxu0
        %v2925 = vadd.f32 %v2636, %v2924
        %v2926 = vpop.f32.mrb[0].mxu0
        %v2927 = vpop.f32.mrb[0].mxu0
        %v2928 = vadd.f32 %v2639, %v2927
        %v2929 = vpop.f32.mrb[0].mxu0
        %2930 = vmatprep.mubr.bf16.mxu0 %v1788
        %2931 = vmatmul.mubr.bf16.gmra.mrb[0].mxu0 %v1785
        %v2932 = vpop.f32.mrb[0].mxu0
        %v2933 = vadd.f32 %v2644, %v2932
        %v2934 = vpop.f32.mrb[0].mxu0
        %v2935 = vpop.f32.mrb[0].mxu0
        %v2936 = vadd.f32 %v2647, %v2935
        %v2937 = vpop.f32.mrb[0].mxu0
        %2938 = vmatprep.mubr.bf16.mxu0 %v1789
        %2939 = vmatmul.mubr.bf16.gmra.mrb[0].mxu0 %v1786
        %v2940 = vpop.f32.mrb[0].mxu0
        %v2941 = vadd.f32 %v2652, %v2940
        %v2942 = vpop.f32.mrb[0].mxu0
        %v2943 = vpop.f32.mrb[0].mxu0
        %v2944 = vadd.f32 %v2655, %v2943
        %v2945 = vpop.f32.mrb[0].mxu0
        %2946 = vmatprep.mubr.bf16.mxu0 %v1790
        %2947 = vmatmul.mubr.bf16.gmra.mrb[0].mxu0 %v1907
        %v2948 = vpop.f32.mrb[0].mxu0
        %v2949 = vadd.f32 %v2660, %v2948
        %v2950 = vpop.f32.mrb[0].mxu0
        %v2951 = vpop.f32.mrb[0].mxu0
        %v2952 = vadd.f32 %v2663, %v2951
        %v2953 = vpop.f32.mrb[0].mxu0
        %2954 = vmatprep.mubr.bf16.mxu0 %v1791
        %2955 = vmatmul.mubr.bf16.gmra.mrb[0].mxu0 %v1788
        %v2956 = vpop.f32.mrb[0].mxu0
        %v2957 = vadd.f32 %v2668, %v2956
        %v2958 = vpop.f32.mrb[0].mxu0
        %v2959 = vpop.f32.mrb[0].mxu0
        %v2960 = vadd.f32 %v2671, %v2959
        %v2961 = vpop.f32.mrb[0].mxu0
        %2962 = vmatprep.mubr.bf16.mxu0 %v1792
        %2963 = vmatmul.mubr.bf16.gmra.mrb[0].mxu0 %v1789
        %v2964 = vpop.f32.mrb[0].mxu0
        %v2965 = vadd.f32 %v2676, %v2964
        %v2966 = vpop.f32.mrb[0].mxu0
        %v2967 = vpop.f32.mrb[0].mxu0
        %v2968 = vadd.f32 %v2679, %v2967
        %v2969 = vpop.f32.mrb[0].mxu0
        %2970 = vmatprep.mubr.bf16.mxu0 %v1793
        %2971 = vmatmul.mubr.bf16.gmra.mrb[0].mxu0 %v1790
        %v2972 = vpop.f32.mrb[0].mxu0
        %v2973 = vadd.f32 %v2684, %v2972
        %v2974 = vpop.f32.mrb[0].mxu0
        %v2975 = vpop.f32.mrb[0].mxu0
        %v2976 = vadd.f32 %v2687, %v2975
        %v2977 = vpop.f32.mrb[0].mxu0
        %2978 = vmatprep.mubr.bf16.mxu0 %v1794
        %2979 = vmatmul.mubr.bf16.gmra.mrb[0].mxu0 %v1908
        %v2980 = vpop.f32.mrb[0].mxu0
        %v2981 = vadd.f32 %v2692, %v2980
        %v2982 = vpop.f32.mrb[0].mxu0
        %v2983 = vpop.f32.mrb[0].mxu0
        %v2984 = vadd.f32 %v2695, %v2983
        %v2985 = vpop.f32.mrb[0].mxu0
        %2986 = vmatprep.mubr.bf16.mxu0 %v1795
        %2987 = vmatmul.mubr.bf16.gmra.mrb[0].mxu0 %v1792
        %v2988 = vpop.f32.mrb[0].mxu0
        %v2989 = vadd.f32 %v2700, %v2988
        %v2990 = vpop.f32.mrb[0].mxu0
        %v2991 = vpop.f32.mrb[0].mxu0
        %v2992 = vadd.f32 %v2703, %v2991
        %v2993 = vpop.f32.mrb[0].mxu0
        %2994 = vmatprep.mubr.bf16.mxu0 %v1796
        %2995 = vmatmul.mubr.bf16.gmra.mrb[0].mxu0 %v1793
        %v2996 = vpop.f32.mrb[0].mxu0
        %v2997 = vadd.f32 %v2708, %v2996
        %v2998 = vpop.f32.mrb[0].mxu0
        %v2999 = vpop.f32.mrb[0].mxu0
        %v3000 = vadd.f32 %v2711, %v2999
        %v3001 = vpop.f32.mrb[0].mxu0
        %3002 = vmatprep.mubr.bf16.mxu0 %v1797
        %3003 = vmatmul.mubr.bf16.gmra.mrb[0].mxu0 %v1794
        %v3004 = vpop.f32.mrb[0].mxu0
        %v3005 = vadd.f32 %v2716, %v3004
        %v3006 = vpop.f32.mrb[0].mxu0
        %v3007 = vpop.f32.mrb[0].mxu0
        %v3008 = vadd.f32 %v2719, %v3007
        %v3009 = vpop.f32.mrb[0].mxu0
        %3010 = vmatprep.mubr.bf16.mxu0 %v1798
        %3011 = vmatmul.mubr.bf16.gmra.mrb[0].mxu0 %v1909
        %v3012 = vpop.f32.mrb[0].mxu0
        %v3013 = vadd.f32 %v2724, %v3012
        %v3014 = vpop.f32.mrb[0].mxu0
        %v3015 = vpop.f32.mrb[0].mxu0
        %v3016 = vadd.f32 %v2727, %v3015
        %v3017 = vpop.f32.mrb[0].mxu0
        %3018 = vmatprep.mubr.bf16.mxu0 %v1799
        %3019 = vmatmul.mubr.bf16.gmra.mrb[0].mxu0 %v1796
        %v3020 = vpop.f32.mrb[0].mxu0
        %v3021 = vadd.f32 %v2732, %v3020
        %v3022 = vpop.f32.mrb[0].mxu0
        %v3023 = vpop.f32.mrb[0].mxu0
        %v3024 = vadd.f32 %v2735, %v3023
        %v3025 = vpop.f32.mrb[0].mxu0
        %3026 = vmatprep.mubr.bf16.mxu0 %v1800
        %3027 = vmatmul.mubr.bf16.gmra.mrb[0].mxu0 %v1797
        %v3028 = vpop.f32.mrb[0].mxu0
        %v3029 = vadd.f32 %v2740, %v3028
        %v3030 = vpop.f32.mrb[0].mxu0
        %v3031 = vpop.f32.mrb[0].mxu0
        %v3032 = vadd.f32 %v2743, %v3031
        %v3033 = vpop.f32.mrb[0].mxu0
        %3034 = vmatprep.mubr.bf16.mxu0 %v1801
        %3035 = vmatmul.mubr.bf16.gmra.mrb[0].mxu0 %v1798
        %v3036 = vpop.f32.mrb[0].mxu0
        %v3037 = vadd.f32 %v2748, %v3036
        %v3038 = vpop.f32.mrb[0].mxu0
        %v3039 = vpop.f32.mrb[0].mxu0
        %v3040 = vadd.f32 %v2751, %v3039
        %v3041 = vpop.f32.mrb[0].mxu0
        %3042 = vmatprep.mubr.bf16.mxu0 %v1802
        %3043 = vmatmul.mubr.bf16.gmra.mrb[0].mxu0 %v1910
        %v3044 = vpop.f32.mrb[0].mxu0
        %v3045 = vadd.f32 %v2756, %v3044
        %v3046 = vpop.f32.mrb[0].mxu0
        %v3047 = vpop.f32.mrb[0].mxu0
        %v3048 = vadd.f32 %v2759, %v3047
        %v3049 = vpop.f32.mrb[0].mxu0
        %3050 = vmatprep.mubr.bf16.mxu0 %v1803
        %3051 = vmatmul.mubr.bf16.gmra.mrb[0].mxu0 %v1800
        %v3052 = vpop.f32.mrb[0].mxu0
        %v3053 = vadd.f32 %v2764, %v3052
        %v3054 = vpop.f32.mrb[0].mxu0
        %v3055 = vpop.f32.mrb[0].mxu0
        %v3056 = vadd.f32 %v2767, %v3055
        %v3057 = vpop.f32.mrb[0].mxu0
        %3058 = vmatprep.mubr.bf16.mxu0 %v1804
        %3059 = vmatmul.mubr.bf16.gmra.mrb[0].mxu0 %v1801
        %v3060 = vpop.f32.mrb[0].mxu0
        %v3061 = vadd.f32 %v2772, %v3060
        %v3062 = vpop.f32.mrb[0].mxu0
        %v3063 = vpop.f32.mrb[0].mxu0
        %v3064 = vadd.f32 %v2775, %v3063
        %v3065 = vpop.f32.mrb[0].mxu0
        %3066 = vmatprep.mubr.bf16.mxu0 %v1805
        %3067 = vmatmul.mubr.bf16.gmra.mrb[0].mxu0 %v1802
        %v3068 = vpop.f32.mrb[0].mxu0
        %v3069 = vadd.f32 %v2780, %v3068
        %v3070 = vpop.f32.mrb[0].mxu0
        %v3071 = vpop.f32.mrb[0].mxu0
        %v3072 = vadd.f32 %v2783, %v3071
        %v3073 = vpop.f32.mrb[0].mxu0
        %3074 = vmatprep.mubr.bf16.mxu0 %v1806
        %3075 = vmatmul.mubr.bf16.gmra.mrb[0].mxu0 %v1911
        %v3076 = vpop.f32.mrb[0].mxu0
        %v3077 = vadd.f32 %v2788, %v3076
        %v3078 = vpop.f32.mrb[0].mxu0
        %v3079 = vpop.f32.mrb[0].mxu0
        %v3080 = vadd.f32 %v2791, %v3079
        %v3081 = vpop.f32.mrb[0].mxu0
        %3082 = vmatprep.mubr.bf16.mxu0 %v1934
        %3083 = vmatmul.mubr.bf16.gmra.mrb[0].mxu0 %v1804
        %v3084 = vpop.f32.mrb[0].mxu0
        %v3085 = vadd.f32 %v2796, %v3084
        %v3086 = vpop.f32.mrb[0].mxu0
        %v3087 = vpop.f32.mrb[0].mxu0
        %v3088 = vadd.f32 %v2799, %v3087
        %v3089 = vpop.f32.mrb[0].mxu0
        %3090 = vmatprep.mubr.bf16.mxu0 %v1935
        %3091 = vmatmul.mubr.bf16.gmra.mrb[0].mxu0 %v1805
        %v3092 = vpop.f32.mrb[0].mxu0
        %v3093 = vadd.f32 %v2804, %v3092
        %v3094 = vpop.f32.mrb[0].mxu0
        %v3095 = vpop.f32.mrb[0].mxu0
        %v3096 = vadd.f32 %v2807, %v3095
        %v3097 = vpop.f32.mrb[0].mxu0
        %3098 = vmatprep.mubr.bf16.mxu0 %v1936
        %3099 = vmatmul.mubr.bf16.gmra.mrb[0].mxu0 %v1806
        %v3100 = vpop.f32.mrb[0].mxu0
        %v3101 = vadd.f32 %v2812, %v3100
        %v3102 = vpop.f32.mrb[0].mxu0
        %v3103 = vpop.f32.mrb[0].mxu0
        %v3104 = vadd.f32 %v2815, %v3103
        %v3105 = vpop.f32.mrb[0].mxu0
        %3106 = vmatprep.mubr.bf16.mxu0 %v1937
        %3107 = vmatmul.mubr.bf16.gmra.mrb[0].mxu0 %v1912
        %v3108 = vpop.f32.mrb[0].mxu0
        %v3109 = vadd.f32 %v2820, %v3108
        %v3110 = vpop.f32.mrb[0].mxu0
        %v3111 = vpop.f32.mrb[0].mxu0
        %v3112 = vadd.f32 %v2823, %v3111
        %v3113 = vpop.f32.mrb[0].mxu0
        %3114 = vdwg.mxu0
        %3115 = vmatprep.subr.bf16.mxu0 0
        %3116 = vmatpush1.bf16.msra.mxu0 %v2425
        %3117 = vmatprep.subr.bf16.mxu0 0
        %3118 = vmatpush1.bf16.msra.mxu0 %v2426
        %3119 = vmatprep.subr.bf16.mxu0 0
        %3120 = vmatpush1.bf16.msra.mxu0 %v2427
        %3121 = vmatprep.subr.bf16.mxu0 0
        %3122 = vmatpush1.bf16.msra.mxu0 %v2428
        %3123 = vmatprep.subr.bf16.mxu0 0
        %3124 = vmatpush1.bf16.msra.mxu0 %v2429
        %3125 = vmatprep.subr.bf16.mxu0 0
        %3126 = vmatpush1.bf16.msra.mxu0 %v2430
        %3127 = vmatprep.subr.bf16.mxu0 0
        %3128 = vmatpush1.bf16.msra.mxu0 %v2431
        %3129 = vmatprep.subr.bf16.mxu0 0
        %3130 = vmatpush1.bf16.msra.mxu0 %v2432
        %3131 = vmatprep.subr.bf16.mxu0 0
        %3132 = vmatpush1.bf16.msra.mxu0 %v2433
        %3133 = vmatprep.subr.bf16.mxu0 0
        %3134 = vmatpush1.bf16.msra.mxu0 %v2434
        %3135 = vmatprep.subr.bf16.mxu0 0
        %3136 = vmatpush1.bf16.msra.mxu0 %v2435
        %3137 = vmatprep.subr.bf16.mxu0 0
        %3138 = vmatpush1.bf16.msra.mxu0 %v2436
        %3139 = vmatprep.subr.bf16.mxu0 0
        %3140 = vmatpush1.bf16.msra.mxu0 %v2437
        %3141 = vmatprep.subr.bf16.mxu0 0
        %3142 = vmatpush1.bf16.msra.mxu0 %v2438
        %3143 = vmatprep.subr.bf16.mxu0 0
        %3144 = vmatpush1.bf16.msra.mxu0 %v2439
        %3145 = vmatprep.subr.bf16.mxu0 0
        %3146 = vmatpush1.bf16.msra.mxu0 %v2440
        %3147 = vmatprep.mubr.bf16.mxu0 %v1780
        %3148 = vmatmul.mubr.bf16.gmra.mrb[0].mxu0 %v1850
        %v3149 = vpop.f32.mrb[0].mxu0
        %v3150 = vadd.f32 %v2861, %v3149
        %v3151 = vpop.f32.mrb[0].mxu0
        %v3152 = vpop.f32.mrb[0].mxu0
        %v3153 = vadd.f32 %v2864, %v3152
        %v3154 = vpop.f32.mrb[0].mxu0
        %3155 = vmatprep.mubr.bf16.mxu0 %v1781
        %3156 = vmatmul.mubr.bf16.gmra.mrb[0].mxu0 %v1851
        %v3157 = vpop.f32.mrb[0].mxu0
        %v3158 = vadd.f32 %v2869, %v3157
        %v3159 = vpop.f32.mrb[0].mxu0
        %v3160 = vpop.f32.mrb[0].mxu0
        %v3161 = vadd.f32 %v2872, %v3160
        %v3162 = vpop.f32.mrb[0].mxu0
        %3163 = vmatprep.mubr.bf16.mxu0 %v1782
        %3164 = vmatmul.mubr.bf16.gmra.mrb[0].mxu0 %v1852
        %v3165 = vpop.f32.mrb[0].mxu0
        %v3166 = vadd.f32 %v2877, %v3165
        %v3167 = vpop.f32.mrb[0].mxu0
        %v3168 = vpop.f32.mrb[0].mxu0
        %v3169 = vadd.f32 %v2880, %v3168
        %v3170 = vpop.f32.mrb[0].mxu0
        %3171 = vmatprep.mubr.bf16.mxu0 %v1906
        %3172 = vmatmul.mubr.bf16.gmra.mrb[0].mxu0 %v1853
        %v3173 = vpop.f32.mrb[0].mxu0
        %v3174 = vadd.f32 %v2885, %v3173
        %v3175 = vpop.f32.mrb[0].mxu0
        %v3176 = vpop.f32.mrb[0].mxu0
        %v3177 = vadd.f32 %v2888, %v3176
        %v3178 = vpop.f32.mrb[0].mxu0
        %3179 = vmatprep.mubr.bf16.mxu0 %v1784
        %3180 = vmatmul.mubr.bf16.gmra.mrb[0].mxu0 %v1854
        %v3181 = vpop.f32.mrb[0].mxu0
        %v3182 = vadd.f32 %v2893, %v3181
        %v3183 = vpop.f32.mrb[0].mxu0
        %v3184 = vpop.f32.mrb[0].mxu0
        %v3185 = vadd.f32 %v2896, %v3184
        %v3186 = vpop.f32.mrb[0].mxu0
        %3187 = vmatprep.mubr.bf16.mxu0 %v1785
        %3188 = vmatmul.mubr.bf16.gmra.mrb[0].mxu0 %v1855
        %v3189 = vpop.f32.mrb[0].mxu0
        %v3190 = vadd.f32 %v2901, %v3189
        %v3191 = vpop.f32.mrb[0].mxu0
        %v3192 = vpop.f32.mrb[0].mxu0
        %v3193 = vadd.f32 %v2904, %v3192
        %v3194 = vpop.f32.mrb[0].mxu0
        %3195 = vmatprep.mubr.bf16.mxu0 %v1786
        %3196 = vmatmul.mubr.bf16.gmra.mrb[0].mxu0 %v1856
        %v3197 = vpop.f32.mrb[0].mxu0
        %v3198 = vadd.f32 %v2909, %v3197
        %v3199 = vpop.f32.mrb[0].mxu0
        %v3200 = vpop.f32.mrb[0].mxu0
        %v3201 = vadd.f32 %v2912, %v3200
        %v3202 = vpop.f32.mrb[0].mxu0
        %3203 = vmatprep.mubr.bf16.mxu0 %v1907
        %3204 = vmatmul.mubr.bf16.gmra.mrb[0].mxu0 %v1857
        %v3205 = vpop.f32.mrb[0].mxu0
        %v3206 = vadd.f32 %v2917, %v3205
        %v3207 = vpop.f32.mrb[0].mxu0
        %v3208 = vpop.f32.mrb[0].mxu0
        %v3209 = vadd.f32 %v2920, %v3208
        %v3210 = vpop.f32.mrb[0].mxu0
        %3211 = vmatprep.mubr.bf16.mxu0 %v1788
        %3212 = vmatmul.mubr.bf16.gmra.mrb[0].mxu0 %v1858
        %v3213 = vpop.f32.mrb[0].mxu0
        %v3214 = vadd.f32 %v2925, %v3213
        %v3215 = vpop.f32.mrb[0].mxu0
        %v3216 = vpop.f32.mrb[0].mxu0
        %v3217 = vadd.f32 %v2928, %v3216
        %v3218 = vpop.f32.mrb[0].mxu0
        %3219 = vmatprep.mubr.bf16.mxu0 %v1789
        %3220 = vmatmul.mubr.bf16.gmra.mrb[0].mxu0 %v1859
        %v3221 = vpop.f32.mrb[0].mxu0
        %v3222 = vadd.f32 %v2933, %v3221
        %v3223 = vpop.f32.mrb[0].mxu0
        %v3224 = vpop.f32.mrb[0].mxu0
        %v3225 = vadd.f32 %v2936, %v3224
        %v3226 = vpop.f32.mrb[0].mxu0
        %3227 = vmatprep.mubr.bf16.mxu0 %v1790
        %3228 = vmatmul.mubr.bf16.gmra.mrb[0].mxu0 %v1860
        %v3229 = vpop.f32.mrb[0].mxu0
        %v3230 = vadd.f32 %v2941, %v3229
        %v3231 = vpop.f32.mrb[0].mxu0
        %v3232 = vpop.f32.mrb[0].mxu0
        %v3233 = vadd.f32 %v2944, %v3232
        %v3234 = vpop.f32.mrb[0].mxu0
        %3235 = vmatprep.mubr.bf16.mxu0 %v1908
        %3236 = vmatmul.mubr.bf16.gmra.mrb[0].mxu0 %v1861
        %v3237 = vpop.f32.mrb[0].mxu0
        %v3238 = vadd.f32 %v2949, %v3237
        %v3239 = vpop.f32.mrb[0].mxu0
        %v3240 = vpop.f32.mrb[0].mxu0
        %v3241 = vadd.f32 %v2952, %v3240
        %v3242 = vpop.f32.mrb[0].mxu0
        %3243 = vmatprep.mubr.bf16.mxu0 %v1792
        %3244 = vmatmul.mubr.bf16.gmra.mrb[0].mxu0 %v1862
        %v3245 = vpop.f32.mrb[0].mxu0
        %v3246 = vadd.f32 %v2957, %v3245
        %v3247 = vpop.f32.mrb[0].mxu0
        %v3248 = vpop.f32.mrb[0].mxu0
        %v3249 = vadd.f32 %v2960, %v3248
        %v3250 = vpop.f32.mrb[0].mxu0
        %3251 = vmatprep.mubr.bf16.mxu0 %v1793
        %3252 = vmatmul.mubr.bf16.gmra.mrb[0].mxu0 %v1863
        %v3253 = vpop.f32.mrb[0].mxu0
        %v3254 = vadd.f32 %v2965, %v3253
        %v3255 = vpop.f32.mrb[0].mxu0
        %v3256 = vpop.f32.mrb[0].mxu0
        %v3257 = vadd.f32 %v2968, %v3256
        %v3258 = vpop.f32.mrb[0].mxu0
        %3259 = vmatprep.mubr.bf16.mxu0 %v1794
        %3260 = vmatmul.mubr.bf16.gmra.mrb[0].mxu0 %v1864
        %v3261 = vpop.f32.mrb[0].mxu0
        %v3262 = vadd.f32 %v2973, %v3261
        %v3263 = vpop.f32.mrb[0].mxu0
        %v3264 = vpop.f32.mrb[0].mxu0
        %v3265 = vadd.f32 %v2976, %v3264
        %v3266 = vpop.f32.mrb[0].mxu0
        %3267 = vmatprep.mubr.bf16.mxu0 %v1909
        %3268 = vmatmul.mubr.bf16.gmra.mrb[0].mxu0 %v1865
        %v3269 = vpop.f32.mrb[0].mxu0
        %v3270 = vadd.f32 %v2981, %v3269
        %v3271 = vpop.f32.mrb[0].mxu0
        %v3272 = vpop.f32.mrb[0].mxu0
        %v3273 = vadd.f32 %v2984, %v3272
        %v3274 = vpop.f32.mrb[0].mxu0
        %3275 = vmatprep.mubr.bf16.mxu0 %v1796
        %3276 = vmatmul.mubr.bf16.gmra.mrb[0].mxu0 %v1866
        %v3277 = vpop.f32.mrb[0].mxu0
        %v3278 = vadd.f32 %v2989, %v3277
        %v3279 = vpop.f32.mrb[0].mxu0
        %v3280 = vpop.f32.mrb[0].mxu0
        %v3281 = vadd.f32 %v2992, %v3280
        %v3282 = vpop.f32.mrb[0].mxu0
        %3283 = vmatprep.mubr.bf16.mxu0 %v1797
        %3284 = vmatmul.mubr.bf16.gmra.mrb[0].mxu0 %v1867
        %v3285 = vpop.f32.mrb[0].mxu0
        %v3286 = vadd.f32 %v2997, %v3285
        %v3287 = vpop.f32.mrb[0].mxu0
        %v3288 = vpop.f32.mrb[0].mxu0
        %v3289 = vadd.f32 %v3000, %v3288
        %v3290 = vpop.f32.mrb[0].mxu0
        %3291 = vmatprep.mubr.bf16.mxu0 %v1798
        %3292 = vmatmul.mubr.bf16.gmra.mrb[0].mxu0 %v1868
        %v3293 = vpop.f32.mrb[0].mxu0
        %v3294 = vadd.f32 %v3005, %v3293
        %v3295 = vpop.f32.mrb[0].mxu0
        %v3296 = vpop.f32.mrb[0].mxu0
        %v3297 = vadd.f32 %v3008, %v3296
        %v3298 = vpop.f32.mrb[0].mxu0
        %3299 = vmatprep.mubr.bf16.mxu0 %v1910
        %3300 = vmatmul.mubr.bf16.gmra.mrb[0].mxu0 %v1869
        %v3301 = vpop.f32.mrb[0].mxu0
        %v3302 = vadd.f32 %v3013, %v3301
        %v3303 = vpop.f32.mrb[0].mxu0
        %v3304 = vpop.f32.mrb[0].mxu0
        %v3305 = vadd.f32 %v3016, %v3304
        %v3306 = vpop.f32.mrb[0].mxu0
        %3307 = vmatprep.mubr.bf16.mxu0 %v1800
        %3308 = vmatmul.mubr.bf16.gmra.mrb[0].mxu0 %v1870
        %v3309 = vpop.f32.mrb[0].mxu0
        %v3310 = vadd.f32 %v3021, %v3309
        %v3311 = vpop.f32.mrb[0].mxu0
        %v3312 = vpop.f32.mrb[0].mxu0
        %v3313 = vadd.f32 %v3024, %v3312
        %v3314 = vpop.f32.mrb[0].mxu0
        %3315 = vmatprep.mubr.bf16.mxu0 %v1801
        %3316 = vmatmul.mubr.bf16.gmra.mrb[0].mxu0 %v1871
        %v3317 = vpop.f32.mrb[0].mxu0
        %v3318 = vadd.f32 %v3029, %v3317
        %v3319 = vpop.f32.mrb[0].mxu0
        %v3320 = vpop.f32.mrb[0].mxu0
        %v3321 = vadd.f32 %v3032, %v3320
        %v3322 = vpop.f32.mrb[0].mxu0
        %3323 = vmatprep.mubr.bf16.mxu0 %v1802
        %3324 = vmatmul.mubr.bf16.gmra.mrb[0].mxu0 %v1872
        %v3325 = vpop.f32.mrb[0].mxu0
        %v3326 = vadd.f32 %v3037, %v3325
        %v3327 = vpop.f32.mrb[0].mxu0
        %v3328 = vpop.f32.mrb[0].mxu0
        %v3329 = vadd.f32 %v3040, %v3328
        %v3330 = vpop.f32.mrb[0].mxu0
        %3331 = vmatprep.mubr.bf16.mxu0 %v1911
        %3332 = vmatmul.mubr.bf16.gmra.mrb[0].mxu0 %v1873
        %v3333 = vpop.f32.mrb[0].mxu0
        %v3334 = vadd.f32 %v3045, %v3333
        %v3335 = vpop.f32.mrb[0].mxu0
        %v3336 = vpop.f32.mrb[0].mxu0
        %v3337 = vadd.f32 %v3048, %v3336
        %v3338 = vpop.f32.mrb[0].mxu0
        %3339 = vmatprep.mubr.bf16.mxu0 %v1804
        %3340 = vmatmul.mubr.bf16.gmra.mrb[0].mxu0 %v1874
        %v3341 = vpop.f32.mrb[0].mxu0
        %v3342 = vadd.f32 %v3053, %v3341
        %v3343 = vpop.f32.mrb[0].mxu0
        %v3344 = vpop.f32.mrb[0].mxu0
        %v3345 = vadd.f32 %v3056, %v3344
        %v3346 = vpop.f32.mrb[0].mxu0
        %3347 = vmatprep.mubr.bf16.mxu0 %v1805
        %3348 = vmatmul.mubr.bf16.gmra.mrb[0].mxu0 %v1875
        %v3349 = vpop.f32.mrb[0].mxu0
        %v3350 = vadd.f32 %v3061, %v3349
        %v3351 = vpop.f32.mrb[0].mxu0
        %v3352 = vpop.f32.mrb[0].mxu0
        %v3353 = vadd.f32 %v3064, %v3352
        %v3354 = vpop.f32.mrb[0].mxu0
        %3355 = vmatprep.mubr.bf16.mxu0 %v1806
        %3356 = vmatmul.mubr.bf16.gmra.mrb[0].mxu0 %v1876
        %v3357 = vpop.f32.mrb[0].mxu0
        %v3358 = vadd.f32 %v3069, %v3357
        %v3359 = vpop.f32.mrb[0].mxu0
        %v3360 = vpop.f32.mrb[0].mxu0
        %v3361 = vadd.f32 %v3072, %v3360
        %v3362 = vpop.f32.mrb[0].mxu0
        %3363 = vmatprep.mubr.bf16.mxu0 %v1912
        %3364 = vmatmul.mubr.bf16.gmra.mrb[0].mxu0 %v1877
        %v3365 = vpop.f32.mrb[0].mxu0
        %v3366 = vadd.f32 %v3077, %v3365
        %v3367 = vpop.f32.mrb[0].mxu0
        %v3368 = vpop.f32.mrb[0].mxu0
        %v3369 = vadd.f32 %v3080, %v3368
        %v3370 = vpop.f32.mrb[0].mxu0
        %3371 = vmatprep.mubr.bf16.mxu0 %v1935
        %3372 = vmatmul.mubr.bf16.gmra.mrb[0].mxu0 %v1944
        %v3373 = vpop.f32.mrb[0].mxu0
        %v3374 = vadd.f32 %v3085, %v3373
        %v3375 = vpop.f32.mrb[0].mxu0
        %v3376 = vpop.f32.mrb[0].mxu0
        %v3377 = vadd.f32 %v3088, %v3376
        %v3378 = vpop.f32.mrb[0].mxu0
        %3379 = vmatprep.mubr.bf16.mxu0 %v1936
        %3380 = vmatmul.mubr.bf16.gmra.mrb[0].mxu0 %v1945
        %v3381 = vpop.f32.mrb[0].mxu0
        %v3382 = vadd.f32 %v3093, %v3381
        %v3383 = vpop.f32.mrb[0].mxu0
        %v3384 = vpop.f32.mrb[0].mxu0
        %v3385 = vadd.f32 %v3096, %v3384
        %v3386 = vpop.f32.mrb[0].mxu0
        %3387 = vmatprep.mubr.bf16.mxu0 %v1937
        %3388 = vmatmul.mubr.bf16.gmra.mrb[0].mxu0 %v1946
        %v3389 = vpop.f32.mrb[0].mxu0
        %v3390 = vadd.f32 %v3101, %v3389
        %v3391 = vpop.f32.mrb[0].mxu0
        %v3392 = vpop.f32.mrb[0].mxu0
        %v3393 = vadd.f32 %v3104, %v3392
        %v3394 = vpop.f32.mrb[0].mxu0
        %3395 = vmatprep.mubr.bf16.mxu0 %v1952
        %3396 = vmatmul.mubr.bf16.gmra.mrb[0].mxu0 %v1947
        %v3397 = vpop.f32.mrb[0].mxu0
        %v3398 = vadd.f32 %v3109, %v3397
        %v3399 = vpop.f32.mrb[0].mxu0
        %v3400 = vpop.f32.mrb[0].mxu0
        %v3401 = vadd.f32 %v3112, %v3400
        %v3402 = vpop.f32.mrb[0].mxu0
        %3403 = vdwg.mxu0
        %3404 = vmatprep.subr.bf16.mxu0 0
        %3405 = vmatpush1.bf16.msra.mxu0 %v2441
        %3406 = vmatprep.subr.bf16.mxu0 0
        %3407 = vmatpush1.bf16.msra.mxu0 %v2442
        %3408 = vmatprep.subr.bf16.mxu0 0
        %3409 = vmatpush1.bf16.msra.mxu0 %v2443
        %3410 = vmatprep.subr.bf16.mxu0 0
        %3411 = vmatpush1.bf16.msra.mxu0 %v2444
        %3412 = vmatprep.subr.bf16.mxu0 0
        %3413 = vmatpush1.bf16.msra.mxu0 %v2445
        %3414 = vmatprep.subr.bf16.mxu0 0
        %3415 = vmatpush1.bf16.msra.mxu0 %v2446
        %3416 = vmatprep.subr.bf16.mxu0 0
        %3417 = vmatpush1.bf16.msra.mxu0 %v2447
        %3418 = vmatprep.subr.bf16.mxu0 0
        %3419 = vmatpush1.bf16.msra.mxu0 %v2448
        %3420 = vmatprep.subr.bf16.mxu0 0
        %3421 = vmatpush1.bf16.msra.mxu0 %v2449
        %3422 = vmatprep.subr.bf16.mxu0 0
        %3423 = vmatpush1.bf16.msra.mxu0 %v2450
        %3424 = vmatprep.subr.bf16.mxu0 0
        %3425 = vmatpush1.bf16.msra.mxu0 %v2451
        %3426 = vmatprep.subr.bf16.mxu0 0
        %3427 = vmatpush1.bf16.msra.mxu0 %v2452
        %3428 = vmatprep.subr.bf16.mxu0 0
        %3429 = vmatpush1.bf16.msra.mxu0 %v2453
        %3430 = vmatprep.subr.bf16.mxu0 0
        %3431 = vmatpush1.bf16.msra.mxu0 %v2454
        %3432 = vmatprep.subr.bf16.mxu0 0
        %3433 = vmatpush1.bf16.msra.mxu0 %v2455
        %3434 = vmatprep.subr.bf16.mxu0 0
        %3435 = vmatpush1.bf16.msra.mxu0 %v2456
        %3436 = vmatprep.mubr.bf16.mxu0 %v1854
        %3437 = vmatmul.mubr.bf16.gmra.mrb[0].mxu0 %v1783
        %v3438 = vpop.f32.mrb[0].mxu0
        %v3439 = vadd.f32 %v3150, %v3438
        %v3440 = vpop.f32.mrb[0].mxu0
        %v3441 = vpop.f32.mrb[0].mxu0
        %v3442 = vadd.f32 %v3153, %v3441
        %v3443 = vpop.f32.mrb[0].mxu0
        %3444 = vmatprep.mubr.bf16.mxu0 %v1855
        %3445 = vmatmul.mubr.bf16.gmra.mrb[0].mxu0 %v1784
        %v3446 = vpop.f32.mrb[0].mxu0
        %v3447 = vadd.f32 %v3158, %v3446
        %v3448 = vpop.f32.mrb[0].mxu0
        %v3449 = vpop.f32.mrb[0].mxu0
        %v3450 = vadd.f32 %v3161, %v3449
        %v3451 = vpop.f32.mrb[0].mxu0
        %3452 = vmatprep.mubr.bf16.mxu0 %v1856
        %3453 = vmatmul.mubr.bf16.gmra.mrb[0].mxu0 %v1785
        %v3454 = vpop.f32.mrb[0].mxu0
        %v3455 = vadd.f32 %v3166, %v3454
        %v3456 = vpop.f32.mrb[0].mxu0
        %v3457 = vpop.f32.mrb[0].mxu0
        %v3458 = vadd.f32 %v3169, %v3457
        %v3459 = vpop.f32.mrb[0].mxu0
        %3460 = vmatprep.mubr.bf16.mxu0 %v1857
        %3461 = vmatmul.mubr.bf16.gmra.mrb[0].mxu0 %v1786
        %v3462 = vpop.f32.mrb[0].mxu0
        %v3463 = vadd.f32 %v3174, %v3462
        %v3464 = vpop.f32.mrb[0].mxu0
        %v3465 = vpop.f32.mrb[0].mxu0
        %v3466 = vadd.f32 %v3177, %v3465
        %v3467 = vpop.f32.mrb[0].mxu0
        %3468 = vmatprep.mubr.bf16.mxu0 %v1858
        %3469 = vmatmul.mubr.bf16.gmra.mrb[0].mxu0 %v1787
        %v3470 = vpop.f32.mrb[0].mxu0
        %v3471 = vadd.f32 %v3182, %v3470
        %v3472 = vpop.f32.mrb[0].mxu0
        %v3473 = vpop.f32.mrb[0].mxu0
        %v3474 = vadd.f32 %v3185, %v3473
        %v3475 = vpop.f32.mrb[0].mxu0
        %3476 = vmatprep.mubr.bf16.mxu0 %v1859
        %3477 = vmatmul.mubr.bf16.gmra.mrb[0].mxu0 %v1788
        %v3478 = vpop.f32.mrb[0].mxu0
        %v3479 = vadd.f32 %v3190, %v3478
        %v3480 = vpop.f32.mrb[0].mxu0
        %v3481 = vpop.f32.mrb[0].mxu0
        %v3482 = vadd.f32 %v3193, %v3481
        %v3483 = vpop.f32.mrb[0].mxu0
        %3484 = vmatprep.mubr.bf16.mxu0 %v1860
        %3485 = vmatmul.mubr.bf16.gmra.mrb[0].mxu0 %v1789
        %v3486 = vpop.f32.mrb[0].mxu0
        %v3487 = vadd.f32 %v3198, %v3486
        %v3488 = vpop.f32.mrb[0].mxu0
        %v3489 = vpop.f32.mrb[0].mxu0
        %v3490 = vadd.f32 %v3201, %v3489
        %v3491 = vpop.f32.mrb[0].mxu0
        %3492 = vmatprep.mubr.bf16.mxu0 %v1861
        %3493 = vmatmul.mubr.bf16.gmra.mrb[0].mxu0 %v1790
        %v3494 = vpop.f32.mrb[0].mxu0
        %v3495 = vadd.f32 %v3206, %v3494
        %v3496 = vpop.f32.mrb[0].mxu0
        %v3497 = vpop.f32.mrb[0].mxu0
        %v3498 = vadd.f32 %v3209, %v3497
        %v3499 = vpop.f32.mrb[0].mxu0
        %3500 = vmatprep.mubr.bf16.mxu0 %v1862
        %3501 = vmatmul.mubr.bf16.gmra.mrb[0].mxu0 %v1791
        %v3502 = vpop.f32.mrb[0].mxu0
        %v3503 = vadd.f32 %v3214, %v3502
        %v3504 = vpop.f32.mrb[0].mxu0
        %v3505 = vpop.f32.mrb[0].mxu0
        %v3506 = vadd.f32 %v3217, %v3505
        %v3507 = vpop.f32.mrb[0].mxu0
        %3508 = vmatprep.mubr.bf16.mxu0 %v1863
        %3509 = vmatmul.mubr.bf16.gmra.mrb[0].mxu0 %v1792
        %v3510 = vpop.f32.mrb[0].mxu0
        %v3511 = vadd.f32 %v3222, %v3510
        %v3512 = vpop.f32.mrb[0].mxu0
        %v3513 = vpop.f32.mrb[0].mxu0
        %v3514 = vadd.f32 %v3225, %v3513
        %v3515 = vpop.f32.mrb[0].mxu0
        %3516 = vmatprep.mubr.bf16.mxu0 %v1864
        %3517 = vmatmul.mubr.bf16.gmra.mrb[0].mxu0 %v1793
        %v3518 = vpop.f32.mrb[0].mxu0
        %v3519 = vadd.f32 %v3230, %v3518
        %v3520 = vpop.f32.mrb[0].mxu0
        %v3521 = vpop.f32.mrb[0].mxu0
        %v3522 = vadd.f32 %v3233, %v3521
        %v3523 = vpop.f32.mrb[0].mxu0
        %3524 = vmatprep.mubr.bf16.mxu0 %v1865
        %3525 = vmatmul.mubr.bf16.gmra.mrb[0].mxu0 %v1794
        %v3526 = vpop.f32.mrb[0].mxu0
        %v3527 = vadd.f32 %v3238, %v3526
        %v3528 = vpop.f32.mrb[0].mxu0
        %v3529 = vpop.f32.mrb[0].mxu0
        %v3530 = vadd.f32 %v3241, %v3529
        %v3531 = vpop.f32.mrb[0].mxu0
        %3532 = vmatprep.mubr.bf16.mxu0 %v1866
        %3533 = vmatmul.mubr.bf16.gmra.mrb[0].mxu0 %v1795
        %v3534 = vpop.f32.mrb[0].mxu0
        %v3535 = vadd.f32 %v3246, %v3534
        %v3536 = vpop.f32.mrb[0].mxu0
        %v3537 = vpop.f32.mrb[0].mxu0
        %v3538 = vadd.f32 %v3249, %v3537
        %v3539 = vpop.f32.mrb[0].mxu0
        %3540 = vmatprep.mubr.bf16.mxu0 %v1867
        %3541 = vmatmul.mubr.bf16.gmra.mrb[0].mxu0 %v1796
        %v3542 = vpop.f32.mrb[0].mxu0
        %v3543 = vadd.f32 %v3254, %v3542
        %v3544 = vpop.f32.mrb[0].mxu0
        %v3545 = vpop.f32.mrb[0].mxu0
        %v3546 = vadd.f32 %v3257, %v3545
        %v3547 = vpop.f32.mrb[0].mxu0
        %3548 = vmatprep.mubr.bf16.mxu0 %v1868
        %3549 = vmatmul.mubr.bf16.gmra.mrb[0].mxu0 %v1797
        %v3550 = vpop.f32.mrb[0].mxu0
        %v3551 = vadd.f32 %v3262, %v3550
        %v3552 = vpop.f32.mrb[0].mxu0
        %v3553 = vpop.f32.mrb[0].mxu0
        %v3554 = vadd.f32 %v3265, %v3553
        %v3555 = vpop.f32.mrb[0].mxu0
        %3556 = vmatprep.mubr.bf16.mxu0 %v1869
        %3557 = vmatmul.mubr.bf16.gmra.mrb[0].mxu0 %v1798
        %v3558 = vpop.f32.mrb[0].mxu0
        %v3559 = vadd.f32 %v3270, %v3558
        %v3560 = vpop.f32.mrb[0].mxu0
        %v3561 = vpop.f32.mrb[0].mxu0
        %v3562 = vadd.f32 %v3273, %v3561
        %v3563 = vpop.f32.mrb[0].mxu0
        %3564 = vmatprep.mubr.bf16.mxu0 %v1870
        %3565 = vmatmul.mubr.bf16.gmra.mrb[0].mxu0 %v1799
        %v3566 = vpop.f32.mrb[0].mxu0
        %v3567 = vadd.f32 %v3278, %v3566
        %v3568 = vpop.f32.mrb[0].mxu0
        %v3569 = vpop.f32.mrb[0].mxu0
        %v3570 = vadd.f32 %v3281, %v3569
        %v3571 = vpop.f32.mrb[0].mxu0
        %3572 = vmatprep.mubr.bf16.mxu0 %v1871
        %3573 = vmatmul.mubr.bf16.gmra.mrb[0].mxu0 %v1800
        %v3574 = vpop.f32.mrb[0].mxu0
        %v3575 = vadd.f32 %v3286, %v3574
        %v3576 = vpop.f32.mrb[0].mxu0
        %v3577 = vpop.f32.mrb[0].mxu0
        %v3578 = vadd.f32 %v3289, %v3577
        %v3579 = vpop.f32.mrb[0].mxu0
        %3580 = vmatprep.mubr.bf16.mxu0 %v1872
        %3581 = vmatmul.mubr.bf16.gmra.mrb[0].mxu0 %v1801
        %v3582 = vpop.f32.mrb[0].mxu0
        %v3583 = vadd.f32 %v3294, %v3582
        %v3584 = vpop.f32.mrb[0].mxu0
        %v3585 = vpop.f32.mrb[0].mxu0
        %v3586 = vadd.f32 %v3297, %v3585
        %v3587 = vpop.f32.mrb[0].mxu0
        %3588 = vmatprep.mubr.bf16.mxu0 %v1873
        %3589 = vmatmul.mubr.bf16.gmra.mrb[0].mxu0 %v1802
        %v3590 = vpop.f32.mrb[0].mxu0
        %v3591 = vadd.f32 %v3302, %v3590
        %v3592 = vpop.f32.mrb[0].mxu0
        %v3593 = vpop.f32.mrb[0].mxu0
        %v3594 = vadd.f32 %v3305, %v3593
        %v3595 = vpop.f32.mrb[0].mxu0
        %3596 = vmatprep.mubr.bf16.mxu0 %v1874
        %3597 = vmatmul.mubr.bf16.gmra.mrb[0].mxu0 %v1803
        %v3598 = vpop.f32.mrb[0].mxu0
        %v3599 = vadd.f32 %v3310, %v3598
        %v3600 = vpop.f32.mrb[0].mxu0
        %v3601 = vpop.f32.mrb[0].mxu0
        %v3602 = vadd.f32 %v3313, %v3601
        %v3603 = vpop.f32.mrb[0].mxu0
        %3604 = vmatprep.mubr.bf16.mxu0 %v1875
        %3605 = vmatmul.mubr.bf16.gmra.mrb[0].mxu0 %v1804
        %v3606 = vpop.f32.mrb[0].mxu0
        %v3607 = vadd.f32 %v3318, %v3606
        %v3608 = vpop.f32.mrb[0].mxu0
        %v3609 = vpop.f32.mrb[0].mxu0
        %v3610 = vadd.f32 %v3321, %v3609
        %v3611 = vpop.f32.mrb[0].mxu0
        %3612 = vmatprep.mubr.bf16.mxu0 %v1876
        %3613 = vmatmul.mubr.bf16.gmra.mrb[0].mxu0 %v1805
        %v3614 = vpop.f32.mrb[0].mxu0
        %v3615 = vadd.f32 %v3326, %v3614
        %v3616 = vpop.f32.mrb[0].mxu0
        %v3617 = vpop.f32.mrb[0].mxu0
        %v3618 = vadd.f32 %v3329, %v3617
        %v3619 = vpop.f32.mrb[0].mxu0
        %3620 = vmatprep.mubr.bf16.mxu0 %v1877
        %3621 = vmatmul.mubr.bf16.gmra.mrb[0].mxu0 %v1806
        %v3622 = vpop.f32.mrb[0].mxu0
        %v3623 = vadd.f32 %v3334, %v3622
        %v3624 = vpop.f32.mrb[0].mxu0
        %v3625 = vpop.f32.mrb[0].mxu0
        %v3626 = vadd.f32 %v3337, %v3625
        %v3627 = vpop.f32.mrb[0].mxu0
        %3628 = vmatprep.mubr.bf16.mxu0 %v1944
        %3629 = vmatmul.mubr.bf16.gmra.mrb[0].mxu0 %v1934
        %v3630 = vpop.f32.mrb[0].mxu0
        %v3631 = vadd.f32 %v3342, %v3630
        %v3632 = vpop.f32.mrb[0].mxu0
        %v3633 = vpop.f32.mrb[0].mxu0
        %v3634 = vadd.f32 %v3345, %v3633
        %v3635 = vpop.f32.mrb[0].mxu0
        %3636 = vmatprep.mubr.bf16.mxu0 %v1945
        %3637 = vmatmul.mubr.bf16.gmra.mrb[0].mxu0 %v1935
        %v3638 = vpop.f32.mrb[0].mxu0
        %v3639 = vadd.f32 %v3350, %v3638
        %v3640 = vpop.f32.mrb[0].mxu0
        %v3641 = vpop.f32.mrb[0].mxu0
        %v3642 = vadd.f32 %v3353, %v3641
        %v3643 = vpop.f32.mrb[0].mxu0
        %3644 = vmatprep.mubr.bf16.mxu0 %v1946
        %3645 = vmatmul.mubr.bf16.gmra.mrb[0].mxu0 %v1936
        %v3646 = vpop.f32.mrb[0].mxu0
        %v3647 = vadd.f32 %v3358, %v3646
        %v3648 = vpop.f32.mrb[0].mxu0
        %v3649 = vpop.f32.mrb[0].mxu0
        %v3650 = vadd.f32 %v3361, %v3649
        %v3651 = vpop.f32.mrb[0].mxu0
        %3652 = vmatprep.mubr.bf16.mxu0 %v1947
        %3653 = vmatmul.mubr.bf16.gmra.mrb[0].mxu0 %v1937
        %v3654 = vpop.f32.mrb[0].mxu0
        %v3655 = vadd.f32 %v3366, %v3654
        %v3656 = vpop.f32.mrb[0].mxu0
        %v3657 = vpop.f32.mrb[0].mxu0
        %v3658 = vadd.f32 %v3369, %v3657
        %v3659 = vpop.f32.mrb[0].mxu0
        %3660 = vmatprep.mubr.bf16.mxu0 %v1778
        %3661 = vmatmul.mubr.bf16.gmra.mrb[0].mxu0 %v1778
        %v3662 = vpop.f32.mrb[0].mxu0
        %v3663 = vadd.f32 %v3374, %v3662
        %v3664 = vpop.f32.mrb[0].mxu0
        %v3665 = vpop.f32.mrb[0].mxu0
        %v3666 = vadd.f32 %v3377, %v3665
        %v3667 = vpop.f32.mrb[0].mxu0
        %3668 = vmatprep.mubr.bf16.mxu0 %v1778
        %3669 = vmatmul.mubr.bf16.gmra.mrb[0].mxu0 %v1778
        %v3670 = vpop.f32.mrb[0].mxu0
        %v3671 = vadd.f32 %v3382, %v3670
        %v3672 = vpop.f32.mrb[0].mxu0
        %v3673 = vpop.f32.mrb[0].mxu0
        %v3674 = vadd.f32 %v3385, %v3673
        %v3675 = vpop.f32.mrb[0].mxu0
        %3676 = vmatprep.mubr.bf16.mxu0 %v1778
        %3677 = vmatmul.mubr.bf16.gmra.mrb[0].mxu0 %v1778
        %v3678 = vpop.f32.mrb[0].mxu0
        %v3679 = vadd.f32 %v3390, %v3678
        %v3680 = vpop.f32.mrb[0].mxu0
        %v3681 = vpop.f32.mrb[0].mxu0
        %v3682 = vadd.f32 %v3393, %v3681
        %v3683 = vpop.f32.mrb[0].mxu0
        %3684 = vmatprep.mubr.bf16.mxu0 %v1778
        %3685 = vmatmul.mubr.bf16.gmra.mrb[0].mxu0 %v1778
        %v3686 = vpop.f32.mrb[0].mxu0
        %v3687 = vadd.f32 %v3398, %v3686
        %v3688 = vpop.f32.mrb[0].mxu0
        %v3689 = vpop.f32.mrb[0].mxu0
        %v3690 = vadd.f32 %v3401, %v3689
        %v3691 = vpop.f32.mrb[0].mxu0
        %3692 = vdwg.mxu0
        %3693 = vmatprep.subr.bf16.mxu0 0
        %3694 = vmatpush1.bf16.msra.mxu0 %v2457
        %3695 = vmatprep.subr.bf16.mxu0 0
        %3696 = vmatpush1.bf16.msra.mxu0 %v2458
        %3697 = vmatprep.subr.bf16.mxu0 0
        %3698 = vmatpush1.bf16.msra.mxu0 %v2459
        %3699 = vmatprep.subr.bf16.mxu0 0
        %3700 = vmatpush1.bf16.msra.mxu0 %v2460
        %3701 = vmatprep.subr.bf16.mxu0 0
        %3702 = vmatpush1.bf16.msra.mxu0 %v2461
        %3703 = vmatprep.subr.bf16.mxu0 0
        %3704 = vmatpush1.bf16.msra.mxu0 %v2462
        %3705 = vmatprep.subr.bf16.mxu0 0
        %3706 = vmatpush1.bf16.msra.mxu0 %v2463
        %3707 = vmatprep.subr.bf16.mxu0 0
        %3708 = vmatpush1.bf16.msra.mxu0 %v2464
        %3709 = vmatprep.subr.bf16.mxu0 0
        %3710 = vmatpush1.bf16.msra.mxu0 0
        %3711 = vmatprep.subr.bf16.mxu0 0
        %3712 = vmatpush1.bf16.msra.mxu0 0
        %3713 = vmatprep.subr.bf16.mxu0 0
        %3714 = vmatpush1.bf16.msra.mxu0 0
        %3715 = vmatprep.subr.bf16.mxu0 0
        %3716 = vmatpush1.bf16.msra.mxu0 0
        %3717 = vmatprep.subr.bf16.mxu0 0
        %3718 = vmatpush1.bf16.msra.mxu0 0
        %3719 = vmatprep.subr.bf16.mxu0 0
        %3720 = vmatpush1.bf16.msra.mxu0 0
        %3721 = vmatprep.subr.bf16.mxu0 0
        %3722 = vmatpush1.bf16.msra.mxu0 0
        %3723 = vmatprep.subr.bf16.mxu0 0
        %3724 = vmatpush1.bf16.msra.mxu0 0
        %3725 = vmatprep.mubr.bf16.mxu0 0
        %3726 = vmatmul.mubr.bf16.gmra.mrb[0].mxu0 %v1784
        %v3727 = vpop.f32.mrb[0].mxu0
        %v3728 = vadd.f32 %v3439, %v3727
        %v3729 = vpop.f32.mrb[0].mxu0
        %v3730 = vpop.f32.mrb[0].mxu0
        %v3731 = vadd.f32 %v3442, %v3730
        %v3732 = vpop.f32.mrb[0].mxu0
        %3733 = vmatprep.mubr.bf16.mxu0 0
        %3734 = vmatmul.mubr.bf16.gmra.mrb[0].mxu0 %v1785
        %v3735 = vpop.f32.mrb[0].mxu0
        %v3736 = vadd.f32 %v3447, %v3735
        %v3737 = vpop.f32.mrb[0].mxu0
        %v3738 = vpop.f32.mrb[0].mxu0
        %v3739 = vadd.f32 %v3450, %v3738
        %v3740 = vpop.f32.mrb[0].mxu0
        %3741 = vmatprep.mubr.bf16.mxu0 0
        %3742 = vmatmul.mubr.bf16.gmra.mrb[0].mxu0 %v1786
        %v3743 = vpop.f32.mrb[0].mxu0
        %v3744 = vadd.f32 %v3455, %v3743
        %v3745 = vpop.f32.mrb[0].mxu0
        %v3746 = vpop.f32.mrb[0].mxu0
        %v3747 = vadd.f32 %v3458, %v3746
        %v3748 = vpop.f32.mrb[0].mxu0
        %3749 = vmatprep.mubr.bf16.mxu0 0
        %3750 = vmatmul.mubr.bf16.gmra.mrb[0].mxu0 %v1907
        %v3751 = vpop.f32.mrb[0].mxu0
        %v3752 = vadd.f32 %v3463, %v3751
        %v3753 = vpop.f32.mrb[0].mxu0
        %v3754 = vpop.f32.mrb[0].mxu0
        %v3755 = vadd.f32 %v3466, %v3754
        %v3756 = vpop.f32.mrb[0].mxu0
        %3757 = vmatprep.mubr.bf16.mxu0 0
        %3758 = vmatmul.mubr.bf16.gmra.mrb[0].mxu0 %v1788
        %v3759 = vpop.f32.mrb[0].mxu0
        %v3760 = vadd.f32 %v3471, %v3759
        %v3761 = vpop.f32.mrb[0].mxu0
        %v3762 = vpop.f32.mrb[0].mxu0
        %v3763 = vadd.f32 %v3474, %v3762
        %v3764 = vpop.f32.mrb[0].mxu0
        %3765 = vmatprep.mubr.bf16.mxu0 0
        %3766 = vmatmul.mubr.bf16.gmra.mrb[0].mxu0 %v1789
        %v3767 = vpop.f32.mrb[0].mxu0
        %v3768 = vadd.f32 %v3479, %v3767
        %v3769 = vpop.f32.mrb[0].mxu0
        %v3770 = vpop.f32.mrb[0].mxu0
        %v3771 = vadd.f32 %v3482, %v3770
        %v3772 = vpop.f32.mrb[0].mxu0
        %3773 = vmatprep.mubr.bf16.mxu0 0
        %3774 = vmatmul.mubr.bf16.gmra.mrb[0].mxu0 %v1790
        %v3775 = vpop.f32.mrb[0].mxu0
        %v3776 = vadd.f32 %v3487, %v3775
        %v3777 = vpop.f32.mrb[0].mxu0
        %v3778 = vpop.f32.mrb[0].mxu0
        %v3779 = vadd.f32 %v3490, %v3778
        %v3780 = vpop.f32.mrb[0].mxu0
        %3781 = vmatprep.mubr.bf16.mxu0 0
        %3782 = vmatmul.mubr.bf16.gmra.mrb[0].mxu0 %v1908
        %v3783 = vpop.f32.mrb[0].mxu0
        %v3784 = vadd.f32 %v3495, %v3783
        %v3785 = vpop.f32.mrb[0].mxu0
        %v3786 = vpop.f32.mrb[0].mxu0
        %v3787 = vadd.f32 %v3498, %v3786
        %v3788 = vpop.f32.mrb[0].mxu0
        %3789 = vmatprep.mubr.bf16.mxu0 0
        %3790 = vmatmul.mubr.bf16.gmra.mrb[0].mxu0 %v1792
        %v3791 = vpop.f32.mrb[0].mxu0
        %v3792 = vadd.f32 %v3503, %v3791
        %v3793 = vpop.f32.mrb[0].mxu0
        %v3794 = vpop.f32.mrb[0].mxu0
        %v3795 = vadd.f32 %v3506, %v3794
        %v3796 = vpop.f32.mrb[0].mxu0
        %3797 = vmatprep.mubr.bf16.mxu0 0
        %3798 = vmatmul.mubr.bf16.gmra.mrb[0].mxu0 %v1793
        %v3799 = vpop.f32.mrb[0].mxu0
        %v3800 = vadd.f32 %v3511, %v3799
        %v3801 = vpop.f32.mrb[0].mxu0
        %v3802 = vpop.f32.mrb[0].mxu0
        %v3803 = vadd.f32 %v3514, %v3802
        %v3804 = vpop.f32.mrb[0].mxu0
        %3805 = vmatprep.mubr.bf16.mxu0 0
        %3806 = vmatmul.mubr.bf16.gmra.mrb[0].mxu0 %v1794
        %v3807 = vpop.f32.mrb[0].mxu0
        %v3808 = vadd.f32 %v3519, %v3807
        %v3809 = vpop.f32.mrb[0].mxu0
        %v3810 = vpop.f32.mrb[0].mxu0
        %v3811 = vadd.f32 %v3522, %v3810
        %v3812 = vpop.f32.mrb[0].mxu0
        %3813 = vmatprep.mubr.bf16.mxu0 0
        %3814 = vmatmul.mubr.bf16.gmra.mrb[0].mxu0 %v1909
        %v3815 = vpop.f32.mrb[0].mxu0
        %v3816 = vadd.f32 %v3527, %v3815
        %v3817 = vpop.f32.mrb[0].mxu0
        %v3818 = vpop.f32.mrb[0].mxu0
        %v3819 = vadd.f32 %v3530, %v3818
        %v3820 = vpop.f32.mrb[0].mxu0
        %3821 = vmatprep.mubr.bf16.mxu0 0
        %3822 = vmatmul.mubr.bf16.gmra.mrb[0].mxu0 %v1796
        %v3823 = vpop.f32.mrb[0].mxu0
        %v3824 = vadd.f32 %v3535, %v3823
        %v3825 = vpop.f32.mrb[0].mxu0
        %v3826 = vpop.f32.mrb[0].mxu0
        %v3827 = vadd.f32 %v3538, %v3826
        %v3828 = vpop.f32.mrb[0].mxu0
        %3829 = vmatprep.mubr.bf16.mxu0 0
        %3830 = vmatmul.mubr.bf16.gmra.mrb[0].mxu0 %v1797
        %v3831 = vpop.f32.mrb[0].mxu0
        %v3832 = vadd.f32 %v3543, %v3831
        %v3833 = vpop.f32.mrb[0].mxu0
        %v3834 = vpop.f32.mrb[0].mxu0
        %v3835 = vadd.f32 %v3546, %v3834
        %v3836 = vpop.f32.mrb[0].mxu0
        %3837 = vmatprep.mubr.bf16.mxu0 0
        %3838 = vmatmul.mubr.bf16.gmra.mrb[0].mxu0 %v1798
        %v3839 = vpop.f32.mrb[0].mxu0
        %v3840 = vadd.f32 %v3551, %v3839
        %v3841 = vpop.f32.mrb[0].mxu0
        %v3842 = vpop.f32.mrb[0].mxu0
        %v3843 = vadd.f32 %v3554, %v3842
        %v3844 = vpop.f32.mrb[0].mxu0
        %3845 = vmatprep.mubr.bf16.mxu0 0
        %3846 = vmatmul.mubr.bf16.gmra.mrb[0].mxu0 %v1910
        %v3847 = vpop.f32.mrb[0].mxu0
        %v3848 = vadd.f32 %v3559, %v3847
        %v3849 = vpop.f32.mrb[0].mxu0
        %v3850 = vpop.f32.mrb[0].mxu0
        %v3851 = vadd.f32 %v3562, %v3850
        %v3852 = vpop.f32.mrb[0].mxu0
        %3853 = vmatprep.mubr.bf16.mxu0 0
        %3854 = vmatmul.mubr.bf16.gmra.mrb[0].mxu0 %v1800
        %v3855 = vpop.f32.mrb[0].mxu0
        %v3856 = vadd.f32 %v3567, %v3855
        %v3857 = vpop.f32.mrb[0].mxu0
        %v3858 = vpop.f32.mrb[0].mxu0
        %v3859 = vadd.f32 %v3570, %v3858
        %v3860 = vpop.f32.mrb[0].mxu0
        %3861 = vmatprep.mubr.bf16.mxu0 0
        %3862 = vmatmul.mubr.bf16.gmra.mrb[0].mxu0 %v1801
        %v3863 = vpop.f32.mrb[0].mxu0
        %v3864 = vadd.f32 %v3575, %v3863
        %v3865 = vpop.f32.mrb[0].mxu0
        %v3866 = vpop.f32.mrb[0].mxu0
        %v3867 = vadd.f32 %v3578, %v3866
        %v3868 = vpop.f32.mrb[0].mxu0
        %3869 = vmatprep.mubr.bf16.mxu0 0
        %3870 = vmatmul.mubr.bf16.gmra.mrb[0].mxu0 %v1802
        %v3871 = vpop.f32.mrb[0].mxu0
        %v3872 = vadd.f32 %v3583, %v3871
        %v3873 = vpop.f32.mrb[0].mxu0
        %v3874 = vpop.f32.mrb[0].mxu0
        %v3875 = vadd.f32 %v3586, %v3874
        %v3876 = vpop.f32.mrb[0].mxu0
        %3877 = vmatprep.mubr.bf16.mxu0 0
        %3878 = vmatmul.mubr.bf16.gmra.mrb[0].mxu0 %v1911
        %v3879 = vpop.f32.mrb[0].mxu0
        %v3880 = vadd.f32 %v3591, %v3879
        %v3881 = vpop.f32.mrb[0].mxu0
        %v3882 = vpop.f32.mrb[0].mxu0
        %v3883 = vadd.f32 %v3594, %v3882
        %v3884 = vpop.f32.mrb[0].mxu0
        %3885 = vmatprep.mubr.bf16.mxu0 0
        %3886 = vmatmul.mubr.bf16.gmra.mrb[0].mxu0 %v1804
        %v3887 = vpop.f32.mrb[0].mxu0
        %v3888 = vadd.f32 %v3599, %v3887
        %v3889 = vpop.f32.mrb[0].mxu0
        %v3890 = vpop.f32.mrb[0].mxu0
        %v3891 = vadd.f32 %v3602, %v3890
        %v3892 = vpop.f32.mrb[0].mxu0
        %3893 = vmatprep.mubr.bf16.mxu0 0
        %3894 = vmatmul.mubr.bf16.gmra.mrb[0].mxu0 %v1805
        %v3895 = vpop.f32.mrb[0].mxu0
        %v3896 = vadd.f32 %v3607, %v3895
        %v3897 = vpop.f32.mrb[0].mxu0
        %v3898 = vpop.f32.mrb[0].mxu0
        %v3899 = vadd.f32 %v3610, %v3898
        %v3900 = vpop.f32.mrb[0].mxu0
        %3901 = vmatprep.mubr.bf16.mxu0 0
        %3902 = vmatmul.mubr.bf16.gmra.mrb[0].mxu0 %v1806
        %v3903 = vpop.f32.mrb[0].mxu0
        %v3904 = vadd.f32 %v3615, %v3903
        %v3905 = vpop.f32.mrb[0].mxu0
        %v3906 = vpop.f32.mrb[0].mxu0
        %v3907 = vadd.f32 %v3618, %v3906
        %v3908 = vpop.f32.mrb[0].mxu0
        %3909 = vmatprep.mubr.bf16.mxu0 0
        %3910 = vmatmul.mubr.bf16.gmra.mrb[0].mxu0 %v1912
        %v3911 = vpop.f32.mrb[0].mxu0
        %v3912 = vadd.f32 %v3623, %v3911
        %v3913 = vpop.f32.mrb[0].mxu0
        %v3914 = vpop.f32.mrb[0].mxu0
        %v3915 = vadd.f32 %v3626, %v3914
        %v3916 = vpop.f32.mrb[0].mxu0
        %3917 = vmatprep.mubr.bf16.mxu0 0
        %3918 = vmatmul.mubr.bf16.gmra.mrb[0].mxu0 %v1935
        %v3919 = vpop.f32.mrb[0].mxu0
        %v3920 = vadd.f32 %v3631, %v3919
        %v3921 = vpop.f32.mrb[0].mxu0
        %v3922 = vpop.f32.mrb[0].mxu0
        %v3923 = vadd.f32 %v3634, %v3922
        %v3924 = vpop.f32.mrb[0].mxu0
        %3925 = vmatprep.mubr.bf16.mxu0 0
        %3926 = vmatmul.mubr.bf16.gmra.mrb[0].mxu0 %v1936
        %v3927 = vpop.f32.mrb[0].mxu0
        %v3928 = vadd.f32 %v3639, %v3927
        %v3929 = vpop.f32.mrb[0].mxu0
        %v3930 = vpop.f32.mrb[0].mxu0
        %v3931 = vadd.f32 %v3642, %v3930
        %v3932 = vpop.f32.mrb[0].mxu0
        %3933 = vmatprep.mubr.bf16.mxu0 0
        %3934 = vmatmul.mubr.bf16.gmra.mrb[0].mxu0 %v1937
        %v3935 = vpop.f32.mrb[0].mxu0
        %v3936 = vadd.f32 %v3647, %v3935
        %v3937 = vpop.f32.mrb[0].mxu0
        %v3938 = vpop.f32.mrb[0].mxu0
        %v3939 = vadd.f32 %v3650, %v3938
        %v3940 = vpop.f32.mrb[0].mxu0
        %3941 = vmatprep.mubr.bf16.mxu0 0
        %3942 = vmatmul.mubr.bf16.gmra.mrb[0].mxu0 %v1952
        %v3943 = vpop.f32.mrb[0].mxu0
        %v3944 = vadd.f32 %v3655, %v3943
        %v3945 = vpop.f32.mrb[0].mxu0
        %v3946 = vpop.f32.mrb[0].mxu0
        %v3947 = vadd.f32 %v3658, %v3946
        %v3948 = vpop.f32.mrb[0].mxu0
        %3949 = vmatprep.mubr.bf16.mxu0 0
        %3950 = vmatmul.mubr.bf16.gmra.mrb[0].mxu0 %v1778
        %v3951 = vpop.f32.mrb[0].mxu0
        %v3952 = vadd.f32 %v3663, %v3951
        %v3953 = vpop.f32.mrb[0].mxu0
        %v3954 = vpop.f32.mrb[0].mxu0
        %v3955 = vadd.f32 %v3666, %v3954
        %v3956 = vpop.f32.mrb[0].mxu0
        %3957 = vmatprep.mubr.bf16.mxu0 0
        %3958 = vmatmul.mubr.bf16.gmra.mrb[0].mxu0 %v1778
        %v3959 = vpop.f32.mrb[0].mxu0
        %v3960 = vadd.f32 %v3671, %v3959
        %v3961 = vpop.f32.mrb[0].mxu0
        %v3962 = vpop.f32.mrb[0].mxu0
        %v3963 = vadd.f32 %v3674, %v3962
        %v3964 = vpop.f32.mrb[0].mxu0
        %3965 = vmatprep.mubr.bf16.mxu0 0
        %3966 = vmatmul.mubr.bf16.gmra.mrb[0].mxu0 %v1778
        %v3967 = vpop.f32.mrb[0].mxu0
        %v3968 = vadd.f32 %v3679, %v3967
        %v3969 = vpop.f32.mrb[0].mxu0
        %v3970 = vpop.f32.mrb[0].mxu0
        %v3971 = vadd.f32 %v3682, %v3970
        %v3972 = vpop.f32.mrb[0].mxu0
        %3973 = vmatprep.mubr.bf16.mxu0 0
        %3974 = vmatmul.mubr.bf16.gmra.mrb[0].mxu0 %v1778
        %v3975 = vpop.f32.mrb[0].mxu0
        %v3976 = vadd.f32 %v3687, %v3975
        %v3977 = vpop.f32.mrb[0].mxu0
        %v3978 = vpop.f32.mrb[0].mxu0
        %v3979 = vadd.f32 %v3690, %v3978
        %v3980 = vpop.f32.mrb[0].mxu0
        %3981 = vdwg.mxu0
        %v3982 = vadd.f32 %v3728, %v3760
        %v3983 = vadd.f32 %v3731, %v3763
        %v3984 = vadd.f32 %v3736, %v3768
        %v3985 = vadd.f32 %v3739, %v3771
        %v3986 = vadd.f32 %v3744, %v3776
        %v3987 = vadd.f32 %v3747, %v3779
        %v3988 = vadd.f32 %v3752, %v3784
        %v3989 = vadd.f32 %v3755, %v3787
        %v3990 = vadd.f32 %v3792, %v3824
        %v3991 = vadd.f32 %v3795, %v3827
        %v3992 = vadd.f32 %v3800, %v3832
        %v3993 = vadd.f32 %v3803, %v3835
        %v3994 = vadd.f32 %v3808, %v3840
        %v3995 = vadd.f32 %v3811, %v3843
        %v3996 = vadd.f32 %v3816, %v3848
        %v3997 = vadd.f32 %v3819, %v3851
        %v3998 = vadd.f32 %v3856, %v3888
        %v3999 = vadd.f32 %v3859, %v3891
        %v4000 = vadd.f32 %v3864, %v3896
        %v4001 = vadd.f32 %v3867, %v3899
        %v4002 = vadd.f32 %v3872, %v3904
        %v4003 = vadd.f32 %v3875, %v3907
        %v4004 = vadd.f32 %v3880, %v3912
        %v4005 = vadd.f32 %v3883, %v3915
        %v4006 = vadd.f32 %v3920, %v3952
        %v4007 = vadd.f32 %v3923, %v3955
        %v4008 = vadd.f32 %v3928, %v3960
        %v4009 = vadd.f32 %v3931, %v3963
        %v4010 = vadd.f32 %v3936, %v3968
        %v4011 = vadd.f32 %v3939, %v3971
        %v4012 = vadd.f32 %v3944, %v3976
        %v4013 = vadd.f32 %v3947, %v3979
        %v4014 = vmul.f32 %v3982, 0.5
        %v4015 = vmul.f32 %v3983, 0.5
        %v4016 = vmul.f32 %v3984, 0.5
        %v4017 = vmul.f32 %v3985, 0.5
        %v4018 = vmul.f32 %v3986, 0.5
        %v4019 = vmul.f32 %v3987, 0.5
        %v4020 = vmul.f32 %v3988, 0.5
        %v4021 = vmul.f32 %v3989, 0.5
        %v4022 = vmul.f32 %v3990, 0.5
        %v4023 = vmul.f32 %v3991, 0.5
        %v4024 = vmul.f32 %v3992, 0.5
        %v4025 = vmul.f32 %v3993, 0.5
        %v4026 = vmul.f32 %v3994, 0.5
        %v4027 = vmul.f32 %v3995, 0.5
        %v4028 = vmul.f32 %v3996, 0.5
        %v4029 = vmul.f32 %v3997, 0.5
        %v4030 = vmul.f32 %v3998, 0.5
        %v4031 = vmul.f32 %v3999, 0.5
        %v4032 = vmul.f32 %v4000, 0.5
        %v4033 = vmul.f32 %v4001, 0.5
        %v4034 = vmul.f32 %v4002, 0.5
        %v4035 = vmul.f32 %v4003, 0.5
        %v4036 = vmul.f32 %v4004, 0.5
        %v4037 = vmul.f32 %v4005, 0.5
        %v4038 = vmul.f32 %v4006, 0.5
        %v4039 = vmul.f32 %v4007, 0.5
        %v4040 = vmul.f32 %v4008, 0.5
        %v4041 = vmul.f32 %v4009, 0.5
        %v4042 = vmul.f32 %v4010, 0.5
        %v4043 = vmul.f32 %v4011, 0.5
        %v4044 = vmul.f32 %v4012, 0.5
        %v4045 = vmul.f32 %v4013, 0.5
        %v4046 = vadd.f32 %v4014, %v4015
        %v4047 = vadd.f32 %v4016, %v4017
        %v4048 = vadd.f32 %v4018, %v4019
        %v4049 = vadd.f32 %v4020, %v4021
        %v4050 = vadd.f32 %v4022, %v4023
        %v4051 = vadd.f32 %v4024, %v4025
        %v4052 = vadd.f32 %v4026, %v4027
        %v4053 = vadd.f32 %v4028, %v4029
        %v4054 = vadd.f32 %v4030, %v4031
        %v4055 = vadd.f32 %v4032, %v4033
        %v4056 = vadd.f32 %v4034, %v4035
        %v4057 = vadd.f32 %v4036, %v4037
        %v4058 = vadd.f32 %v4038, %v4039
        %v4059 = vadd.f32 %v4040, %v4041
        %v4060 = vadd.f32 %v4042, %v4043
        %v4061 = vadd.f32 %v4044, %v4045
        %v4062 = vmul.f32 %v4046, 0.5
        %v4063 = vmul.f32 %v4047, 0.5
        %v4064 = vmul.f32 %v4048, 0.5
        %v4065 = vmul.f32 %v4049, 0.5
        %v4066 = vmul.f32 %v4050, 0.5
        %v4067 = vmul.f32 %v4051, 0.5
        %v4068 = vmul.f32 %v4052, 0.5
        %v4069 = vmul.f32 %v4053, 0.5
        %v4070 = vmul.f32 %v4054, 0.5
        %v4071 = vmul.f32 %v4055, 0.5
        %v4072 = vmul.f32 %v4056, 0.5
        %v4073 = vmul.f32 %v4057, 0.5
        %v4074 = vmul.f32 %v4058, 0.5
        %v4075 = vmul.f32 %v4059, 0.5
        %v4076 = vmul.f32 %v4060, 0.5
        %v4077 = vmul.f32 %v4061, 0.5
        %v4078 = vld [vmem:[%s8] sm:$0x1]
        %v4079 = vld [vmem:[%s9] sm:$0x1]
        %v4080 = vadd.f32 %v4062, %v4063
        %v4081 = vadd.f32 %v4080, %v4064
        %v4082 = vadd.f32 %v4081, %v4065
        %v4083 = vadd.f32 %v4082, %v4066
        %v4084 = vadd.f32 %v4083, %v4067
        %v4085 = vadd.f32 %v4084, %v4068
        %v4086 = vadd.f32 %v4085, %v4069
        %v4087 = vadd.f32 %v4086, %v4070
        %v4088 = vadd.f32 %v4087, %v4071
        %v4089 = vadd.f32 %v4088, %v4072
        %v4090 = vadd.f32 %v4089, %v4073
        %v4091 = vadd.f32 %v4090, %v4074
        %v4092 = vadd.f32 %v4091, %v4075
        %v4093 = vadd.f32 %v4092, %v4076
        %v4094 = vadd.f32 %v4093, %v4077
        %v4095 = vrcp.pop 16.0
        %v4096 = vmul.f32 %v4094, %v4095
        %v4097 = vmul.f32 %v4062, %v4062
        %v4098 = vmul.f32 %v4063, %v4063
        %v4099 = vmul.f32 %v4064, %v4064
        %v4100 = vmul.f32 %v4065, %v4065
        %v4101 = vmul.f32 %v4066, %v4066
        %v4102 = vmul.f32 %v4067, %v4067
        %v4103 = vmul.f32 %v4068, %v4068
        %v4104 = vmul.f32 %v4069, %v4069
        %v4105 = vmul.f32 %v4070, %v4070
        %v4106 = vmul.f32 %v4071, %v4071
        %v4107 = vmul.f32 %v4072, %v4072
        %v4108 = vmul.f32 %v4073, %v4073
        %v4109 = vmul.f32 %v4074, %v4074
        %v4110 = vmul.f32 %v4075, %v4075
        %v4111 = vmul.f32 %v4076, %v4076
        %v4112 = vmul.f32 %v4077, %v4077
        %v4113 = vadd.f32 %v4097, %v4098
        %v4114 = vadd.f32 %v4113, %v4099
        %v4115 = vadd.f32 %v4114, %v4100
        %v4116 = vadd.f32 %v4115, %v4101
        %v4117 = vadd.f32 %v4116, %v4102
        %v4118 = vadd.f32 %v4117, %v4103
        %v4119 = vadd.f32 %v4118, %v4104
        %v4120 = vadd.f32 %v4119, %v4105
        %v4121 = vadd.f32 %v4120, %v4106
        %v4122 = vadd.f32 %v4121, %v4107
        %v4123 = vadd.f32 %v4122, %v4108
        %v4124 = vadd.f32 %v4123, %v4109
        %v4125 = vadd.f32 %v4124, %v4110
        %v4126 = vadd.f32 %v4125, %v4111
        %v4127 = vadd.f32 %v4126, %v4112
        %v4128 = vmul.f32 %v4127, %v4095
        %v4129 = vmul.f32 %v4096, %v4096
        %v4130 = vsub.f32 %v4128, %v4129
        %v4131 = vmax.f32 %v4130, 0.0
        %v4132 = vsub.f32 %v4062, %v4096
        %v4133 = vsub.f32 %v4063, %v4096
        %v4134 = vsub.f32 %v4064, %v4096
        %v4135 = vsub.f32 %v4065, %v4096
        %v4136 = vsub.f32 %v4066, %v4096
        %v4137 = vsub.f32 %v4067, %v4096
        %v4138 = vsub.f32 %v4068, %v4096
        %v4139 = vsub.f32 %v4069, %v4096
        %v4140 = vsub.f32 %v4070, %v4096
        %v4141 = vsub.f32 %v4071, %v4096
        %v4142 = vsub.f32 %v4072, %v4096
        %v4143 = vsub.f32 %v4073, %v4096
        %v4144 = vsub.f32 %v4074, %v4096
        %v4145 = vsub.f32 %v4075, %v4096
        %v4146 = vsub.f32 %v4076, %v4096
        %v4147 = vsub.f32 %v4077, %v4096
        %v4148 = vadd.f32 %v4131, 1e-05
        %v4149 = vrsqrt.pop %v4148
        %v4150 = vmul.f32 %v4132, %v4149
        %v4151 = vmul.f32 %v4133, %v4149
        %v4152 = vmul.f32 %v4134, %v4149
        %v4153 = vmul.f32 %v4135, %v4149
        %v4154 = vmul.f32 %v4136, %v4149
        %v4155 = vmul.f32 %v4137, %v4149
        %v4156 = vmul.f32 %v4138, %v4149
        %v4157 = vmul.f32 %v4139, %v4149
        %v4158 = vmul.f32 %v4140, %v4149
        %v4159 = vmul.f32 %v4141, %v4149
        %v4160 = vmul.f32 %v4142, %v4149
        %v4161 = vmul.f32 %v4143, %v4149
        %v4162 = vmul.f32 %v4144, %v4149
        %v4163 = vmul.f32 %v4145, %v4149
        %v4164 = vmul.f32 %v4146, %v4149
        %v4165 = vmul.f32 %v4147, %v4149
        %v4167 = vlaneseq
        %v4168 = vshrl.u32 %v4167, 7
        %v4169 = vsub.s32 0, %v4168
        %v4170 = vrot.slane %v4078, %v4169
        %v4172 = vmul.f32 %v4150, %v4170
        %v4173 = vmul.f32 %v4151, %v4170
        %v4174 = vmul.f32 %v4152, %v4170
        %v4175 = vmul.f32 %v4153, %v4170
        %v4176 = vmul.f32 %v4154, %v4170
        %v4177 = vmul.f32 %v4155, %v4170
        %v4178 = vmul.f32 %v4156, %v4170
        %v4179 = vmul.f32 %v4157, %v4170
        %v4180 = vmul.f32 %v4158, %v4170
        %v4181 = vmul.f32 %v4159, %v4170
        %v4182 = vmul.f32 %v4160, %v4170
        %v4183 = vmul.f32 %v4161, %v4170
        %v4184 = vmul.f32 %v4162, %v4170
        %v4185 = vmul.f32 %v4163, %v4170
        %v4186 = vmul.f32 %v4164, %v4170
        %v4187 = vmul.f32 %v4165, %v4170
        %v4189 = vlaneseq
        %v4190 = vshrl.u32 %v4189, 7
        %v4191 = vsub.s32 0, %v4190
        %v4192 = vrot.slane %v4079, %v4191
        %v4194 = vadd.f32 %v4172, %v4192
        %v4195 = vadd.f32 %v4173, %v4192
        %v4196 = vadd.f32 %v4174, %v4192
        %v4197 = vadd.f32 %v4175, %v4192
        %v4198 = vadd.f32 %v4176, %v4192
        %v4199 = vadd.f32 %v4177, %v4192
        %v4200 = vadd.f32 %v4178, %v4192
        %v4201 = vadd.f32 %v4179, %v4192
        %v4202 = vadd.f32 %v4180, %v4192
        %v4203 = vadd.f32 %v4181, %v4192
        %v4204 = vadd.f32 %v4182, %v4192
        %v4205 = vadd.f32 %v4183, %v4192
        %v4206 = vadd.f32 %v4184, %v4192
        %v4207 = vadd.f32 %v4185, %v4192
        %v4208 = vadd.f32 %v4186, %v4192
        %v4209 = vadd.f32 %v4187, %v4192
        %v4210 = vmul.f32 %v4194, 0.2
        %v4211 = vmul.f32 %v4195, 0.2
        %v4212 = vmul.f32 %v4196, 0.2
        %v4213 = vmul.f32 %v4197, 0.2
        %v4214 = vmul.f32 %v4198, 0.2
        %v4215 = vmul.f32 %v4199, 0.2
        %v4216 = vmul.f32 %v4200, 0.2
        %v4217 = vmul.f32 %v4201, 0.2
        %v4218 = vmul.f32 %v4202, 0.2
        %v4219 = vmul.f32 %v4203, 0.2
        %v4220 = vmul.f32 %v4204, 0.2
        %v4221 = vmul.f32 %v4205, 0.2
        %v4222 = vmul.f32 %v4206, 0.2
        %v4223 = vmul.f32 %v4207, 0.2
        %v4224 = vmul.f32 %v4208, 0.2
        %v4225 = vmul.f32 %v4209, 0.2
        %v4226 = vmax.f32 %v4194, %v4210
        %v4227 = vmax.f32 %v4195, %v4211
        %v4228 = vmax.f32 %v4196, %v4212
        %v4229 = vmax.f32 %v4197, %v4213
        %v4230 = vmax.f32 %v4198, %v4214
        %v4231 = vmax.f32 %v4199, %v4215
        %v4232 = vmax.f32 %v4200, %v4216
        %v4233 = vmax.f32 %v4201, %v4217
        %v4234 = vmax.f32 %v4202, %v4218
        %v4235 = vmax.f32 %v4203, %v4219
        %v4236 = vmax.f32 %v4204, %v4220
        %v4237 = vmax.f32 %v4205, %v4221
        %v4238 = vmax.f32 %v4206, %v4222
        %v4239 = vmax.f32 %v4207, %v4223
        %v4240 = vmax.f32 %v4208, %v4224
        %v4241 = vmax.f32 %v4209, %v4225
        %v4242 = vpack.c.bf16 %v4226, %v4226
        %v4243 = vpack.c.bf16 %v4227, %v4227
        %v4244 = vpack.c.bf16 %v4228, %v4228
        %v4245 = vpack.c.bf16 %v4229, %v4229
        %v4246 = vpack.c.bf16 %v4230, %v4230
        %v4247 = vpack.c.bf16 %v4231, %v4231
        %v4248 = vpack.c.bf16 %v4232, %v4232
        %v4249 = vpack.c.bf16 %v4233, %v4233
        %v4250 = vpack.c.bf16 %v4234, %v4234
        %v4251 = vpack.c.bf16 %v4235, %v4235
        %v4252 = vpack.c.bf16 %v4236, %v4236
        %v4253 = vpack.c.bf16 %v4237, %v4237
        %v4254 = vpack.c.bf16 %v4238, %v4238
        %v4255 = vpack.c.bf16 %v4239, %v4239
        %v4256 = vpack.c.bf16 %v4240, %v4240
        %v4257 = vpack.c.bf16 %v4241, %v4241
        %v4267 = vunpack.c.l.b16 %v4242
        %v4268 = vunpack.c.l.b16 %v4243
        %v4269 = vunpack.c.l.b16 %v4244
        %v4270 = vunpack.c.l.b16 %v4246
        %v4271 = vunpack.c.l.b16 %v4247
        %v4272 = vunpack.c.l.b16 %v4248
        %v4273 = vunpack.c.l.b16 %v4250
        %v4274 = vunpack.c.l.b16 %v4251
        %v4275 = vunpack.c.l.b16 %v4252
        %v4276 = vpack.c.b16 %v4267, %v1728
        %v4277 = vpack.c.b16 %v4269, %v4268
        %v4278 = vpack.c.b16 %v4270, %v1728
        %v4279 = vpack.c.b16 %v4272, %v4271
        %v4280 = vpack.c.b16 %v4273, %v1728
        %v4281 = vpack.c.b16 %v4275, %v4274
        %v4291 = vunpack.c.l.b16 %v4245
        %v4292 = vunpack.c.l.b16 %v4249
        %v4293 = vunpack.c.l.b16 %v4253
        %v4294 = vpack.c.b16 %v4268, %v4267
        %v4295 = vpack.c.b16 %v4291, %v4269
        %v4296 = vpack.c.b16 %v4271, %v4270
        %v4297 = vpack.c.b16 %v4292, %v4272
        %v4298 = vpack.c.b16 %v4274, %v4273
        %v4299 = vpack.c.b16 %v4293, %v4275
        %v4306 = vpack.c.b16 %v1728, %v4291
        %v4307 = vpack.c.b16 %v1728, %v4292
        %v4308 = vpack.c.b16 %v1728, %v4293
        %v4315 = vunpack.c.l.b16 %v4254
        %v4316 = vunpack.c.l.b16 %v4255
        %v4317 = vunpack.c.l.b16 %v4256
        %v4318 = vpack.c.b16 %v4315, %v1728
        %v4319 = vpack.c.b16 %v4317, %v4316
        %v4323 = vunpack.c.l.b16 %v4257
        %v4324 = vpack.c.b16 %v4316, %v4315
        %v4325 = vpack.c.b16 %v4323, %v4317
        %v4328 = vpack.c.b16 %v1728, %v4323
        %v4330 = vld [vmem:[%s3] sm:$0xff]
        %v4331 = vld [vmem:[%s3 + $0x8] sm:$0xff]
        %v4332 = vld [vmem:[%s3 + $0x10] sm:$0xff]
        %v4333 = vld [vmem:[%s3 + $0x18] sm:$0xff]
        %v4334 = vld [vmem:[%s3 + $0x20] sm:$0xff]
        %v4335 = vld [vmem:[%s3 + $0x28] sm:$0xff]
        %v4336 = vld [vmem:[%s3 + $0x30] sm:$0xff]
        %v4337 = vld [vmem:[%s3 + $0x38] sm:$0xff]
        %v4338 = vld [vmem:[%s3 + $0x40] sm:$0xff]
        %v4339 = vld [vmem:[%s3 + $0x48] sm:$0xff]
        %v4340 = vld [vmem:[%s3 + $0x50] sm:$0xff]
        %v4341 = vld [vmem:[%s3 + $0x58] sm:$0xff]
        %v4342 = vld [vmem:[%s3 + $0x60] sm:$0xff]
        %v4343 = vld [vmem:[%s3 + $0x68] sm:$0xff]
        %v4344 = vld [vmem:[%s3 + $0x70] sm:$0xff]
        %v4345 = vld [vmem:[%s3 + $0x78] sm:$0xff]
        %v4346 = vld [vmem:[%s3 + $0x80] sm:$0xff]
        %v4347 = vld [vmem:[%s3 + $0x88] sm:$0xff]
        %v4348 = vld [vmem:[%s3 + $0x90] sm:$0xff]
        %v4349 = vld [vmem:[%s3 + $0x98] sm:$0xff]
        %v4350 = vld [vmem:[%s3 + $0xa0] sm:$0xff]
        %v4351 = vld [vmem:[%s3 + $0xa8] sm:$0xff]
        %v4352 = vld [vmem:[%s3 + $0xb0] sm:$0xff]
        %v4353 = vld [vmem:[%s3 + $0xb8] sm:$0xff]
        %v4354 = vld [vmem:[%s3 + $0xc0] sm:$0xff]
        %v4355 = vld [vmem:[%s3 + $0xc8] sm:$0xff]
        %v4356 = vld [vmem:[%s3 + $0xd0] sm:$0xff]
        %v4357 = vld [vmem:[%s3 + $0xd8] sm:$0xff]
        %v4358 = vld [vmem:[%s3 + $0xe0] sm:$0xff]
        %v4359 = vld [vmem:[%s3 + $0xe8] sm:$0xff]
        %v4360 = vld [vmem:[%s3 + $0xf0] sm:$0xff]
        %v4361 = vld [vmem:[%s3 + $0xf8] sm:$0xff]
        %v4362 = vld [vmem:[%s3 + $0x100] sm:$0xff]
        %v4363 = vld [vmem:[%s3 + $0x108] sm:$0xff]
        %v4364 = vld [vmem:[%s3 + $0x110] sm:$0xff]
        %v4365 = vld [vmem:[%s3 + $0x118] sm:$0xff]
        %v4366 = vld [vmem:[%s3 + $0x120] sm:$0xff]
        %v4367 = vld [vmem:[%s3 + $0x128] sm:$0xff]
        %v4368 = vld [vmem:[%s3 + $0x130] sm:$0xff]
        %v4369 = vld [vmem:[%s3 + $0x138] sm:$0xff]
        %v4370 = vld [vmem:[%s3 + $0x140] sm:$0xff]
        %v4371 = vld [vmem:[%s3 + $0x148] sm:$0xff]
        %v4372 = vld [vmem:[%s3 + $0x150] sm:$0xff]
        %v4373 = vld [vmem:[%s3 + $0x158] sm:$0xff]
        %v4374 = vld [vmem:[%s3 + $0x160] sm:$0xff]
        %v4375 = vld [vmem:[%s3 + $0x168] sm:$0xff]
        %v4376 = vld [vmem:[%s3 + $0x170] sm:$0xff]
        %v4377 = vld [vmem:[%s3 + $0x178] sm:$0xff]
        %v4378 = vld [vmem:[%s3 + $0x180] sm:$0xff]
        %v4379 = vld [vmem:[%s3 + $0x188] sm:$0xff]
        %v4380 = vld [vmem:[%s3 + $0x190] sm:$0xff]
        %v4381 = vld [vmem:[%s3 + $0x198] sm:$0xff]
        %v4382 = vld [vmem:[%s3 + $0x1a0] sm:$0xff]
        %v4383 = vld [vmem:[%s3 + $0x1a8] sm:$0xff]
        %v4384 = vld [vmem:[%s3 + $0x1b0] sm:$0xff]
        %v4385 = vld [vmem:[%s3 + $0x1b8] sm:$0xff]
        %v4386 = vld [vmem:[%s3 + $0x1c0] sm:$0xff]
        %v4387 = vld [vmem:[%s3 + $0x1c8] sm:$0xff]
        %v4388 = vld [vmem:[%s3 + $0x1d0] sm:$0xff]
        %v4389 = vld [vmem:[%s3 + $0x1d8] sm:$0xff]
        %v4390 = vld [vmem:[%s3 + $0x1e0] sm:$0xff]
        %v4391 = vld [vmem:[%s3 + $0x1e8] sm:$0xff]
        %v4392 = vld [vmem:[%s3 + $0x1f0] sm:$0xff]
        %v4393 = vld [vmem:[%s3 + $0x1f8] sm:$0xff]
        %v4394 = vld [vmem:[%s3 + $0x200] sm:$0xff]
        %v4395 = vld [vmem:[%s3 + $0x208] sm:$0xff]
        %v4396 = vld [vmem:[%s3 + $0x210] sm:$0xff]
        %v4397 = vld [vmem:[%s3 + $0x218] sm:$0xff]
        %v4398 = vld [vmem:[%s3 + $0x220] sm:$0xff]
        %v4399 = vld [vmem:[%s3 + $0x228] sm:$0xff]
        %v4400 = vld [vmem:[%s3 + $0x230] sm:$0xff]
        %v4401 = vld [vmem:[%s3 + $0x238] sm:$0xff]
        %v4402 = vld [vmem:[%s3 + $0x240] sm:$0xff]
        %v4403 = vld [vmem:[%s3 + $0x248] sm:$0xff]
        %v4404 = vld [vmem:[%s3 + $0x250] sm:$0xff]
        %v4405 = vld [vmem:[%s3 + $0x258] sm:$0xff]
        %v4406 = vld [vmem:[%s3 + $0x260] sm:$0xff]
        %v4407 = vld [vmem:[%s3 + $0x268] sm:$0xff]
        %v4408 = vld [vmem:[%s3 + $0x270] sm:$0xff]
        %v4409 = vld [vmem:[%s3 + $0x278] sm:$0xff]
        %v4410 = vld [vmem:[%s3 + $0x280] sm:$0xff]
        %v4411 = vld [vmem:[%s3 + $0x288] sm:$0xff]
        %v4412 = vld [vmem:[%s3 + $0x290] sm:$0xff]
        %v4413 = vld [vmem:[%s3 + $0x298] sm:$0xff]
        %v4414 = vld [vmem:[%s3 + $0x2a0] sm:$0xff]
        %v4415 = vld [vmem:[%s3 + $0x2a8] sm:$0xff]
        %v4416 = vld [vmem:[%s3 + $0x2b0] sm:$0xff]
        %v4417 = vld [vmem:[%s3 + $0x2b8] sm:$0xff]
        %v4418 = vld [vmem:[%s3 + $0x2c0] sm:$0xff]
        %v4419 = vld [vmem:[%s3 + $0x2c8] sm:$0xff]
        %v4420 = vld [vmem:[%s3 + $0x2d0] sm:$0xff]
        %v4421 = vld [vmem:[%s3 + $0x2d8] sm:$0xff]
        %v4422 = vld [vmem:[%s3 + $0x2e0] sm:$0xff]
        %v4423 = vld [vmem:[%s3 + $0x2e8] sm:$0xff]
        %v4424 = vld [vmem:[%s3 + $0x2f0] sm:$0xff]
        %v4425 = vld [vmem:[%s3 + $0x2f8] sm:$0xff]
        %v4426 = vld [vmem:[%s3 + $0x300] sm:$0xff]
        %v4427 = vld [vmem:[%s3 + $0x308] sm:$0xff]
        %v4428 = vld [vmem:[%s3 + $0x310] sm:$0xff]
        %v4429 = vld [vmem:[%s3 + $0x318] sm:$0xff]
        %v4430 = vld [vmem:[%s3 + $0x320] sm:$0xff]
        %v4431 = vld [vmem:[%s3 + $0x328] sm:$0xff]
        %v4432 = vld [vmem:[%s3 + $0x330] sm:$0xff]
        %v4433 = vld [vmem:[%s3 + $0x338] sm:$0xff]
        %v4434 = vld [vmem:[%s3 + $0x340] sm:$0xff]
        %v4435 = vld [vmem:[%s3 + $0x348] sm:$0xff]
        %v4436 = vld [vmem:[%s3 + $0x350] sm:$0xff]
        %v4437 = vld [vmem:[%s3 + $0x358] sm:$0xff]
        %v4438 = vld [vmem:[%s3 + $0x360] sm:$0xff]
        %v4439 = vld [vmem:[%s3 + $0x368] sm:$0xff]
        %v4440 = vld [vmem:[%s3 + $0x370] sm:$0xff]
        %v4441 = vld [vmem:[%s3 + $0x378] sm:$0xff]
        %v4442 = vld [vmem:[%s3 + $0x380] sm:$0xff]
        %v4443 = vld [vmem:[%s3 + $0x388] sm:$0xff]
        %v4444 = vld [vmem:[%s3 + $0x390] sm:$0xff]
        %v4445 = vld [vmem:[%s3 + $0x398] sm:$0xff]
        %v4446 = vld [vmem:[%s3 + $0x3a0] sm:$0xff]
        %v4447 = vld [vmem:[%s3 + $0x3a8] sm:$0xff]
        %v4448 = vld [vmem:[%s3 + $0x3b0] sm:$0xff]
        %v4449 = vld [vmem:[%s3 + $0x3b8] sm:$0xff]
        %v4450 = vld [vmem:[%s3 + $0x3c0] sm:$0xff]
        %v4451 = vld [vmem:[%s3 + $0x3c8] sm:$0xff]
        %v4452 = vld [vmem:[%s3 + $0x3d0] sm:$0xff]
        %v4453 = vld [vmem:[%s3 + $0x3d8] sm:$0xff]
        %v4454 = vld [vmem:[%s3 + $0x3e0] sm:$0xff]
        %v4455 = vld [vmem:[%s3 + $0x3e8] sm:$0xff]
        %v4456 = vld [vmem:[%s3 + $0x3f0] sm:$0xff]
        %v4457 = vld [vmem:[%s3 + $0x3f8] sm:$0xff]
        %v4458 = vld [vmem:[%s3 + $0x400] sm:$0xff]
        %v4459 = vld [vmem:[%s3 + $0x408] sm:$0xff]
        %v4460 = vld [vmem:[%s3 + $0x410] sm:$0xff]
        %v4461 = vld [vmem:[%s3 + $0x418] sm:$0xff]
        %v4462 = vld [vmem:[%s3 + $0x420] sm:$0xff]
        %v4463 = vld [vmem:[%s3 + $0x428] sm:$0xff]
        %v4464 = vld [vmem:[%s3 + $0x430] sm:$0xff]
        %v4465 = vld [vmem:[%s3 + $0x438] sm:$0xff]
        %v4466 = vld [vmem:[%s3 + $0x440] sm:$0xff]
        %v4467 = vld [vmem:[%s3 + $0x448] sm:$0xff]
        %v4468 = vld [vmem:[%s3 + $0x450] sm:$0xff]
        %v4469 = vld [vmem:[%s3 + $0x458] sm:$0xff]
        %v4470 = vld [vmem:[%s3 + $0x460] sm:$0xff]
        %v4471 = vld [vmem:[%s3 + $0x468] sm:$0xff]
        %v4472 = vld [vmem:[%s3 + $0x470] sm:$0xff]
        %v4473 = vld [vmem:[%s3 + $0x478] sm:$0xff]
        %v4474 = vld [vmem:[%s4] sm:$0x3]
        %v4476 = vlaneseq
        %v4477 = vshrl.u32 %v4476, 7
        %v4478 = vsub.s32 0, %v4477
        %v4479 = vrot.slane %v4474, %v4478
        %v4480 = vlaneseq
        %v4481 = vshrl.u32 %v4480, 7
        %v4482 = vsub.s32 1, %v4481
        %v4483 = vrot.slane %v4474, %v4482
        %v4630 = vunpack.c.l.b16 %v4330
        %v4631 = vunpack.c.h.b16 %v4330
        %v4632 = vunpack.c.l.b16 %v4331
        %v4633 = vunpack.c.h.b16 %v4331
        %v4634 = vunpack.c.l.b16 %v4332
        %v4635 = vunpack.c.h.b16 %v4332
        %v4636 = vunpack.c.l.b16 %v4333
        %v4637 = vunpack.c.h.b16 %v4333
        %v4638 = vunpack.c.l.b16 %v4334
        %v4639 = vunpack.c.h.b16 %v4334
        %v4640 = vunpack.c.l.b16 %v4335
        %v4641 = vunpack.c.h.b16 %v4335
        %v4642 = vunpack.c.l.b16 %v4336
        %v4643 = vunpack.c.h.b16 %v4336
        %v4644 = vunpack.c.l.b16 %v4337
        %v4645 = vunpack.c.h.b16 %v4337
        %v4646 = vunpack.c.l.b16 %v4338
        %v4647 = vunpack.c.h.b16 %v4338
        %v4648 = vunpack.c.l.b16 %v4339
        %v4649 = vunpack.c.h.b16 %v4339
        %v4650 = vunpack.c.l.b16 %v4340
        %v4651 = vunpack.c.h.b16 %v4340
        %v4652 = vunpack.c.l.b16 %v4341
        %v4653 = vunpack.c.h.b16 %v4341
        %v4654 = vunpack.c.l.b16 %v4342
        %v4655 = vunpack.c.h.b16 %v4342
        %v4656 = vunpack.c.l.b16 %v4343
        %v4657 = vunpack.c.h.b16 %v4343
        %v4658 = vunpack.c.l.b16 %v4344
        %v4659 = vunpack.c.h.b16 %v4344
        %v4660 = vunpack.c.l.b16 %v4345
        %v4661 = vunpack.c.h.b16 %v4345
        %v4662 = vunpack.c.l.b16 %v4346
        %v4663 = vunpack.c.h.b16 %v4346
        %v4664 = vunpack.c.l.b16 %v4347
        %v4665 = vunpack.c.h.b16 %v4347
        %v4666 = vunpack.c.l.b16 %v4348
        %v4667 = vunpack.c.h.b16 %v4348
        %v4668 = vunpack.c.l.b16 %v4349
        %v4669 = vunpack.c.h.b16 %v4349
        %v4670 = vunpack.c.l.b16 %v4350
        %v4671 = vunpack.c.h.b16 %v4350
        %v4672 = vunpack.c.l.b16 %v4351
        %v4673 = vunpack.c.h.b16 %v4351
        %v4674 = vunpack.c.l.b16 %v4352
        %v4675 = vunpack.c.h.b16 %v4352
        %v4676 = vunpack.c.l.b16 %v4353
        %v4677 = vunpack.c.h.b16 %v4353
        %v4678 = vunpack.c.l.b16 %v4354
        %v4679 = vunpack.c.h.b16 %v4354
        %v4680 = vunpack.c.l.b16 %v4355
        %v4681 = vunpack.c.h.b16 %v4355
        %v4682 = vunpack.c.l.b16 %v4356
        %v4683 = vunpack.c.h.b16 %v4356
        %v4684 = vunpack.c.l.b16 %v4357
        %v4685 = vunpack.c.h.b16 %v4357
        %v4686 = vunpack.c.l.b16 %v4358
        %v4687 = vunpack.c.h.b16 %v4358
        %v4688 = vunpack.c.l.b16 %v4359
        %v4689 = vunpack.c.h.b16 %v4359
        %v4690 = vunpack.c.l.b16 %v4360
        %v4691 = vunpack.c.h.b16 %v4360
        %v4692 = vunpack.c.l.b16 %v4361
        %v4693 = vunpack.c.h.b16 %v4361
        %v4694 = vunpack.c.l.b16 %v4362
        %v4695 = vunpack.c.h.b16 %v4362
        %v4696 = vunpack.c.l.b16 %v4363
        %v4697 = vunpack.c.h.b16 %v4363
        %v4698 = vunpack.c.l.b16 %v4364
        %v4699 = vunpack.c.h.b16 %v4364
        %v4700 = vunpack.c.l.b16 %v4365
        %v4701 = vunpack.c.h.b16 %v4365
        %v4702 = vunpack.c.l.b16 %v4366
        %v4703 = vunpack.c.h.b16 %v4366
        %v4704 = vunpack.c.l.b16 %v4367
        %v4705 = vunpack.c.h.b16 %v4367
        %v4706 = vunpack.c.l.b16 %v4368
        %v4707 = vunpack.c.h.b16 %v4368
        %v4708 = vunpack.c.l.b16 %v4369
        %v4709 = vunpack.c.h.b16 %v4369
        %v4710 = vunpack.c.l.b16 %v4370
        %v4711 = vunpack.c.h.b16 %v4370
        %v4712 = vunpack.c.l.b16 %v4371
        %v4713 = vunpack.c.h.b16 %v4371
        %v4714 = vunpack.c.l.b16 %v4372
        %v4715 = vunpack.c.h.b16 %v4372
        %v4716 = vunpack.c.l.b16 %v4373
        %v4717 = vunpack.c.h.b16 %v4373
        %v4718 = vunpack.c.l.b16 %v4374
        %v4719 = vunpack.c.h.b16 %v4374
        %v4720 = vunpack.c.l.b16 %v4375
        %v4721 = vunpack.c.h.b16 %v4375
        %v4722 = vunpack.c.l.b16 %v4376
        %v4723 = vunpack.c.h.b16 %v4376
        %v4724 = vunpack.c.l.b16 %v4377
        %v4725 = vunpack.c.h.b16 %v4377
        %v4726 = vunpack.c.l.b16 %v4378
        %v4727 = vunpack.c.h.b16 %v4378
        %v4728 = vunpack.c.l.b16 %v4379
        %v4729 = vunpack.c.h.b16 %v4379
        %v4730 = vunpack.c.l.b16 %v4380
        %v4731 = vunpack.c.h.b16 %v4380
        %v4732 = vunpack.c.l.b16 %v4381
        %v4733 = vunpack.c.h.b16 %v4381
        %v4734 = vunpack.c.l.b16 %v4382
        %v4735 = vunpack.c.h.b16 %v4382
        %v4736 = vunpack.c.l.b16 %v4383
        %v4737 = vunpack.c.h.b16 %v4383
        %v4738 = vunpack.c.l.b16 %v4384
        %v4739 = vunpack.c.h.b16 %v4384
        %v4740 = vunpack.c.l.b16 %v4385
        %v4741 = vunpack.c.h.b16 %v4385
        %v4742 = vunpack.c.l.b16 %v4386
        %v4743 = vunpack.c.h.b16 %v4386
        %v4744 = vunpack.c.l.b16 %v4387
        %v4745 = vunpack.c.h.b16 %v4387
        %v4746 = vunpack.c.l.b16 %v4388
        %v4747 = vunpack.c.h.b16 %v4388
        %v4748 = vunpack.c.l.b16 %v4389
        %v4749 = vunpack.c.h.b16 %v4389
        %v4750 = vunpack.c.l.b16 %v4390
        %v4751 = vunpack.c.h.b16 %v4390
        %v4752 = vunpack.c.l.b16 %v4391
        %v4753 = vunpack.c.h.b16 %v4391
        %v4754 = vunpack.c.l.b16 %v4392
        %v4755 = vunpack.c.h.b16 %v4392
        %v4756 = vunpack.c.l.b16 %v4393
        %v4757 = vunpack.c.h.b16 %v4393
        %v4758 = vunpack.c.l.b16 %v4394
        %v4759 = vunpack.c.h.b16 %v4394
        %v4760 = vunpack.c.l.b16 %v4395
        %v4761 = vunpack.c.h.b16 %v4395
        %v4762 = vunpack.c.l.b16 %v4396
        %v4763 = vunpack.c.h.b16 %v4396
        %v4764 = vunpack.c.l.b16 %v4397
        %v4765 = vunpack.c.h.b16 %v4397
        %v4766 = vunpack.c.l.b16 %v4398
        %v4767 = vunpack.c.h.b16 %v4398
        %v4768 = vunpack.c.l.b16 %v4399
        %v4769 = vunpack.c.h.b16 %v4399
        %v4770 = vunpack.c.l.b16 %v4400
        %v4771 = vunpack.c.h.b16 %v4400
        %v4772 = vunpack.c.l.b16 %v4401
        %v4773 = vunpack.c.h.b16 %v4401
        %v4774 = vunpack.c.l.b16 %v4402
        %v4775 = vunpack.c.h.b16 %v4402
        %v4776 = vunpack.c.l.b16 %v4403
        %v4777 = vunpack.c.h.b16 %v4403
        %v4778 = vunpack.c.l.b16 %v4404
        %v4779 = vunpack.c.h.b16 %v4404
        %v4780 = vunpack.c.l.b16 %v4405
        %v4781 = vunpack.c.h.b16 %v4405
        %v4782 = vunpack.c.l.b16 %v4406
        %v4783 = vunpack.c.h.b16 %v4406
        %v4784 = vunpack.c.l.b16 %v4407
        %v4785 = vunpack.c.h.b16 %v4407
        %v4786 = vunpack.c.l.b16 %v4408
        %v4787 = vunpack.c.h.b16 %v4408
        %v4788 = vunpack.c.l.b16 %v4409
        %v4789 = vunpack.c.h.b16 %v4409
        %v4790 = vunpack.c.l.b16 %v4410
        %v4791 = vunpack.c.h.b16 %v4410
        %v4792 = vunpack.c.l.b16 %v4411
        %v4793 = vunpack.c.h.b16 %v4411
        %v4794 = vunpack.c.l.b16 %v4412
        %v4795 = vunpack.c.h.b16 %v4412
        %v4796 = vunpack.c.l.b16 %v4413
        %v4797 = vunpack.c.h.b16 %v4413
        %v4798 = vunpack.c.l.b16 %v4414
        %v4799 = vunpack.c.h.b16 %v4414
        %v4800 = vunpack.c.l.b16 %v4415
        %v4801 = vunpack.c.h.b16 %v4415
        %v4802 = vunpack.c.l.b16 %v4416
        %v4803 = vunpack.c.h.b16 %v4416
        %v4804 = vunpack.c.l.b16 %v4417
        %v4805 = vunpack.c.h.b16 %v4417
        %v4806 = vunpack.c.l.b16 %v4418
        %v4807 = vunpack.c.h.b16 %v4418
        %v4808 = vunpack.c.l.b16 %v4419
        %v4809 = vunpack.c.h.b16 %v4419
        %v4810 = vunpack.c.l.b16 %v4420
        %v4811 = vunpack.c.h.b16 %v4420
        %v4812 = vunpack.c.l.b16 %v4421
        %v4813 = vunpack.c.h.b16 %v4421
        %v4814 = vunpack.c.l.b16 %v4422
        %v4815 = vunpack.c.h.b16 %v4422
        %v4816 = vunpack.c.l.b16 %v4423
        %v4817 = vunpack.c.h.b16 %v4423
        %v4818 = vunpack.c.l.b16 %v4424
        %v4819 = vunpack.c.h.b16 %v4424
        %v4820 = vunpack.c.l.b16 %v4425
        %v4821 = vunpack.c.h.b16 %v4425
        %v4822 = vunpack.c.l.b16 %v4426
        %v4823 = vunpack.c.h.b16 %v4426
        %v4824 = vunpack.c.l.b16 %v4427
        %v4825 = vunpack.c.h.b16 %v4427
        %v4826 = vunpack.c.l.b16 %v4428
        %v4827 = vunpack.c.h.b16 %v4428
        %v4828 = vunpack.c.l.b16 %v4429
        %v4829 = vunpack.c.h.b16 %v4429
        %v4830 = vunpack.c.l.b16 %v4430
        %v4831 = vunpack.c.h.b16 %v4430
        %v4832 = vunpack.c.l.b16 %v4431
        %v4833 = vunpack.c.h.b16 %v4431
        %v4834 = vunpack.c.l.b16 %v4432
        %v4835 = vunpack.c.h.b16 %v4432
        %v4836 = vunpack.c.l.b16 %v4433
        %v4837 = vunpack.c.h.b16 %v4433
        %v4838 = vunpack.c.l.b16 %v4434
        %v4839 = vunpack.c.h.b16 %v4434
        %v4840 = vunpack.c.l.b16 %v4435
        %v4841 = vunpack.c.h.b16 %v4435
        %v4842 = vunpack.c.l.b16 %v4436
        %v4843 = vunpack.c.h.b16 %v4436
        %v4844 = vunpack.c.l.b16 %v4437
        %v4845 = vunpack.c.h.b16 %v4437
        %v4846 = vunpack.c.l.b16 %v4438
        %v4847 = vunpack.c.h.b16 %v4438
        %v4848 = vunpack.c.l.b16 %v4439
        %v4849 = vunpack.c.h.b16 %v4439
        %v4850 = vunpack.c.l.b16 %v4440
        %v4851 = vunpack.c.h.b16 %v4440
        %v4852 = vunpack.c.l.b16 %v4441
        %v4853 = vunpack.c.h.b16 %v4441
        %v4854 = vunpack.c.l.b16 %v4442
        %v4855 = vunpack.c.h.b16 %v4442
        %v4856 = vunpack.c.l.b16 %v4443
        %v4857 = vunpack.c.h.b16 %v4443
        %v4858 = vunpack.c.l.b16 %v4444
        %v4859 = vunpack.c.h.b16 %v4444
        %v4860 = vunpack.c.l.b16 %v4445
        %v4861 = vunpack.c.h.b16 %v4445
        %v4862 = vunpack.c.l.b16 %v4446
        %v4863 = vunpack.c.h.b16 %v4446
        %v4864 = vunpack.c.l.b16 %v4447
        %v4865 = vunpack.c.h.b16 %v4447
        %v4866 = vunpack.c.l.b16 %v4448
        %v4867 = vunpack.c.h.b16 %v4448
        %v4868 = vunpack.c.l.b16 %v4449
        %v4869 = vunpack.c.h.b16 %v4449
        %v4870 = vunpack.c.l.b16 %v4450
        %v4871 = vunpack.c.h.b16 %v4450
        %v4872 = vunpack.c.l.b16 %v4451
        %v4873 = vunpack.c.h.b16 %v4451
        %v4874 = vunpack.c.l.b16 %v4452
        %v4875 = vunpack.c.h.b16 %v4452
        %v4876 = vunpack.c.l.b16 %v4453
        %v4877 = vunpack.c.h.b16 %v4453
        %v4878 = vunpack.c.l.b16 %v4454
        %v4879 = vunpack.c.h.b16 %v4454
        %v4880 = vunpack.c.l.b16 %v4455
        %v4881 = vunpack.c.h.b16 %v4455
        %v4882 = vunpack.c.l.b16 %v4456
        %v4883 = vunpack.c.h.b16 %v4456
        %v4884 = vunpack.c.l.b16 %v4457
        %v4885 = vunpack.c.h.b16 %v4457
        %v4886 = vunpack.c.l.b16 %v4458
        %v4887 = vunpack.c.h.b16 %v4458
        %v4888 = vunpack.c.l.b16 %v4459
        %v4889 = vunpack.c.h.b16 %v4459
        %v4890 = vunpack.c.l.b16 %v4460
        %v4891 = vunpack.c.h.b16 %v4460
        %v4892 = vunpack.c.l.b16 %v4461
        %v4893 = vunpack.c.h.b16 %v4461
        %v4894 = vunpack.c.l.b16 %v4462
        %v4895 = vunpack.c.h.b16 %v4462
        %v4896 = vunpack.c.l.b16 %v4463
        %v4897 = vunpack.c.h.b16 %v4463
        %v4898 = vunpack.c.l.b16 %v4464
        %v4899 = vunpack.c.h.b16 %v4464
        %v4900 = vunpack.c.l.b16 %v4465
        %v4901 = vunpack.c.h.b16 %v4465
        %v4902 = vunpack.c.l.b16 %v4466
        %v4903 = vunpack.c.h.b16 %v4466
        %v4904 = vunpack.c.l.b16 %v4467
        %v4905 = vunpack.c.h.b16 %v4467
        %v4906 = vunpack.c.l.b16 %v4468
        %v4907 = vunpack.c.h.b16 %v4468
        %v4908 = vunpack.c.l.b16 %v4469
        %v4909 = vunpack.c.h.b16 %v4469
        %v4910 = vunpack.c.l.b16 %v4470
        %v4911 = vunpack.c.h.b16 %v4470
        %v4912 = vunpack.c.l.b16 %v4471
        %v4913 = vunpack.c.h.b16 %v4471
        %v4914 = vunpack.c.l.b16 %v4472
        %v4915 = vunpack.c.h.b16 %v4472
        %v4916 = vunpack.c.l.b16 %v4473
        %v4917 = vunpack.c.h.b16 %v4473
        %v4918 = vpack.c.b16 %v4632, %v4630
        %v4919 = vpack.c.b16 %v4633, %v4631
        %v4920 = vpack.c.b16 %v4636, %v4634
        %v4921 = vpack.c.b16 %v4637, %v4635
        %v4922 = vpack.c.b16 %v4640, %v4638
        %v4923 = vpack.c.b16 %v4641, %v4639
        %v4924 = vpack.c.b16 %v4644, %v4642
        %v4925 = vpack.c.b16 %v4645, %v4643
        %v4926 = vpack.c.b16 %v4648, %v4646
        %v4927 = vpack.c.b16 %v4649, %v4647
        %v4928 = vpack.c.b16 %v4652, %v4650
        %v4929 = vpack.c.b16 %v4653, %v4651
        %v4930 = vpack.c.b16 %v4656, %v4654
        %v4931 = vpack.c.b16 %v4657, %v4655
        %v4932 = vpack.c.b16 %v4660, %v4658
        %v4933 = vpack.c.b16 %v4661, %v4659
        %v4934 = vpack.c.b16 %v4664, %v4662
        %v4935 = vpack.c.b16 %v4665, %v4663
        %v4936 = vpack.c.b16 %v4668, %v4666
        %v4937 = vpack.c.b16 %v4669, %v4667
        %v4938 = vpack.c.b16 %v4672, %v4670
        %v4939 = vpack.c.b16 %v4673, %v4671
        %v4940 = vpack.c.b16 %v4676, %v4674
        %v4941 = vpack.c.b16 %v4677, %v4675
        %v4942 = vpack.c.b16 %v4680, %v4678
        %v4943 = vpack.c.b16 %v4681, %v4679
        %v4944 = vpack.c.b16 %v4684, %v4682
        %v4945 = vpack.c.b16 %v4685, %v4683
        %v4946 = vpack.c.b16 %v4688, %v4686
        %v4947 = vpack.c.b16 %v4689, %v4687
        %v4948 = vpack.c.b16 %v4692, %v4690
        %v4949 = vpack.c.b16 %v4693, %v4691
        %v4950 = vpack.c.b16 %v4696, %v4694
        %v4951 = vpack.c.b16 %v4697, %v4695
        %v4952 = vpack.c.b16 %v4700, %v4698
        %v4953 = vpack.c.b16 %v4701, %v4699
        %v4954 = vpack.c.b16 %v4704, %v4702
        %v4955 = vpack.c.b16 %v4705, %v4703
        %v4956 = vpack.c.b16 %v4708, %v4706
        %v4957 = vpack.c.b16 %v4709, %v4707
        %v4958 = vpack.c.b16 %v4712, %v4710
        %v4959 = vpack.c.b16 %v4713, %v4711
        %v4960 = vpack.c.b16 %v4716, %v4714
        %v4961 = vpack.c.b16 %v4717, %v4715
        %v4962 = vpack.c.b16 %v4720, %v4718
        %v4963 = vpack.c.b16 %v4721, %v4719
        %v4964 = vpack.c.b16 %v4724, %v4722
        %v4965 = vpack.c.b16 %v4725, %v4723
        %v4966 = vpack.c.b16 %v4728, %v4726
        %v4967 = vpack.c.b16 %v4729, %v4727
        %v4968 = vpack.c.b16 %v4732, %v4730
        %v4969 = vpack.c.b16 %v4733, %v4731
        %v4970 = vpack.c.b16 %v4736, %v4734
        %v4971 = vpack.c.b16 %v4737, %v4735
        %v4972 = vpack.c.b16 %v4740, %v4738
        %v4973 = vpack.c.b16 %v4741, %v4739
        %v4974 = vpack.c.b16 %v4744, %v4742
        %v4975 = vpack.c.b16 %v4745, %v4743
        %v4976 = vpack.c.b16 %v4748, %v4746
        %v4977 = vpack.c.b16 %v4749, %v4747
        %v4978 = vpack.c.b16 %v4752, %v4750
        %v4979 = vpack.c.b16 %v4753, %v4751
        %v4980 = vpack.c.b16 %v4756, %v4754
        %v4981 = vpack.c.b16 %v4757, %v4755
        %v4982 = vpack.c.b16 %v4760, %v4758
        %v4983 = vpack.c.b16 %v4761, %v4759
        %v4984 = vpack.c.b16 %v4764, %v4762
        %v4985 = vpack.c.b16 %v4765, %v4763
        %v4986 = vpack.c.b16 %v4768, %v4766
        %v4987 = vpack.c.b16 %v4769, %v4767
        %v4988 = vpack.c.b16 %v4772, %v4770
        %v4989 = vpack.c.b16 %v4773, %v4771
        %v4990 = vpack.c.b16 %v4776, %v4774
        %v4991 = vpack.c.b16 %v4777, %v4775
        %v4992 = vpack.c.b16 %v4780, %v4778
        %v4993 = vpack.c.b16 %v4781, %v4779
        %v4994 = vpack.c.b16 %v4784, %v4782
        %v4995 = vpack.c.b16 %v4785, %v4783
        %v4996 = vpack.c.b16 %v4788, %v4786
        %v4997 = vpack.c.b16 %v4789, %v4787
        %v4998 = vpack.c.b16 %v4792, %v4790
        %v4999 = vpack.c.b16 %v4793, %v4791
        %v5000 = vpack.c.b16 %v4796, %v4794
        %v5001 = vpack.c.b16 %v4797, %v4795
        %v5002 = vpack.c.b16 %v4800, %v4798
        %v5003 = vpack.c.b16 %v4801, %v4799
        %v5004 = vpack.c.b16 %v4804, %v4802
        %v5005 = vpack.c.b16 %v4805, %v4803
        %v5006 = vpack.c.b16 %v4808, %v4806
        %v5007 = vpack.c.b16 %v4809, %v4807
        %v5008 = vpack.c.b16 %v4812, %v4810
        %v5009 = vpack.c.b16 %v4813, %v4811
        %v5010 = vpack.c.b16 %v4816, %v4814
        %v5011 = vpack.c.b16 %v4817, %v4815
        %v5012 = vpack.c.b16 %v4820, %v4818
        %v5013 = vpack.c.b16 %v4821, %v4819
        %v5014 = vpack.c.b16 %v4824, %v4822
        %v5015 = vpack.c.b16 %v4825, %v4823
        %v5016 = vpack.c.b16 %v4828, %v4826
        %v5017 = vpack.c.b16 %v4829, %v4827
        %v5018 = vpack.c.b16 %v4832, %v4830
        %v5019 = vpack.c.b16 %v4833, %v4831
        %v5020 = vpack.c.b16 %v4836, %v4834
        %v5021 = vpack.c.b16 %v4837, %v4835
        %v5022 = vpack.c.b16 %v4840, %v4838
        %v5023 = vpack.c.b16 %v4841, %v4839
        %v5024 = vpack.c.b16 %v4844, %v4842
        %v5025 = vpack.c.b16 %v4845, %v4843
        %v5026 = vpack.c.b16 %v4848, %v4846
        %v5027 = vpack.c.b16 %v4849, %v4847
        %v5028 = vpack.c.b16 %v4852, %v4850
        %v5029 = vpack.c.b16 %v4853, %v4851
        %v5030 = vpack.c.b16 %v4856, %v4854
        %v5031 = vpack.c.b16 %v4857, %v4855
        %v5032 = vpack.c.b16 %v4860, %v4858
        %v5033 = vpack.c.b16 %v4861, %v4859
        %v5034 = vpack.c.b16 %v4864, %v4862
        %v5035 = vpack.c.b16 %v4865, %v4863
        %v5036 = vpack.c.b16 %v4868, %v4866
        %v5037 = vpack.c.b16 %v4869, %v4867
        %v5038 = vpack.c.b16 %v4872, %v4870
        %v5039 = vpack.c.b16 %v4873, %v4871
        %v5040 = vpack.c.b16 %v4876, %v4874
        %v5041 = vpack.c.b16 %v4877, %v4875
        %v5042 = vpack.c.b16 %v4880, %v4878
        %v5043 = vpack.c.b16 %v4881, %v4879
        %v5044 = vpack.c.b16 %v4884, %v4882
        %v5045 = vpack.c.b16 %v4885, %v4883
        %v5046 = vpack.c.b16 %v4888, %v4886
        %v5047 = vpack.c.b16 %v4889, %v4887
        %v5048 = vpack.c.b16 %v4892, %v4890
        %v5049 = vpack.c.b16 %v4893, %v4891
        %v5050 = vpack.c.b16 %v4896, %v4894
        %v5051 = vpack.c.b16 %v4897, %v4895
        %v5052 = vpack.c.b16 %v4900, %v4898
        %v5053 = vpack.c.b16 %v4901, %v4899
        %v5054 = vpack.c.b16 %v4904, %v4902
        %v5055 = vpack.c.b16 %v4905, %v4903
        %v5056 = vpack.c.b16 %v4908, %v4906
        %v5057 = vpack.c.b16 %v4909, %v4907
        %v5058 = vpack.c.b16 %v4912, %v4910
        %v5059 = vpack.c.b16 %v4913, %v4911
        %v5060 = vpack.c.b16 %v4916, %v4914
        %v5061 = vpack.c.b16 %v4917, %v4915
        %5206 = vmatprep.subr.bf16.mxu0 %v4919
        %5207 = vmatpush1.bf16.msra.mxu0 %v4918
        %5208 = vmatprep.subr.bf16.mxu0 %v4921
        %5209 = vmatpush1.bf16.msra.mxu0 %v4920
        %5210 = vmatprep.subr.bf16.mxu0 %v4923
        %5211 = vmatpush1.bf16.msra.mxu0 %v4922
        %5212 = vmatprep.subr.bf16.mxu0 %v4925
        %5213 = vmatpush1.bf16.msra.mxu0 %v4924
        %5214 = vmatprep.subr.bf16.mxu0 %v4927
        %5215 = vmatpush1.bf16.msra.mxu0 %v4926
        %5216 = vmatprep.subr.bf16.mxu0 %v4929
        %5217 = vmatpush1.bf16.msra.mxu0 %v4928
        %5218 = vmatprep.subr.bf16.mxu0 %v4931
        %5219 = vmatpush1.bf16.msra.mxu0 %v4930
        %5220 = vmatprep.subr.bf16.mxu0 %v4933
        %5221 = vmatpush1.bf16.msra.mxu0 %v4932
        %5222 = vmatprep.subr.bf16.mxu0 %v4935
        %5223 = vmatpush1.bf16.msra.mxu0 %v4934
        %5224 = vmatprep.subr.bf16.mxu0 %v4937
        %5225 = vmatpush1.bf16.msra.mxu0 %v4936
        %5226 = vmatprep.subr.bf16.mxu0 %v4939
        %5227 = vmatpush1.bf16.msra.mxu0 %v4938
        %5228 = vmatprep.subr.bf16.mxu0 %v4941
        %5229 = vmatpush1.bf16.msra.mxu0 %v4940
        %5230 = vmatprep.subr.bf16.mxu0 %v4943
        %5231 = vmatpush1.bf16.msra.mxu0 %v4942
        %5232 = vmatprep.subr.bf16.mxu0 %v4945
        %5233 = vmatpush1.bf16.msra.mxu0 %v4944
        %5234 = vmatprep.subr.bf16.mxu0 %v4947
        %5235 = vmatpush1.bf16.msra.mxu0 %v4946
        %5236 = vmatprep.subr.bf16.mxu0 %v4949
        %5237 = vmatpush1.bf16.msra.mxu0 %v4948
        %5238 = vmatprep.mubr.bf16.mxu0 %v1778
        %5239 = vmatmul.mubr.bf16.gmra.mrb[0].mxu0 %v1778
        %v5240 = vpop.f32.mrb[0].mxu0
        %v5241 = vadd.f32 %v4479, %v5240
        %v5242 = vpop.f32.mrb[0].mxu0
        %v5243 = vadd.f32 %v4483, %v5242
        %v5244 = vpop.f32.mrb[0].mxu0
        %v5245 = vadd.f32 %v4479, %v5244
        %v5246 = vpop.f32.mrb[0].mxu0
        %v5247 = vadd.f32 %v4483, %v5246
        %5248 = vmatprep.mubr.bf16.mxu0 %v1778
        %5249 = vmatmul.mubr.bf16.gmra.mrb[0].mxu0 %v1778
        %v5250 = vpop.f32.mrb[0].mxu0
        %v5251 = vadd.f32 %v4479, %v5250
        %v5252 = vpop.f32.mrb[0].mxu0
        %v5253 = vadd.f32 %v4483, %v5252
        %v5254 = vpop.f32.mrb[0].mxu0
        %v5255 = vadd.f32 %v4479, %v5254
        %v5256 = vpop.f32.mrb[0].mxu0
        %v5257 = vadd.f32 %v4483, %v5256
        %5258 = vmatprep.mubr.bf16.mxu0 %v4294
        %5259 = vmatmul.mubr.bf16.gmra.mrb[0].mxu0 %v4276
        %v5260 = vpop.f32.mrb[0].mxu0
        %v5261 = vadd.f32 %v4479, %v5260
        %v5262 = vpop.f32.mrb[0].mxu0
        %v5263 = vadd.f32 %v4483, %v5262
        %v5264 = vpop.f32.mrb[0].mxu0
        %v5265 = vadd.f32 %v4479, %v5264
        %v5266 = vpop.f32.mrb[0].mxu0
        %v5267 = vadd.f32 %v4483, %v5266
        %5268 = vmatprep.mubr.bf16.mxu0 %v4295
        %5269 = vmatmul.mubr.bf16.gmra.mrb[0].mxu0 %v4277
        %v5270 = vpop.f32.mrb[0].mxu0
        %v5271 = vadd.f32 %v4479, %v5270
        %v5272 = vpop.f32.mrb[0].mxu0
        %v5273 = vadd.f32 %v4483, %v5272
        %v5274 = vpop.f32.mrb[0].mxu0
        %v5275 = vadd.f32 %v4479, %v5274
        %v5276 = vpop.f32.mrb[0].mxu0
        %v5277 = vadd.f32 %v4483, %v5276
        %5278 = vmatprep.mubr.bf16.mxu0 %v4296
        %5279 = vmatmul.mubr.bf16.gmra.mrb[0].mxu0 %v4278
        %v5280 = vpop.f32.mrb[0].mxu0
        %v5281 = vadd.f32 %v4479, %v5280
        %v5282 = vpop.f32.mrb[0].mxu0
        %v5283 = vadd.f32 %v4483, %v5282
        %v5284 = vpop.f32.mrb[0].mxu0
        %v5285 = vadd.f32 %v4479, %v5284
        %v5286 = vpop.f32.mrb[0].mxu0
        %v5287 = vadd.f32 %v4483, %v5286
        %5288 = vmatprep.mubr.bf16.mxu0 %v4297
        %5289 = vmatmul.mubr.bf16.gmra.mrb[0].mxu0 %v4279
        %v5290 = vpop.f32.mrb[0].mxu0
        %v5291 = vadd.f32 %v4479, %v5290
        %v5292 = vpop.f32.mrb[0].mxu0
        %v5293 = vadd.f32 %v4483, %v5292
        %v5294 = vpop.f32.mrb[0].mxu0
        %v5295 = vadd.f32 %v4479, %v5294
        %v5296 = vpop.f32.mrb[0].mxu0
        %v5297 = vadd.f32 %v4483, %v5296
        %5298 = vmatprep.mubr.bf16.mxu0 %v4298
        %5299 = vmatmul.mubr.bf16.gmra.mrb[0].mxu0 %v4280
        %v5300 = vpop.f32.mrb[0].mxu0
        %v5301 = vadd.f32 %v4479, %v5300
        %v5302 = vpop.f32.mrb[0].mxu0
        %v5303 = vadd.f32 %v4483, %v5302
        %v5304 = vpop.f32.mrb[0].mxu0
        %v5305 = vadd.f32 %v4479, %v5304
        %v5306 = vpop.f32.mrb[0].mxu0
        %v5307 = vadd.f32 %v4483, %v5306
        %5308 = vmatprep.mubr.bf16.mxu0 %v4299
        %5309 = vmatmul.mubr.bf16.gmra.mrb[0].mxu0 %v4281
        %v5310 = vpop.f32.mrb[0].mxu0
        %v5311 = vadd.f32 %v4479, %v5310
        %v5312 = vpop.f32.mrb[0].mxu0
        %v5313 = vadd.f32 %v4483, %v5312
        %v5314 = vpop.f32.mrb[0].mxu0
        %v5315 = vadd.f32 %v4479, %v5314
        %v5316 = vpop.f32.mrb[0].mxu0
        %v5317 = vadd.f32 %v4483, %v5316
        %5318 = vdwg.mxu0
        %5319 = vmatprep.subr.bf16.mxu0 %v4951
        %5320 = vmatpush1.bf16.msra.mxu0 %v4950
        %5321 = vmatprep.subr.bf16.mxu0 %v4953
        %5322 = vmatpush1.bf16.msra.mxu0 %v4952
        %5323 = vmatprep.subr.bf16.mxu0 %v4955
        %5324 = vmatpush1.bf16.msra.mxu0 %v4954
        %5325 = vmatprep.subr.bf16.mxu0 %v4957
        %5326 = vmatpush1.bf16.msra.mxu0 %v4956
        %5327 = vmatprep.subr.bf16.mxu0 %v4959
        %5328 = vmatpush1.bf16.msra.mxu0 %v4958
        %5329 = vmatprep.subr.bf16.mxu0 %v4961
        %5330 = vmatpush1.bf16.msra.mxu0 %v4960
        %5331 = vmatprep.subr.bf16.mxu0 %v4963
        %5332 = vmatpush1.bf16.msra.mxu0 %v4962
        %5333 = vmatprep.subr.bf16.mxu0 %v4965
        %5334 = vmatpush1.bf16.msra.mxu0 %v4964
        %5335 = vmatprep.subr.bf16.mxu0 %v4967
        %5336 = vmatpush1.bf16.msra.mxu0 %v4966
        %5337 = vmatprep.subr.bf16.mxu0 %v4969
        %5338 = vmatpush1.bf16.msra.mxu0 %v4968
        %5339 = vmatprep.subr.bf16.mxu0 %v4971
        %5340 = vmatpush1.bf16.msra.mxu0 %v4970
        %5341 = vmatprep.subr.bf16.mxu0 %v4973
        %5342 = vmatpush1.bf16.msra.mxu0 %v4972
        %5343 = vmatprep.subr.bf16.mxu0 %v4975
        %5344 = vmatpush1.bf16.msra.mxu0 %v4974
        %5345 = vmatprep.subr.bf16.mxu0 %v4977
        %5346 = vmatpush1.bf16.msra.mxu0 %v4976
        %5347 = vmatprep.subr.bf16.mxu0 %v4979
        %5348 = vmatpush1.bf16.msra.mxu0 %v4978
        %5349 = vmatprep.subr.bf16.mxu0 %v4981
        %5350 = vmatpush1.bf16.msra.mxu0 %v4980
        %5351 = vmatprep.mubr.bf16.mxu0 %v4276
        %5352 = vmatmul.mubr.bf16.gmra.mrb[0].mxu0 %v1778
        %v5353 = vpop.f32.mrb[0].mxu0
        %v5354 = vadd.f32 %v5241, %v5353
        %v5355 = vpop.f32.mrb[0].mxu0
        %v5356 = vadd.f32 %v5243, %v5355
        %v5357 = vpop.f32.mrb[0].mxu0
        %v5358 = vadd.f32 %v5245, %v5357
        %v5359 = vpop.f32.mrb[0].mxu0
        %v5360 = vadd.f32 %v5247, %v5359
        %5361 = vmatprep.mubr.bf16.mxu0 %v4277
        %5362 = vmatmul.mubr.bf16.gmra.mrb[0].mxu0 %v1778
        %v5363 = vpop.f32.mrb[0].mxu0
        %v5364 = vadd.f32 %v5251, %v5363
        %v5365 = vpop.f32.mrb[0].mxu0
        %v5366 = vadd.f32 %v5253, %v5365
        %v5367 = vpop.f32.mrb[0].mxu0
        %v5368 = vadd.f32 %v5255, %v5367
        %v5369 = vpop.f32.mrb[0].mxu0
        %v5370 = vadd.f32 %v5257, %v5369
        %5371 = vmatprep.mubr.bf16.mxu0 %v4278
        %5372 = vmatmul.mubr.bf16.gmra.mrb[0].mxu0 %v4277
        %v5373 = vpop.f32.mrb[0].mxu0
        %v5374 = vadd.f32 %v5261, %v5373
        %v5375 = vpop.f32.mrb[0].mxu0
        %v5376 = vadd.f32 %v5263, %v5375
        %v5377 = vpop.f32.mrb[0].mxu0
        %v5378 = vadd.f32 %v5265, %v5377
        %v5379 = vpop.f32.mrb[0].mxu0
        %v5380 = vadd.f32 %v5267, %v5379
        %5381 = vmatprep.mubr.bf16.mxu0 %v4279
        %5382 = vmatmul.mubr.bf16.gmra.mrb[0].mxu0 %v4306
        %v5383 = vpop.f32.mrb[0].mxu0
        %v5384 = vadd.f32 %v5271, %v5383
        %v5385 = vpop.f32.mrb[0].mxu0
        %v5386 = vadd.f32 %v5273, %v5385
        %v5387 = vpop.f32.mrb[0].mxu0
        %v5388 = vadd.f32 %v5275, %v5387
        %v5389 = vpop.f32.mrb[0].mxu0
        %v5390 = vadd.f32 %v5277, %v5389
        %5391 = vmatprep.mubr.bf16.mxu0 %v4280
        %5392 = vmatmul.mubr.bf16.gmra.mrb[0].mxu0 %v4279
        %v5393 = vpop.f32.mrb[0].mxu0
        %v5394 = vadd.f32 %v5281, %v5393
        %v5395 = vpop.f32.mrb[0].mxu0
        %v5396 = vadd.f32 %v5283, %v5395
        %v5397 = vpop.f32.mrb[0].mxu0
        %v5398 = vadd.f32 %v5285, %v5397
        %v5399 = vpop.f32.mrb[0].mxu0
        %v5400 = vadd.f32 %v5287, %v5399
        %5401 = vmatprep.mubr.bf16.mxu0 %v4281
        %5402 = vmatmul.mubr.bf16.gmra.mrb[0].mxu0 %v4307
        %v5403 = vpop.f32.mrb[0].mxu0
        %v5404 = vadd.f32 %v5291, %v5403
        %v5405 = vpop.f32.mrb[0].mxu0
        %v5406 = vadd.f32 %v5293, %v5405
        %v5407 = vpop.f32.mrb[0].mxu0
        %v5408 = vadd.f32 %v5295, %v5407
        %v5409 = vpop.f32.mrb[0].mxu0
        %v5410 = vadd.f32 %v5297, %v5409
        %5411 = vmatprep.mubr.bf16.mxu0 %v4318
        %5412 = vmatmul.mubr.bf16.gmra.mrb[0].mxu0 %v4281
        %v5413 = vpop.f32.mrb[0].mxu0
        %v5414 = vadd.f32 %v5301, %v5413
        %v5415 = vpop.f32.mrb[0].mxu0
        %v5416 = vadd.f32 %v5303, %v5415
        %v5417 = vpop.f32.mrb[0].mxu0
        %v5418 = vadd.f32 %v5305, %v5417
        %v5419 = vpop.f32.mrb[0].mxu0
        %v5420 = vadd.f32 %v5307, %v5419
        %5421 = vmatprep.mubr.bf16.mxu0 %v4319
        %5422 = vmatmul.mubr.bf16.gmra.mrb[0].mxu0 %v4308
        %v5423 = vpop.f32.mrb[0].mxu0
        %v5424 = vadd.f32 %v5311, %v5423
        %v5425 = vpop.f32.mrb[0].mxu0
        %v5426 = vadd.f32 %v5313, %v5425
        %v5427 = vpop.f32.mrb[0].mxu0
        %v5428 = vadd.f32 %v5315, %v5427
        %v5429 = vpop.f32.mrb[0].mxu0
        %v5430 = vadd.f32 %v5317, %v5429
        %5431 = vdwg.mxu0
        %5432 = vmatprep.subr.bf16.mxu0 %v4983
        %5433 = vmatpush1.bf16.msra.mxu0 %v4982
        %5434 = vmatprep.subr.bf16.mxu0 %v4985
        %5435 = vmatpush1.bf16.msra.mxu0 %v4984
        %5436 = vmatprep.subr.bf16.mxu0 %v4987
        %5437 = vmatpush1.bf16.msra.mxu0 %v4986
        %5438 = vmatprep.subr.bf16.mxu0 %v4989
        %5439 = vmatpush1.bf16.msra.mxu0 %v4988
        %5440 = vmatprep.subr.bf16.mxu0 %v4991
        %5441 = vmatpush1.bf16.msra.mxu0 %v4990
        %5442 = vmatprep.subr.bf16.mxu0 %v4993
        %5443 = vmatpush1.bf16.msra.mxu0 %v4992
        %5444 = vmatprep.subr.bf16.mxu0 %v4995
        %5445 = vmatpush1.bf16.msra.mxu0 %v4994
        %5446 = vmatprep.subr.bf16.mxu0 %v4997
        %5447 = vmatpush1.bf16.msra.mxu0 %v4996
        %5448 = vmatprep.subr.bf16.mxu0 %v4999
        %5449 = vmatpush1.bf16.msra.mxu0 %v4998
        %5450 = vmatprep.subr.bf16.mxu0 %v5001
        %5451 = vmatpush1.bf16.msra.mxu0 %v5000
        %5452 = vmatprep.subr.bf16.mxu0 %v5003
        %5453 = vmatpush1.bf16.msra.mxu0 %v5002
        %5454 = vmatprep.subr.bf16.mxu0 %v5005
        %5455 = vmatpush1.bf16.msra.mxu0 %v5004
        %5456 = vmatprep.subr.bf16.mxu0 %v5007
        %5457 = vmatpush1.bf16.msra.mxu0 %v5006
        %5458 = vmatprep.subr.bf16.mxu0 %v5009
        %5459 = vmatpush1.bf16.msra.mxu0 %v5008
        %5460 = vmatprep.subr.bf16.mxu0 %v5011
        %5461 = vmatpush1.bf16.msra.mxu0 %v5010
        %5462 = vmatprep.subr.bf16.mxu0 %v5013
        %5463 = vmatpush1.bf16.msra.mxu0 %v5012
        %5464 = vmatprep.mubr.bf16.mxu0 %v4277
        %5465 = vmatmul.mubr.bf16.gmra.mrb[0].mxu0 %v4294
        %v5466 = vpop.f32.mrb[0].mxu0
        %v5467 = vadd.f32 %v5354, %v5466
        %v5468 = vpop.f32.mrb[0].mxu0
        %v5469 = vadd.f32 %v5356, %v5468
        %v5470 = vpop.f32.mrb[0].mxu0
        %v5471 = vadd.f32 %v5358, %v5470
        %v5472 = vpop.f32.mrb[0].mxu0
        %v5473 = vadd.f32 %v5360, %v5472
        %5474 = vmatprep.mubr.bf16.mxu0 %v4306
        %5475 = vmatmul.mubr.bf16.gmra.mrb[0].mxu0 %v4295
        %v5476 = vpop.f32.mrb[0].mxu0
        %v5477 = vadd.f32 %v5364, %v5476
        %v5478 = vpop.f32.mrb[0].mxu0
        %v5479 = vadd.f32 %v5366, %v5478
        %v5480 = vpop.f32.mrb[0].mxu0
        %v5481 = vadd.f32 %v5368, %v5480
        %v5482 = vpop.f32.mrb[0].mxu0
        %v5483 = vadd.f32 %v5370, %v5482
        %5484 = vmatprep.mubr.bf16.mxu0 %v4279
        %5485 = vmatmul.mubr.bf16.gmra.mrb[0].mxu0 %v4296
        %v5486 = vpop.f32.mrb[0].mxu0
        %v5487 = vadd.f32 %v5374, %v5486
        %v5488 = vpop.f32.mrb[0].mxu0
        %v5489 = vadd.f32 %v5376, %v5488
        %v5490 = vpop.f32.mrb[0].mxu0
        %v5491 = vadd.f32 %v5378, %v5490
        %v5492 = vpop.f32.mrb[0].mxu0
        %v5493 = vadd.f32 %v5380, %v5492
        %5494 = vmatprep.mubr.bf16.mxu0 %v4307
        %5495 = vmatmul.mubr.bf16.gmra.mrb[0].mxu0 %v4297
        %v5496 = vpop.f32.mrb[0].mxu0
        %v5497 = vadd.f32 %v5384, %v5496
        %v5498 = vpop.f32.mrb[0].mxu0
        %v5499 = vadd.f32 %v5386, %v5498
        %v5500 = vpop.f32.mrb[0].mxu0
        %v5501 = vadd.f32 %v5388, %v5500
        %v5502 = vpop.f32.mrb[0].mxu0
        %v5503 = vadd.f32 %v5390, %v5502
        %5504 = vmatprep.mubr.bf16.mxu0 %v4281
        %5505 = vmatmul.mubr.bf16.gmra.mrb[0].mxu0 %v4298
        %v5506 = vpop.f32.mrb[0].mxu0
        %v5507 = vadd.f32 %v5394, %v5506
        %v5508 = vpop.f32.mrb[0].mxu0
        %v5509 = vadd.f32 %v5396, %v5508
        %v5510 = vpop.f32.mrb[0].mxu0
        %v5511 = vadd.f32 %v5398, %v5510
        %v5512 = vpop.f32.mrb[0].mxu0
        %v5513 = vadd.f32 %v5400, %v5512
        %5514 = vmatprep.mubr.bf16.mxu0 %v4308
        %5515 = vmatmul.mubr.bf16.gmra.mrb[0].mxu0 %v4299
        %v5516 = vpop.f32.mrb[0].mxu0
        %v5517 = vadd.f32 %v5404, %v5516
        %v5518 = vpop.f32.mrb[0].mxu0
        %v5519 = vadd.f32 %v5406, %v5518
        %v5520 = vpop.f32.mrb[0].mxu0
        %v5521 = vadd.f32 %v5408, %v5520
        %v5522 = vpop.f32.mrb[0].mxu0
        %v5523 = vadd.f32 %v5410, %v5522
        %5524 = vmatprep.mubr.bf16.mxu0 %v4319
        %5525 = vmatmul.mubr.bf16.gmra.mrb[0].mxu0 %v4324
        %v5526 = vpop.f32.mrb[0].mxu0
        %v5527 = vadd.f32 %v5414, %v5526
        %v5528 = vpop.f32.mrb[0].mxu0
        %v5529 = vadd.f32 %v5416, %v5528
        %v5530 = vpop.f32.mrb[0].mxu0
        %v5531 = vadd.f32 %v5418, %v5530
        %v5532 = vpop.f32.mrb[0].mxu0
        %v5533 = vadd.f32 %v5420, %v5532
        %5534 = vmatprep.mubr.bf16.mxu0 %v4328
        %5535 = vmatmul.mubr.bf16.gmra.mrb[0].mxu0 %v4325
        %v5536 = vpop.f32.mrb[0].mxu0
        %v5537 = vadd.f32 %v5424, %v5536
        %v5538 = vpop.f32.mrb[0].mxu0
        %v5539 = vadd.f32 %v5426, %v5538
        %v5540 = vpop.f32.mrb[0].mxu0
        %v5541 = vadd.f32 %v5428, %v5540
        %v5542 = vpop.f32.mrb[0].mxu0
        %v5543 = vadd.f32 %v5430, %v5542
        %5544 = vdwg.mxu0
        %5545 = vmatprep.subr.bf16.mxu0 %v5015
        %5546 = vmatpush1.bf16.msra.mxu0 %v5014
        %5547 = vmatprep.subr.bf16.mxu0 %v5017
        %5548 = vmatpush1.bf16.msra.mxu0 %v5016
        %5549 = vmatprep.subr.bf16.mxu0 %v5019
        %5550 = vmatpush1.bf16.msra.mxu0 %v5018
        %5551 = vmatprep.subr.bf16.mxu0 %v5021
        %5552 = vmatpush1.bf16.msra.mxu0 %v5020
        %5553 = vmatprep.subr.bf16.mxu0 %v5023
        %5554 = vmatpush1.bf16.msra.mxu0 %v5022
        %5555 = vmatprep.subr.bf16.mxu0 %v5025
        %5556 = vmatpush1.bf16.msra.mxu0 %v5024
        %5557 = vmatprep.subr.bf16.mxu0 %v5027
        %5558 = vmatpush1.bf16.msra.mxu0 %v5026
        %5559 = vmatprep.subr.bf16.mxu0 %v5029
        %5560 = vmatpush1.bf16.msra.mxu0 %v5028
        %5561 = vmatprep.subr.bf16.mxu0 %v5031
        %5562 = vmatpush1.bf16.msra.mxu0 %v5030
        %5563 = vmatprep.subr.bf16.mxu0 %v5033
        %5564 = vmatpush1.bf16.msra.mxu0 %v5032
        %5565 = vmatprep.subr.bf16.mxu0 %v5035
        %5566 = vmatpush1.bf16.msra.mxu0 %v5034
        %5567 = vmatprep.subr.bf16.mxu0 %v5037
        %5568 = vmatpush1.bf16.msra.mxu0 %v5036
        %5569 = vmatprep.subr.bf16.mxu0 %v5039
        %5570 = vmatpush1.bf16.msra.mxu0 %v5038
        %5571 = vmatprep.subr.bf16.mxu0 %v5041
        %5572 = vmatpush1.bf16.msra.mxu0 %v5040
        %5573 = vmatprep.subr.bf16.mxu0 %v5043
        %5574 = vmatpush1.bf16.msra.mxu0 %v5042
        %5575 = vmatprep.subr.bf16.mxu0 %v5045
        %5576 = vmatpush1.bf16.msra.mxu0 %v5044
        %5577 = vmatprep.mubr.bf16.mxu0 %v4296
        %5578 = vmatmul.mubr.bf16.gmra.mrb[0].mxu0 %v4278
        %v5579 = vpop.f32.mrb[0].mxu0
        %v5580 = vadd.f32 %v5467, %v5579
        %v5581 = vpop.f32.mrb[0].mxu0
        %v5582 = vadd.f32 %v5469, %v5581
        %v5583 = vpop.f32.mrb[0].mxu0
        %v5584 = vadd.f32 %v5471, %v5583
        %v5585 = vpop.f32.mrb[0].mxu0
        %v5586 = vadd.f32 %v5473, %v5585
        %5587 = vmatprep.mubr.bf16.mxu0 %v4297
        %5588 = vmatmul.mubr.bf16.gmra.mrb[0].mxu0 %v4279
        %v5589 = vpop.f32.mrb[0].mxu0
        %v5590 = vadd.f32 %v5477, %v5589
        %v5591 = vpop.f32.mrb[0].mxu0
        %v5592 = vadd.f32 %v5479, %v5591
        %v5593 = vpop.f32.mrb[0].mxu0
        %v5594 = vadd.f32 %v5481, %v5593
        %v5595 = vpop.f32.mrb[0].mxu0
        %v5596 = vadd.f32 %v5483, %v5595
        %5597 = vmatprep.mubr.bf16.mxu0 %v4298
        %5598 = vmatmul.mubr.bf16.gmra.mrb[0].mxu0 %v4280
        %v5599 = vpop.f32.mrb[0].mxu0
        %v5600 = vadd.f32 %v5487, %v5599
        %v5601 = vpop.f32.mrb[0].mxu0
        %v5602 = vadd.f32 %v5489, %v5601
        %v5603 = vpop.f32.mrb[0].mxu0
        %v5604 = vadd.f32 %v5491, %v5603
        %v5605 = vpop.f32.mrb[0].mxu0
        %v5606 = vadd.f32 %v5493, %v5605
        %5607 = vmatprep.mubr.bf16.mxu0 %v4299
        %5608 = vmatmul.mubr.bf16.gmra.mrb[0].mxu0 %v4281
        %v5609 = vpop.f32.mrb[0].mxu0
        %v5610 = vadd.f32 %v5497, %v5609
        %v5611 = vpop.f32.mrb[0].mxu0
        %v5612 = vadd.f32 %v5499, %v5611
        %v5613 = vpop.f32.mrb[0].mxu0
        %v5614 = vadd.f32 %v5501, %v5613
        %v5615 = vpop.f32.mrb[0].mxu0
        %v5616 = vadd.f32 %v5503, %v5615
        %5617 = vmatprep.mubr.bf16.mxu0 %v4324
        %5618 = vmatmul.mubr.bf16.gmra.mrb[0].mxu0 %v4318
        %v5619 = vpop.f32.mrb[0].mxu0
        %v5620 = vadd.f32 %v5507, %v5619
        %v5621 = vpop.f32.mrb[0].mxu0
        %v5622 = vadd.f32 %v5509, %v5621
        %v5623 = vpop.f32.mrb[0].mxu0
        %v5624 = vadd.f32 %v5511, %v5623
        %v5625 = vpop.f32.mrb[0].mxu0
        %v5626 = vadd.f32 %v5513, %v5625
        %5627 = vmatprep.mubr.bf16.mxu0 %v4325
        %5628 = vmatmul.mubr.bf16.gmra.mrb[0].mxu0 %v4319
        %v5629 = vpop.f32.mrb[0].mxu0
        %v5630 = vadd.f32 %v5517, %v5629
        %v5631 = vpop.f32.mrb[0].mxu0
        %v5632 = vadd.f32 %v5519, %v5631
        %v5633 = vpop.f32.mrb[0].mxu0
        %v5634 = vadd.f32 %v5521, %v5633
        %v5635 = vpop.f32.mrb[0].mxu0
        %v5636 = vadd.f32 %v5523, %v5635
        %5637 = vmatprep.mubr.bf16.mxu0 %v1778
        %5638 = vmatmul.mubr.bf16.gmra.mrb[0].mxu0 %v1778
        %v5639 = vpop.f32.mrb[0].mxu0
        %v5640 = vadd.f32 %v5527, %v5639
        %v5641 = vpop.f32.mrb[0].mxu0
        %v5642 = vadd.f32 %v5529, %v5641
        %v5643 = vpop.f32.mrb[0].mxu0
        %v5644 = vadd.f32 %v5531, %v5643
        %v5645 = vpop.f32.mrb[0].mxu0
        %v5646 = vadd.f32 %v5533, %v5645
        %5647 = vmatprep.mubr.bf16.mxu0 %v1778
        %5648 = vmatmul.mubr.bf16.gmra.mrb[0].mxu0 %v1778
        %v5649 = vpop.f32.mrb[0].mxu0
        %v5650 = vadd.f32 %v5537, %v5649
        %v5651 = vpop.f32.mrb[0].mxu0
        %v5652 = vadd.f32 %v5539, %v5651
        %v5653 = vpop.f32.mrb[0].mxu0
        %v5654 = vadd.f32 %v5541, %v5653
        %v5655 = vpop.f32.mrb[0].mxu0
        %v5656 = vadd.f32 %v5543, %v5655
        %5657 = vdwg.mxu0
        %5658 = vmatprep.subr.bf16.mxu0 %v5047
        %5659 = vmatpush1.bf16.msra.mxu0 %v5046
        %5660 = vmatprep.subr.bf16.mxu0 %v5049
        %5661 = vmatpush1.bf16.msra.mxu0 %v5048
        %5662 = vmatprep.subr.bf16.mxu0 %v5051
        %5663 = vmatpush1.bf16.msra.mxu0 %v5050
        %5664 = vmatprep.subr.bf16.mxu0 %v5053
        %5665 = vmatpush1.bf16.msra.mxu0 %v5052
        %5666 = vmatprep.subr.bf16.mxu0 %v5055
        %5667 = vmatpush1.bf16.msra.mxu0 %v5054
        %5668 = vmatprep.subr.bf16.mxu0 %v5057
        %5669 = vmatpush1.bf16.msra.mxu0 %v5056
        %5670 = vmatprep.subr.bf16.mxu0 %v5059
        %5671 = vmatpush1.bf16.msra.mxu0 %v5058
        %5672 = vmatprep.subr.bf16.mxu0 %v5061
        %5673 = vmatpush1.bf16.msra.mxu0 %v5060
        %5674 = vmatprep.subr.bf16.mxu0 0
        %5675 = vmatpush1.bf16.msra.mxu0 0
        %5676 = vmatprep.subr.bf16.mxu0 0
        %5677 = vmatpush1.bf16.msra.mxu0 0
        %5678 = vmatprep.subr.bf16.mxu0 0
        %5679 = vmatpush1.bf16.msra.mxu0 0
        %5680 = vmatprep.subr.bf16.mxu0 0
        %5681 = vmatpush1.bf16.msra.mxu0 0
        %5682 = vmatprep.subr.bf16.mxu0 0
        %5683 = vmatpush1.bf16.msra.mxu0 0
        %5684 = vmatprep.subr.bf16.mxu0 0
        %5685 = vmatpush1.bf16.msra.mxu0 0
        %5686 = vmatprep.subr.bf16.mxu0 0
        %5687 = vmatpush1.bf16.msra.mxu0 0
        %5688 = vmatprep.subr.bf16.mxu0 0
        %5689 = vmatpush1.bf16.msra.mxu0 0
        %5690 = vmatprep.mubr.bf16.mxu0 0
        %5691 = vmatmul.mubr.bf16.gmra.mrb[0].mxu0 %v4279
        %v5692 = vpop.f32.mrb[0].mxu0
        %v5693 = vadd.f32 %v5580, %v5692
        %v5694 = vpop.f32.mrb[0].mxu0
        %v5695 = vadd.f32 %v5582, %v5694
        %v5696 = vpop.f32.mrb[0].mxu0
        %v5697 = vadd.f32 %v5584, %v5696
        %v5698 = vpop.f32.mrb[0].mxu0
        %v5699 = vadd.f32 %v5586, %v5698
        %5700 = vmatprep.mubr.bf16.mxu0 0
        %5701 = vmatmul.mubr.bf16.gmra.mrb[0].mxu0 %v4307
        %v5702 = vpop.f32.mrb[0].mxu0
        %v5703 = vadd.f32 %v5590, %v5702
        %v5704 = vpop.f32.mrb[0].mxu0
        %v5705 = vadd.f32 %v5592, %v5704
        %v5706 = vpop.f32.mrb[0].mxu0
        %v5707 = vadd.f32 %v5594, %v5706
        %v5708 = vpop.f32.mrb[0].mxu0
        %v5709 = vadd.f32 %v5596, %v5708
        %5710 = vmatprep.mubr.bf16.mxu0 0
        %5711 = vmatmul.mubr.bf16.gmra.mrb[0].mxu0 %v4281
        %v5712 = vpop.f32.mrb[0].mxu0
        %v5713 = vadd.f32 %v5600, %v5712
        %v5714 = vpop.f32.mrb[0].mxu0
        %v5715 = vadd.f32 %v5602, %v5714
        %v5716 = vpop.f32.mrb[0].mxu0
        %v5717 = vadd.f32 %v5604, %v5716
        %v5718 = vpop.f32.mrb[0].mxu0
        %v5719 = vadd.f32 %v5606, %v5718
        %5720 = vmatprep.mubr.bf16.mxu0 0
        %5721 = vmatmul.mubr.bf16.gmra.mrb[0].mxu0 %v4308
        %v5722 = vpop.f32.mrb[0].mxu0
        %v5723 = vadd.f32 %v5610, %v5722
        %v5724 = vpop.f32.mrb[0].mxu0
        %v5725 = vadd.f32 %v5612, %v5724
        %v5726 = vpop.f32.mrb[0].mxu0
        %v5727 = vadd.f32 %v5614, %v5726
        %v5728 = vpop.f32.mrb[0].mxu0
        %v5729 = vadd.f32 %v5616, %v5728
        %5730 = vmatprep.mubr.bf16.mxu0 0
        %5731 = vmatmul.mubr.bf16.gmra.mrb[0].mxu0 %v4319
        %v5732 = vpop.f32.mrb[0].mxu0
        %v5733 = vadd.f32 %v5620, %v5732
        %v5734 = vpop.f32.mrb[0].mxu0
        %v5735 = vadd.f32 %v5622, %v5734
        %v5736 = vpop.f32.mrb[0].mxu0
        %v5737 = vadd.f32 %v5624, %v5736
        %v5738 = vpop.f32.mrb[0].mxu0
        %v5739 = vadd.f32 %v5626, %v5738
        %5740 = vmatprep.mubr.bf16.mxu0 0
        %5741 = vmatmul.mubr.bf16.gmra.mrb[0].mxu0 %v4328
        %v5742 = vpop.f32.mrb[0].mxu0
        %v5743 = vadd.f32 %v5630, %v5742
        %v5744 = vpop.f32.mrb[0].mxu0
        %v5745 = vadd.f32 %v5632, %v5744
        %v5746 = vpop.f32.mrb[0].mxu0
        %v5747 = vadd.f32 %v5634, %v5746
        %v5748 = vpop.f32.mrb[0].mxu0
        %v5749 = vadd.f32 %v5636, %v5748
        %5750 = vmatprep.mubr.bf16.mxu0 0
        %5751 = vmatmul.mubr.bf16.gmra.mrb[0].mxu0 %v1778
        %v5752 = vpop.f32.mrb[0].mxu0
        %v5753 = vadd.f32 %v5640, %v5752
        %v5754 = vpop.f32.mrb[0].mxu0
        %v5755 = vadd.f32 %v5642, %v5754
        %v5756 = vpop.f32.mrb[0].mxu0
        %v5757 = vadd.f32 %v5644, %v5756
        %v5758 = vpop.f32.mrb[0].mxu0
        %v5759 = vadd.f32 %v5646, %v5758
        %5760 = vmatprep.mubr.bf16.mxu0 0
        %5761 = vmatmul.mubr.bf16.gmra.mrb[0].mxu0 %v1778
        %v5762 = vpop.f32.mrb[0].mxu0
        %v5763 = vadd.f32 %v5650, %v5762
        %v5764 = vpop.f32.mrb[0].mxu0
        %v5765 = vadd.f32 %v5652, %v5764
        %v5766 = vpop.f32.mrb[0].mxu0
        %v5767 = vadd.f32 %v5654, %v5766
        %v5768 = vpop.f32.mrb[0].mxu0
        %v5769 = vadd.f32 %v5656, %v5768
        %5770 = vdwg.mxu0
        %v5771 = vadd.f32 %v940, %v5693
        %v5772 = vadd.f32 %v942, %v5695
        %v5773 = vadd.f32 %v944, %v5697
        %v5774 = vadd.f32 %v946, %v5699
        %v5775 = vadd.f32 %v950, %v5703
        %v5776 = vadd.f32 %v952, %v5705
        %v5777 = vadd.f32 %v954, %v5707
        %v5778 = vadd.f32 %v956, %v5709
        %v5779 = vadd.f32 %v960, %v5713
        %v5780 = vadd.f32 %v962, %v5715
        %v5781 = vadd.f32 %v964, %v5717
        %v5782 = vadd.f32 %v966, %v5719
        %v5783 = vadd.f32 %v970, %v5723
        %v5784 = vadd.f32 %v972, %v5725
        %v5785 = vadd.f32 %v974, %v5727
        %v5786 = vadd.f32 %v976, %v5729
        %v5787 = vadd.f32 %v980, %v5733
        %v5788 = vadd.f32 %v982, %v5735
        %v5789 = vadd.f32 %v984, %v5737
        %v5790 = vadd.f32 %v986, %v5739
        %v5791 = vadd.f32 %v990, %v5743
        %v5792 = vadd.f32 %v992, %v5745
        %v5793 = vadd.f32 %v994, %v5747
        %v5794 = vadd.f32 %v996, %v5749
        %v5795 = vadd.f32 %v1000, %v5753
        %v5796 = vadd.f32 %v1002, %v5755
        %v5797 = vadd.f32 %v1004, %v5757
        %v5798 = vadd.f32 %v1006, %v5759
        %v5799 = vadd.f32 %v1010, %v5763
        %v5800 = vadd.f32 %v1012, %v5765
        %v5801 = vadd.f32 %v1014, %v5767
        %v5802 = vadd.f32 %v1016, %v5769
        %v5803 = vmul.f32 %v5771, 0.70710677
        %v5804 = vmul.f32 %v5772, 0.70710677
        %v5805 = vmul.f32 %v5773, 0.70710677
        %v5806 = vmul.f32 %v5774, 0.70710677
        %v5807 = vmul.f32 %v5775, 0.70710677
        %v5808 = vmul.f32 %v5776, 0.70710677
        %v5809 = vmul.f32 %v5777, 0.70710677
        %v5810 = vmul.f32 %v5778, 0.70710677
        %v5811 = vmul.f32 %v5779, 0.70710677
        %v5812 = vmul.f32 %v5780, 0.70710677
        %v5813 = vmul.f32 %v5781, 0.70710677
        %v5814 = vmul.f32 %v5782, 0.70710677
        %v5815 = vmul.f32 %v5783, 0.70710677
        %v5816 = vmul.f32 %v5784, 0.70710677
        %v5817 = vmul.f32 %v5785, 0.70710677
        %v5818 = vmul.f32 %v5786, 0.70710677
        %v5819 = vmul.f32 %v5787, 0.70710677
        %v5820 = vmul.f32 %v5788, 0.70710677
        %v5821 = vmul.f32 %v5789, 0.70710677
        %v5822 = vmul.f32 %v5790, 0.70710677
        %v5823 = vmul.f32 %v5791, 0.70710677
        %v5824 = vmul.f32 %v5792, 0.70710677
        %v5825 = vmul.f32 %v5793, 0.70710677
        %v5826 = vmul.f32 %v5794, 0.70710677
        %v5827 = vmul.f32 %v5795, 0.70710677
        %v5828 = vmul.f32 %v5796, 0.70710677
        %v5829 = vmul.f32 %v5797, 0.70710677
        %v5830 = vmul.f32 %v5798, 0.70710677
        %v5831 = vmul.f32 %v5799, 0.70710677
        %v5832 = vmul.f32 %v5800, 0.70710677
        %v5833 = vmul.f32 %v5801, 0.70710677
        %v5834 = vmul.f32 %v5802, 0.70710677
        %5835 = vst [vmem:[%s639] sm:$0xff] %v5803
        %5836 = vst [vmem:[%s639 + $0x8] sm:$0xff] %v5804
        %5837 = vst [vmem:[%s639 + $0x10] sm:$0xff] %v5805
        %5838 = vst [vmem:[%s639 + $0x18] sm:$0xff] %v5806
        %5839 = vst [vmem:[%s639 + $0x20] sm:$0xff] %v5807
        %5840 = vst [vmem:[%s639 + $0x28] sm:$0xff] %v5808
        %5841 = vst [vmem:[%s639 + $0x30] sm:$0xff] %v5809
        %5842 = vst [vmem:[%s639 + $0x38] sm:$0xff] %v5810
        %5843 = vst [vmem:[%s639 + $0x40] sm:$0xff] %v5811
        %5844 = vst [vmem:[%s639 + $0x48] sm:$0xff] %v5812
        %5845 = vst [vmem:[%s639 + $0x50] sm:$0xff] %v5813
        %5846 = vst [vmem:[%s639 + $0x58] sm:$0xff] %v5814
        %5847 = vst [vmem:[%s639 + $0x60] sm:$0xff] %v5815
        %5848 = vst [vmem:[%s639 + $0x68] sm:$0xff] %v5816
        %5849 = vst [vmem:[%s639 + $0x70] sm:$0xff] %v5817
        %5850 = vst [vmem:[%s639 + $0x78] sm:$0xff] %v5818
        %5851 = vst [vmem:[%s639 + $0x80] sm:$0xff] %v5819
        %5852 = vst [vmem:[%s639 + $0x88] sm:$0xff] %v5820
        %5853 = vst [vmem:[%s639 + $0x90] sm:$0xff] %v5821
        %5854 = vst [vmem:[%s639 + $0x98] sm:$0xff] %v5822
        %5855 = vst [vmem:[%s639 + $0xa0] sm:$0xff] %v5823
        %5856 = vst [vmem:[%s639 + $0xa8] sm:$0xff] %v5824
        %5857 = vst [vmem:[%s639 + $0xb0] sm:$0xff] %v5825
        %5858 = vst [vmem:[%s639 + $0xb8] sm:$0xff] %v5826
        %5859 = vst [vmem:[%s639 + $0xc0] sm:$0xff] %v5827
        %5860 = vst [vmem:[%s639 + $0xc8] sm:$0xff] %v5828
        %5861 = vst [vmem:[%s639 + $0xd0] sm:$0xff] %v5829
        %5862 = vst [vmem:[%s639 + $0xd8] sm:$0xff] %v5830
        %5863 = vst [vmem:[%s639 + $0xe0] sm:$0xff] %v5831
        %5864 = vst [vmem:[%s639 + $0xe8] sm:$0xff] %v5832
        %5865 = vst [vmem:[%s639 + $0xf0] sm:$0xff] %v5833
        %5866 = vst [vmem:[%s639 + $0xf8] sm:$0xff] %v5834
        %s5867 = sand.u32 %s244, 1
        %s5868 = sand.u32 %s244, 1
        %s5869 = smul.addr %s5868, 256
        %s5870 = scalar_lea.vmem [#allocation3], %s5869
        // Predicated region
        $region99: #{resblk_forward.1} parent=93 // pred_check
          %p5871 = pneg %p254
        $region100: #{resblk_forward.1} parent=93 // pred_check_branch
          %5873 = sbr.rel (%p5871) target = $region102
        $region101: #{resblk_forward.1} parent=93 // pred_region
          %s5874 = smul.addr %s21, 2
          %s5875 = smul.addr %s5874, 8
          %s5876 = scalar_lea.vmem %s10, %s5875
          // Predicated region
          $region103: #{resblk_forward.1} parent=101 // pred_check
            _
          $region104: #{resblk_forward.1} parent=101 // pred_check_branch
            %5878 = sbr.rel (0) target = $region106
          $region105: #{resblk_forward.1} parent=101 // pred_region
            // Predicated region
            $region107: #{resblk_forward.1} parent=105 // pred_check
              _
            $region108: #{resblk_forward.1} parent=105 // pred_check_branch
              %5880 = sbr.rel (0) target = $region110
            $region109: #{resblk_forward.1} parent=105 // pred_region
              loop: start=0, step=1, limit=1
              $region111: #{resblk_forward.1} parent=109 // loop_pre_header
                _
              $region112: #{resblk_forward.1} parent=109 // loop_header
                %s5882 = sphi 0, %s5886
                %p5883 = scmp.ge.s32.totalorder %s5882, 1
                %s5887 = sphi %s5870, %s5870
                %s5888 = sphi %s5876, %s5876
              $region113: #{resblk_forward.1} parent=109 // loop_header_branch
                %5885 = sbr.rel (%p5883) target = $region117
              $region114: #{resblk_forward.1} parent=109 // loop_body
                %v5889 = vld [vmem:[%s5887] sm:$0xff]
                %5890 = vst [vmem:[%s5888] sm:$0xff] %v5889
                %v5891 = vld [vmem:[%s5887 + $0x8] sm:$0xff]
                %5892 = vst [vmem:[%s5888 + $0x8] sm:$0xff] %v5891
                %v5893 = vld [vmem:[%s5887 + $0x10] sm:$0xff]
                %5894 = vst [vmem:[%s5888 + $0x20] sm:$0xff] %v5893
                %v5895 = vld [vmem:[%s5887 + $0x18] sm:$0xff]
                %5896 = vst [vmem:[%s5888 + $0x28] sm:$0xff] %v5895
                %v5897 = vld [vmem:[%s5887 + $0x20] sm:$0xff]
                %5898 = vst [vmem:[%s5888 + $0x40] sm:$0xff] %v5897
                %v5899 = vld [vmem:[%s5887 + $0x28] sm:$0xff]
                %5900 = vst [vmem:[%s5888 + $0x48] sm:$0xff] %v5899
                %v5901 = vld [vmem:[%s5887 + $0x30] sm:$0xff]
                %5902 = vst [vmem:[%s5888 + $0x60] sm:$0xff] %v5901
                %v5903 = vld [vmem:[%s5887 + $0x38] sm:$0xff]
                %5904 = vst [vmem:[%s5888 + $0x68] sm:$0xff] %v5903
                %v5905 = vld [vmem:[%s5887 + $0x40] sm:$0xff]
                %5906 = vst [vmem:[%s5888 + $0x80] sm:$0xff] %v5905
                %v5907 = vld [vmem:[%s5887 + $0x48] sm:$0xff]
                %5908 = vst [vmem:[%s5888 + $0x88] sm:$0xff] %v5907
                %v5909 = vld [vmem:[%s5887 + $0x50] sm:$0xff]
                %5910 = vst [vmem:[%s5888 + $0xa0] sm:$0xff] %v5909
                %v5911 = vld [vmem:[%s5887 + $0x58] sm:$0xff]
                %5912 = vst [vmem:[%s5888 + $0xa8] sm:$0xff] %v5911
                %v5913 = vld [vmem:[%s5887 + $0x60] sm:$0xff]
                %5914 = vst [vmem:[%s5888 + $0xc0] sm:$0xff] %v5913
                %v5915 = vld [vmem:[%s5887 + $0x68] sm:$0xff]
                %5916 = vst [vmem:[%s5888 + $0xc8] sm:$0xff] %v5915
                %v5917 = vld [vmem:[%s5887 + $0x70] sm:$0xff]
                %5918 = vst [vmem:[%s5888 + $0xe0] sm:$0xff] %v5917
                %v5919 = vld [vmem:[%s5887 + $0x78] sm:$0xff]
                %5920 = vst [vmem:[%s5888 + $0xe8] sm:$0xff] %v5919
                %v5921 = vld [vmem:[%s5887 + $0x80] sm:$0xff]
                %5922 = vst [vmem:[%s5888 + $0x100] sm:$0xff] %v5921
                %v5923 = vld [vmem:[%s5887 + $0x88] sm:$0xff]
                %5924 = vst [vmem:[%s5888 + $0x108] sm:$0xff] %v5923
                %v5925 = vld [vmem:[%s5887 + $0x90] sm:$0xff]
                %5926 = vst [vmem:[%s5888 + $0x120] sm:$0xff] %v5925
                %v5927 = vld [vmem:[%s5887 + $0x98] sm:$0xff]
                %5928 = vst [vmem:[%s5888 + $0x128] sm:$0xff] %v5927
                %v5929 = vld [vmem:[%s5887 + $0xa0] sm:$0xff]
                %5930 = vst [vmem:[%s5888 + $0x140] sm:$0xff] %v5929
                %v5931 = vld [vmem:[%s5887 + $0xa8] sm:$0xff]
                %5932 = vst [vmem:[%s5888 + $0x148] sm:$0xff] %v5931
                %v5933 = vld [vmem:[%s5887 + $0xb0] sm:$0xff]
                %5934 = vst [vmem:[%s5888 + $0x160] sm:$0xff] %v5933
                %v5935 = vld [vmem:[%s5887 + $0xb8] sm:$0xff]
                %5936 = vst [vmem:[%s5888 + $0x168] sm:$0xff] %v5935
                %v5937 = vld [vmem:[%s5887 + $0xc0] sm:$0xff]
                %5938 = vst [vmem:[%s5888 + $0x180] sm:$0xff] %v5937
                %v5939 = vld [vmem:[%s5887 + $0xc8] sm:$0xff]
                %5940 = vst [vmem:[%s5888 + $0x188] sm:$0xff] %v5939
                %v5941 = vld [vmem:[%s5887 + $0xd0] sm:$0xff]
                %5942 = vst [vmem:[%s5888 + $0x1a0] sm:$0xff] %v5941
                %v5943 = vld [vmem:[%s5887 + $0xd8] sm:$0xff]
                %5944 = vst [vmem:[%s5888 + $0x1a8] sm:$0xff] %v5943
                %v5945 = vld [vmem:[%s5887 + $0xe0] sm:$0xff]
                %5946 = vst [vmem:[%s5888 + $0x1c0] sm:$0xff] %v5945
                %v5947 = vld [vmem:[%s5887 + $0xe8] sm:$0xff]
                %5948 = vst [vmem:[%s5888 + $0x1c8] sm:$0xff] %v5947
                %v5949 = vld [vmem:[%s5887 + $0xf0] sm:$0xff]
                %5950 = vst [vmem:[%s5888 + $0x1e0] sm:$0xff] %v5949
                %v5951 = vld [vmem:[%s5887 + $0xf8] sm:$0xff]
                %5952 = vst [vmem:[%s5888 + $0x1e8] sm:$0xff] %v5951
              $region115: #{resblk_forward.1} parent=109 // loop_footer
                %s5886 = sadd.s32 1, %s5882
              $region116: #{resblk_forward.1} parent=109 // loop_footer_branch
                %5881 = sbr.rel target = $region112
              $region117: #{resblk_forward.1} parent=109 // loop_exit
                _
            $region110: #{resblk_forward.1} parent=105 // pred_fallthru
              _
            // Predicated region
            $region118: #{resblk_forward.1} parent=105 // pred_check
              _
            $region119: #{resblk_forward.1} parent=105 // pred_check_branch
              %5954 = sbr.rel target = $region121
            $region120: #{resblk_forward.1} parent=105 // pred_region
              _
            $region121: #{resblk_forward.1} parent=105 // pred_fallthru
              _
          $region106: #{resblk_forward.1} parent=101 // pred_fallthru
            _
          %5955 = vnop
        $region102: #{resblk_forward.1} parent=93 // pred_fallthru
          _
      $region94: #{resblk_forward.1} parent=5 // pred_fallthru
        _
      %p5956 = scmp.le.s32.totalorder 2, %s16
      // Predicated region
      $region122: #{resblk_forward.1} parent=5 // pred_check
        %p5957 = pneg %p5956
      $region123: #{resblk_forward.1} parent=5 // pred_check_branch
        %5959 = sbr.rel (%p5957) target = $region125
      $region124: #{resblk_forward.1} parent=5 // pred_region
        %s5960 = ssub.s32 %s16, 2
        // Predicated region
        $region126: #{resblk_forward.1} parent=124 // pred_check
          %p5961 = pneg %p260
        $region127: #{resblk_forward.1} parent=124 // pred_check_branch
          %5963 = sbr.rel (%p5961) target = $region129
        $region128: #{resblk_forward.1} parent=124 // pred_region
          %s5964 = sand.u32 %s245, 1
          %s5965 = sand.u32 %s245, 1
          %s5966 = smul.addr %s5965, 256
          %s5967 = scalar_lea.vmem [#allocation3], %s5966
        $region129: #{resblk_forward.1} parent=124 // pred_fallthru
          _
      $region125: #{resblk_forward.1} parent=5 // pred_fallthru
        _
    $region6: #{resblk_forward.1} parent=1 // loop_footer
      %s20 = sadd.s32 1, %s16
    $region7: #{resblk_forward.1} parent=1 // loop_footer_branch
      %15 = sbr.rel target = $region3
    $region8: #{resblk_forward.1} parent=1 // loop_exit
      _

</llo_original>
